<compile_context>
chip_gen: v7x
topology: tpu7x:2x2x1
jax: 0.10.0
libtpu: 0.0.40
codegen_flags: <defaults>
</compile_context>

<pallas_src>
import functools

import jax
import jax.numpy as jnp
from jax.experimental import pallas as pl
from jax.experimental.pallas import tpu as pltpu


def v_mlp_kernel(x_ref, w1_ref, b1_ref, w2_ref, b2_ref, w3_ref, b3_ref, o_ref):
    # Layer 1 (MXU): (bt, n_obs) @ (n_obs, 2h) + (1, 2h); f32 accumulate.
    # x arrives as f32 and is cast to the weight dtype here (free VPU cast in
    # VMEM; avoids a wrapper-side cast that would add an extra HBM pass).
    w1 = w1_ref[...]
    h1 = jnp.dot(x_ref[...].astype(w1.dtype), w1,
                 preferred_element_type=jnp.float32) + b1_ref[...]
    h1 = h1 * jax.nn.sigmoid(h1)                       # SiLU in f32 (EUP + VPU)

    # Layer 2 (MXU): (bt, 2h) @ (2h, h) + (1, h); f32 accumulate.
    w2 = w2_ref[...]
    h2 = jnp.dot(h1.astype(w2.dtype), w2,
                 preferred_element_type=jnp.float32) + b2_ref[...]
    h2 = h2 * jax.nn.sigmoid(h2)

    # Layer 3: N=1 output -> VPU multiply + lane reduction instead of an MXU
    # matvec using a single output column.  w3_ref is a lane-dense (1, h) row.
    # b3 is a (1,) SMEM scalar folded in here (no wrapper-side add).
    v = jnp.sum(h2 * w3_ref[...], axis=-1) + b3_ref[0]   # (bt,)
    # Lane-dense store: one (1, batch_tile) row per grid step.
    o_ref[...] = v[None, :].astype(o_ref.dtype)


def _choose_batch_tile(B, n_obs, x_itemsize):
    """Size-aware batch tile.

    Keep the whole batch as one tile (grid=1) unless each tile would still
    move enough x bytes (>= ~256 KiB) to make the ~0.35 us per-step grid
    overhead and pipeline prologue worthwhile.  Tiles are multiples of 128
    (lane-dense output rows, 8-aligned sublanes for x)."""
    if B % 8 != 0:
        return B                                   # block == full array stays legal
    min_tile_bytes = 256 * 1024
    for t in (2048, 1024, 512, 256, 128):
        if B % t == 0 and B // t >= 2 and t * n_obs * x_itemsize >= min_tile_bytes:
            return t
    return B


def _vmem_limit_bytes(bt, n_obs, h2dim, hdim, x_itemsize, w_itemsize):
    """Derive the scoped-VMEM limit from the actual footprint.

    Pallas double-buffers every input block by default (even constant-index
    weights), plus the output rows and the f32 intermediates, with headroom.
    Clamped to 64 MiB = v7x physical VMEM per TC (v5e/v6e have 128 MiB)."""
    xbuf = 2 * bt * n_obs * x_itemsize
    wbuf = 2 * (n_obs * h2dim + h2dim * hdim) * w_itemsize
    bbuf = 2 * (h2dim + 2 * hdim) * 4
    obuf = 2 * bt * 4
    interm = 2 * bt * (h2dim + hdim) * 4
    total = int((xbuf + wbuf + bbuf + obuf + interm) * 1.5) + (1 << 20)
    return max(4 << 20, min(total, 64 << 20))


@functools.partial(jax.jit, static_argnames=("batch_tile", "use_bf16"))
def v_forward(x, w1, b1, w2, b2, w3, b3, *, batch_tile=None, use_bf16=False):
    B0, n_obs = x.shape
    h2dim = w1.shape[1]
    hdim = w2.shape[1]

    # Pad the batch to a multiple of 8 (sublane-aligned x tile, unmasked
    # stores); sliced back below.  No-op for the common aligned case.
    B = B0
    if B % 8 != 0:
        pad = (-B) % 8
        x = jnp.pad(x, ((0, pad), (0, 0)))
        B = B + pad

    # W3 as a lane-dense row (1, hdim); b3 as a (1,) SMEM scalar.
    w3_row = w3.reshape(1, hdim).astype(jnp.float32)
    b3_s = b3.reshape(1).astype(jnp.float32)

    if use_bf16:
        # bf16 MXU operands with f32 accumulation.  Valid on v5e/v6e/v7x: the
        # MXU is bf16-native on all three; biases / w3 / SiLU / layer-3 VPU
        # math stay f32.  Only the (cacheable) weights are cast here — x stays
        # f32 and is cast in-kernel, so no extra HBM pass for the activations.
        w1_in = w1.astype(jnp.bfloat16)
        w2_in = w2.astype(jnp.bfloat16)
    else:
        w1_in, w2_in = w1, w2

    bt = _choose_batch_tile(B, n_obs, x.dtype.itemsize) if batch_tile is None \
        else batch_tile
    assert B % bt == 0, "batch_tile must divide (padded) B"
    assert bt == B or bt % 128 == 0, \
        "batch_tile must equal B or be a multiple of 128"
    grid = (B // bt,)

    flops = 2 * B * (n_obs * h2dim + h2dim * hdim + hdim)
    transcendentals = B * (h2dim + hdim)                 # one exp per SiLU unit
    bytes_accessed = (x.size * x.dtype.itemsize
                      + w1_in.size * w1_in.dtype.itemsize
                      + w2_in.size * w2_in.dtype.itemsize
                      + b1.size * 4 + b2.size * 4 + w3_row.size * 4 + 4
                      + B * 4)

    out_rows = pl.pallas_call(
        v_mlp_kernel,
        out_shape=jax.ShapeDtypeStruct((1, B), jnp.float32),
        grid_spec=pltpu.PrefetchScalarGridSpec(
            num_scalar_prefetch=0,
            grid=grid,
            in_specs=[
                pl.BlockSpec((bt, n_obs), lambda i: (i, 0)),     # x tile (pipelined)
                pl.BlockSpec((n_obs, h2dim), lambda i: (0, 0)),  # W1 (resident)
                pl.BlockSpec((1, h2dim), lambda i: (0, 0)),      # b1
                pl.BlockSpec((h2dim, hdim), lambda i: (0, 0)),   # W2 (resident)
                pl.BlockSpec((1, hdim), lambda i: (0, 0)),       # b2
                pl.BlockSpec((1, hdim), lambda i: (0, 0)),       # W3 as a row
                pl.BlockSpec(memory_space=pltpu.MemorySpace.SMEM),  # b3 scalar
            ],
            # Lane-dense output: each grid step writes a (1, bt) row.
            out_specs=pl.BlockSpec((1, bt), lambda i: (0, i)),
        ),
        compiler_params=pltpu.CompilerParams(
            dimension_semantics=("parallel",),
            vmem_limit_bytes=_vmem_limit_bytes(
                bt, n_obs, h2dim, hdim, x.dtype.itemsize, w1_in.dtype.itemsize),
        ),
        cost_estimate=pl.CostEstimate(
            flops=flops,
            transcendentals=transcendentals,
            bytes_accessed=bytes_accessed,
        ),
    )(x, w1_in, b1, w2_in, b2, w3_row, b3_s)

    # (1, B) -> (B0, 1) to match the nn.Module's output shape (b3 already
    # added in-kernel).  Under jit this is the only remaining wrapper op.
    return out_rows[0, :B0][:, None]


def init_params(key, n_obs, n_hidden):
    """Deterministic init mimicking nn.Linear's uniform(-1/sqrt(in), 1/sqrt(in)).
    Weights stored transposed vs PyTorch, i.e. (in_features, out_features)."""
    dims = [(n_obs, n_hidden * 2), (n_hidden * 2, n_hidden), (n_hidden, 1)]
    params = []
    for (fan_in, fan_out) in dims:
        key, kw, kb = jax.random.split(key, 3)
        bound = 1.0 / jnp.sqrt(fan_in)
        w = jax.random.uniform(kw, (fan_in, fan_out), jnp.float32, -bound, bound)
        b = jax.random.uniform(kb, (1, fan_out), jnp.float32, -bound, bound)
        params += [w, b]
    return params


def v_reference(x, w1, b1, w2, b2, w3, b3):
    h1 = jax.nn.silu(x @ w1 + b1)
    h2 = jax.nn.silu(h1 @ w2 + b2)
    return h2 @ w3 + b3


if __name__ == "__main__":
    key = jax.random.PRNGKey(0)
    B, n_obs, n_hidden = 256, 32, 32   # small sizes -> bt=B, grid=(1,)

    key, kx = jax.random.split(key)
    x = jax.random.normal(kx, (B, n_obs), jnp.float32)
    params = init_params(key, n_obs, n_hidden)

    ref = v_reference(x, *params)

    # f32 MXU path (exact vs reference).
    out = jax.block_until_ready(v_forward(x, *params))
    assert out.shape == (B, 1)
    assert jnp.allclose(out, ref, atol=1e-5, rtol=1e-5), (
        f"max abs diff {jnp.max(jnp.abs(out - ref))}")

    # bf16 MXU path (f32 accumulation; valid on v5e/v6e/v7x) — loose tolerance.
    out_bf16 = jax.block_until_ready(v_forward(x, *params, use_bf16=True))
    assert out_bf16.shape == (B, 1)
    assert jnp.allclose(out_bf16, ref, atol=5e-2, rtol=5e-2), (
        f"max abs diff (bf16) {jnp.max(jnp.abs(out_bf16 - ref))}")

    print("KERNEL_OK")
</pallas_src>

<mosaic_0001>
module attributes {stable_mosaic.version = 11 : i64} {
  func.func @v_mlp_kernel(%arg0: i32, %arg1: memref<256x32xf32, #tpu.memory_space<vmem>>, %arg2: memref<32x64xf32, #tpu.memory_space<vmem>>, %arg3: memref<1x64xf32, #tpu.memory_space<vmem>>, %arg4: memref<64x32xf32, #tpu.memory_space<vmem>>, %arg5: memref<1x32xf32, #tpu.memory_space<vmem>>, %arg6: memref<1x32xf32, #tpu.memory_space<vmem>>, %arg7: memref<1xf32, #tpu.memory_space<smem>>, %arg8: memref<1x256xf32, #tpu.memory_space<vmem>>) attributes {dimension_semantics = [#tpu.dimension_semantics<parallel>], iteration_bounds = array<i64: 1>, scalar_prefetch = 0 : i64, scratch_operands = 0 : i64, tpu.core_type = #tpu.core_type<tc>, window_params = [{transform_indices = @transform_0, window_bounds = array<i64: 256, 32>}, {pipeline_mode = #tpu.pipeline_mode<synchronous>, transform_indices = @transform_1, window_bounds = array<i64: 32, 64>}, {pipeline_mode = #tpu.pipeline_mode<synchronous>, transform_indices = @transform_2, window_bounds = array<i64: 1, 64>}, {pipeline_mode = #tpu.pipeline_mode<synchronous>, transform_indices = @transform_3, window_bounds = array<i64: 64, 32>}, {pipeline_mode = #tpu.pipeline_mode<synchronous>, transform_indices = @transform_4, window_bounds = array<i64: 1, 32>}, {pipeline_mode = #tpu.pipeline_mode<synchronous>, transform_indices = @transform_5, window_bounds = array<i64: 1, 32>}, {transform_indices = @transform_6, window_bounds = array<i64: 1>}, {transform_indices = @transform_7, window_bounds = array<i64: 1, 256>}]} {
    %c0 = arith.constant 0 : index
    %c0_0 = arith.constant 0 : index
    %0 = vector.load %arg2[%c0, %c0_0] : memref<32x64xf32, #tpu.memory_space<vmem>>, vector<32x64xf32>
    %c0_1 = arith.constant 0 : index
    %c0_2 = arith.constant 0 : index
    %1 = vector.load %arg1[%c0_1, %c0_2] : memref<256x32xf32, #tpu.memory_space<vmem>>, vector<256x32xf32>
    %cst = arith.constant dense<0.000000e+00> : vector<256x64xf32>
    %2 = tpu.matmul %1, %0, %cst {dimension_numbers = #tpu.dot_dimension_numbers<[1], [0], [0], [1], [0, 0, 1, 1], [], []>} : vector<256x32xf32>, vector<32x64xf32>, vector<256x64xf32> -> vector<256x64xf32>
    %c0_3 = arith.constant 0 : index
    %c0_4 = arith.constant 0 : index
    %3 = vector.load %arg3[%c0_3, %c0_4] : memref<1x64xf32, #tpu.memory_space<vmem>>, vector<1x64xf32>
    %4 = vector.broadcast %3 : vector<1x64xf32> to vector<256x64xf32>
    %5 = arith.addf %2, %4 : vector<256x64xf32>
    %6 = arith.negf %5 : vector<256x64xf32>
    %7 = math.exp %6 : vector<256x64xf32>
    %cst_5 = arith.constant 1.000000e+00 : f32
    %8 = vector.broadcast %cst_5 : f32 to vector<256x64xf32>
    %9 = arith.addf %8, %7 : vector<256x64xf32>
    %10 = arith.divf %8, %9 : vector<256x64xf32>
    %11 = arith.mulf %5, %10 : vector<256x64xf32>
    %c0_6 = arith.constant 0 : index
    %c0_7 = arith.constant 0 : index
    %12 = vector.load %arg4[%c0_6, %c0_7] : memref<64x32xf32, #tpu.memory_space<vmem>>, vector<64x32xf32>
    %cst_8 = arith.constant dense<0.000000e+00> : vector<256x32xf32>
    %13 = tpu.matmul %11, %12, %cst_8 {dimension_numbers = #tpu.dot_dimension_numbers<[1], [0], [0], [1], [0, 0, 1, 1], [], []>} : vector<256x64xf32>, vector<64x32xf32>, vector<256x32xf32> -> vector<256x32xf32>
    %c0_9 = arith.constant 0 : index
    %c0_10 = arith.constant 0 : index
    %14 = vector.load %arg5[%c0_9, %c0_10] : memref<1x32xf32, #tpu.memory_space<vmem>>, vector<1x32xf32>
    %15 = vector.broadcast %14 : vector<1x32xf32> to vector<256x32xf32>
    %16 = arith.addf %13, %15 : vector<256x32xf32>
    %17 = arith.negf %16 : vector<256x32xf32>
    %18 = math.exp %17 : vector<256x32xf32>
    %cst_11 = arith.constant 1.000000e+00 : f32
    %19 = vector.broadcast %cst_11 : f32 to vector<256x32xf32>
    %20 = arith.addf %19, %18 : vector<256x32xf32>
    %21 = arith.divf %19, %20 : vector<256x32xf32>
    %22 = arith.mulf %16, %21 : vector<256x32xf32>
    %c0_12 = arith.constant 0 : index
    %c0_13 = arith.constant 0 : index
    %23 = vector.load %arg6[%c0_12, %c0_13] : memref<1x32xf32, #tpu.memory_space<vmem>>, vector<1x32xf32>
    %24 = vector.broadcast %23 : vector<1x32xf32> to vector<256x32xf32>
    %25 = arith.mulf %22, %24 : vector<256x32xf32>
    %cst_14 = arith.constant dense<0.000000e+00> : vector<256xf32>
    %26 = vector.multi_reduction <add>, %25, %cst_14 [1] : vector<256x32xf32> to vector<256xf32>
    %c0_15 = arith.constant 0 : index
    %27 = memref.load %arg7[%c0_15] : memref<1xf32, #tpu.memory_space<smem>>
    %28 = vector.broadcast %27 : f32 to vector<256xf32>
    %29 = arith.addf %26, %28 : vector<256xf32>
    %30 = vector.shape_cast %29 : vector<256xf32> to vector<1x256xf32>
    %c0_16 = arith.constant 0 : index
    %c0_17 = arith.constant 0 : index
    %31 = vector.load %arg8[%c0_16, %c0_17] : memref<1x256xf32, #tpu.memory_space<vmem>>, vector<1x256xf32>
    tpu.vector_store %arg8[%c0_16, %c0_17], %30 {strides = array<i32>} : memref<1x256xf32, #tpu.memory_space<vmem>>, vector<1x256xf32>,
    return
  }
  func.func @transform_0(%arg0: i32) -> (i32, i32) {
    %c0_i32 = arith.constant 0 : i32
    %c0_i32_0 = arith.constant 0 : i32
    return %arg0, %c0_i32 : i32, i32
  }
  func.func @transform_1(%arg0: i32) -> (i32, i32) {
    %c0_i32 = arith.constant 0 : i32
    %c0_i32_0 = arith.constant 0 : i32
    %c0_i32_1 = arith.constant 0 : i32
    return %c0_i32, %c0_i32_0 : i32, i32
  }
  func.func @transform_2(%arg0: i32) -> (i32, i32) {
    %c0_i32 = arith.constant 0 : i32
    %c0_i32_0 = arith.constant 0 : i32
    %c0_i32_1 = arith.constant 0 : i32
    return %c0_i32, %c0_i32_0 : i32, i32
  }
  func.func @transform_3(%arg0: i32) -> (i32, i32) {
    %c0_i32 = arith.constant 0 : i32
    %c0_i32_0 = arith.constant 0 : i32
    %c0_i32_1 = arith.constant 0 : i32
    return %c0_i32, %c0_i32_0 : i32, i32
  }
  func.func @transform_4(%arg0: i32) -> (i32, i32) {
    %c0_i32 = arith.constant 0 : i32
    %c0_i32_0 = arith.constant 0 : i32
    %c0_i32_1 = arith.constant 0 : i32
    return %c0_i32, %c0_i32_0 : i32, i32
  }
  func.func @transform_5(%arg0: i32) -> (i32, i32) {
    %c0_i32 = arith.constant 0 : i32
    %c0_i32_0 = arith.constant 0 : i32
    %c0_i32_1 = arith.constant 0 : i32
    return %c0_i32, %c0_i32_0 : i32, i32
  }
  func.func @transform_6(%arg0: i32) -> i32 {
    %c0_i32 = arith.constant 0 : i32
    %c0_i32_0 = arith.constant 0 : i32
    return %c0_i32 : i32
  }
  func.func @transform_7(%arg0: i32) -> (i32, i32) {
    %c0_i32 = arith.constant 0 : i32
    %c0_i32_0 = arith.constant 0 : i32
    return %c0_i32, %arg0 : i32, i32
  }
}

</mosaic_0001>

<llo_original>
// kernel: v_forward.1
$region0: #{v_forward.1}
  #allocation0 [shape = 'u32[]', space=smem, size = 0x4, offset = 0x4, fixed_abs, tag = 'smem constant byte address 0x4 - core index']
  #allocation1 [shape = 'u32[144,128]{1,0:T(1,128)}', space=vmem, size = 0x12000, scoped, tag = 'internal scratch']
  #allocation2 [shape = 'f32[1]{0:T(128)S(6)}', space=smem, size = 0x200, scoped, tag = 'scoped memory for v_forward.1']
  %s0 = inlined_call_operand.vmem [shape: f32[256,32], index: 0, kind: input, shape index: {}]
  %s1 = inlined_call_operand.vmem [shape: f32[32,64], index: 1, kind: input, shape index: {}]
  %s2 = inlined_call_operand.vmem [shape: f32[1,64], index: 2, kind: input, shape index: {}]
  %s3 = inlined_call_operand.vmem [shape: f32[64,32], index: 3, kind: input, shape index: {}]
  %s4 = inlined_call_operand.vmem [shape: f32[1,32], index: 4, kind: input, shape index: {}]
  %s5 = inlined_call_operand.vmem [shape: f32[1,32], index: 5, kind: input, shape index: {}]
  %s6 = inlined_call_operand.<no memory space> [shape: f32[1], index: 6, kind: input, shape index: {}]
  %s7 = inlined_call_operand.hbm [shape: f32[1,256], index: 7, kind: output, shape index: {}]
  %s8 = sld [smem:[#allocation0]]
  $region38: #{v_forward.1} parent=0
    _
  %s10 = ssub.s32 1, %s8
  %s11 = scalar_select 0, %s10, %s8
  %12 = sst [smem:[#allocation2]] %s6
  $region1: #{v_forward.1} parent=0
    #allocation3 [shape = 'u8[1024]{0}', space=vmem, size = 0x400, scoped, tag = 'output window, operand 0, single buffered']
    #allocation4 [shape = 's32[1]{0}', space=sflag, size = 0x4, scoped, tag = 'scoped memory for v_forward.1']
    %13 = vsyncpa [#allocation4], 0
    // Predicated region
    $region2: #{v_forward.1} parent=1 // pred_check
      _
    $region3: #{v_forward.1} parent=1 // pred_check_branch
      %15 = sbr.rel (0) target = $region5
    $region4: #{v_forward.1} parent=1 // pred_region
      _
    $region5: #{v_forward.1} parent=1 // pred_fallthru
      _
    // Predicated region
    $region6: #{v_forward.1} parent=1 // pred_check
      _
    $region7: #{v_forward.1} parent=1 // pred_check_branch
      %17 = sbr.rel (0) target = $region9
    $region8: #{v_forward.1} parent=1 // pred_region
      _
    $region9: #{v_forward.1} parent=1 // pred_fallthru
      _
    // Predicated region
    $region10: #{v_forward.1} parent=1 // pred_check
      _
    $region11: #{v_forward.1} parent=1 // pred_check_branch
      %19 = sbr.rel (0) target = $region13
    $region12: #{v_forward.1} parent=1 // pred_region
      _
    $region13: #{v_forward.1} parent=1 // pred_fallthru
      _
    // Predicated region
    $region14: #{v_forward.1} parent=1 // pred_check
      _
    $region15: #{v_forward.1} parent=1 // pred_check_branch
      %21 = sbr.rel (0) target = $region17
    $region16: #{v_forward.1} parent=1 // pred_region
      _
    $region17: #{v_forward.1} parent=1 // pred_fallthru
      _
    // Predicated region
    $region18: #{v_forward.1} parent=1 // pred_check
      _
    $region19: #{v_forward.1} parent=1 // pred_check_branch
      %23 = sbr.rel (0) target = $region21
    $region20: #{v_forward.1} parent=1 // pred_region
      _
    $region21: #{v_forward.1} parent=1 // pred_fallthru
      _
    // Predicated region
    $region22: #{v_forward.1} parent=1 // pred_check
      _
    $region23: #{v_forward.1} parent=1 // pred_check_branch
      %25 = sbr.rel (0) target = $region25
    $region24: #{v_forward.1} parent=1 // pred_region
      _
    $region25: #{v_forward.1} parent=1 // pred_fallthru
      _
    // Predicated region
    $region26: #{v_forward.1} parent=1 // pred_check
      _
    $region27: #{v_forward.1} parent=1 // pred_check_branch
      %27 = sbr.rel (0) target = $region29
    $region28: #{v_forward.1} parent=1 // pred_region
      _
    $region29: #{v_forward.1} parent=1 // pred_fallthru
      _
    %v28 = vld [vmem:[%s1] sm:$0xff]
    %v29 = vld [vmem:[%s1 + $0x8] sm:$0xff]
    %v30 = vld [vmem:[%s1 + $0x10] sm:$0xff]
    %v31 = vld [vmem:[%s1 + $0x18] sm:$0xff]
    %v32 = vld [vmem:[%s0] sm:$0xff]
    %v33 = vld [vmem:[%s0 + $0x8] sm:$0xff]
    %v34 = vld [vmem:[%s0 + $0x10] sm:$0xff]
    %v35 = vld [vmem:[%s0 + $0x18] sm:$0xff]
    %v36 = vld [vmem:[%s0 + $0x20] sm:$0xff]
    %v37 = vld [vmem:[%s0 + $0x28] sm:$0xff]
    %v38 = vld [vmem:[%s0 + $0x30] sm:$0xff]
    %v39 = vld [vmem:[%s0 + $0x38] sm:$0xff]
    %v40 = vld [vmem:[%s0 + $0x40] sm:$0xff]
    %v41 = vld [vmem:[%s0 + $0x48] sm:$0xff]
    %v42 = vld [vmem:[%s0 + $0x50] sm:$0xff]
    %v43 = vld [vmem:[%s0 + $0x58] sm:$0xff]
    %v44 = vld [vmem:[%s0 + $0x60] sm:$0xff]
    %v45 = vld [vmem:[%s0 + $0x68] sm:$0xff]
    %v46 = vld [vmem:[%s0 + $0x70] sm:$0xff]
    %v47 = vld [vmem:[%s0 + $0x78] sm:$0xff]
    %v48 = vld [vmem:[%s0 + $0x80] sm:$0xff]
    %v49 = vld [vmem:[%s0 + $0x88] sm:$0xff]
    %v50 = vld [vmem:[%s0 + $0x90] sm:$0xff]
    %v51 = vld [vmem:[%s0 + $0x98] sm:$0xff]
    %v52 = vld [vmem:[%s0 + $0xa0] sm:$0xff]
    %v53 = vld [vmem:[%s0 + $0xa8] sm:$0xff]
    %v54 = vld [vmem:[%s0 + $0xb0] sm:$0xff]
    %v55 = vld [vmem:[%s0 + $0xb8] sm:$0xff]
    %v56 = vld [vmem:[%s0 + $0xc0] sm:$0xff]
    %v57 = vld [vmem:[%s0 + $0xc8] sm:$0xff]
    %v58 = vld [vmem:[%s0 + $0xd0] sm:$0xff]
    %v59 = vld [vmem:[%s0 + $0xd8] sm:$0xff]
    %v60 = vld [vmem:[%s0 + $0xe0] sm:$0xff]
    %v61 = vld [vmem:[%s0 + $0xe8] sm:$0xff]
    %v62 = vld [vmem:[%s0 + $0xf0] sm:$0xff]
    %v63 = vld [vmem:[%s0 + $0xf8] sm:$0xff]
    %v64 = vld [vmem:[%s2] sm:$0x1]
    %v66 = vlaneseq
    %v67 = vshrl.u32 %v66, 7
    %v68 = vsub.s32 0, %v67
    %v69 = vrot.slane %v64, %v68
    %vm71 = vcmask 261120
    %v73 = vsel %vm71, %v32, 0
    %v76 = vsel %vm71, %v33, 0
    %v79 = vsel %vm71, %v34, 0
    %v82 = vsel %vm71, %v35, 0
    %v85 = vsel %vm71, %v36, 0
    %v88 = vsel %vm71, %v37, 0
    %v91 = vsel %vm71, %v38, 0
    %v94 = vsel %vm71, %v39, 0
    %v97 = vsel %vm71, %v40, 0
    %v100 = vsel %vm71, %v41, 0
    %v103 = vsel %vm71, %v42, 0
    %v106 = vsel %vm71, %v43, 0
    %v109 = vsel %vm71, %v44, 0
    %v112 = vsel %vm71, %v45, 0
    %v115 = vsel %vm71, %v46, 0
    %v118 = vsel %vm71, %v47, 0
    %v121 = vsel %vm71, %v48, 0
    %v124 = vsel %vm71, %v49, 0
    %v127 = vsel %vm71, %v50, 0
    %v130 = vsel %vm71, %v51, 0
    %v133 = vsel %vm71, %v52, 0
    %v136 = vsel %vm71, %v53, 0
    %v139 = vsel %vm71, %v54, 0
    %v142 = vsel %vm71, %v55, 0
    %v145 = vsel %vm71, %v56, 0
    %v148 = vsel %vm71, %v57, 0
    %v151 = vsel %vm71, %v58, 0
    %v154 = vsel %vm71, %v59, 0
    %v157 = vsel %vm71, %v60, 0
    %v160 = vsel %vm71, %v61, 0
    %v163 = vsel %vm71, %v62, 0
    %v166 = vsel %vm71, %v63, 0
    %168 = vmatprep.subr.mxu0 0.0
    %169 = vmatpush1.msra.mxu0 %v28
    %170 = vmatprep.subr.mxu0 0.0
    %171 = vmatpush1.msra.mxu0 %v29
    %172 = vmatprep.subr.mxu0 0.0
    %173 = vmatpush1.msra.mxu0 %v30
    %174 = vmatprep.subr.mxu0 0.0
    %175 = vmatpush1.msra.mxu0 %v31
    %176 = vmatprep.subr.mxu0 0.0
    %177 = vmatpush1.msra.mxu0 0.0
    %178 = vmatprep.subr.mxu0 0.0
    %179 = vmatpush1.msra.mxu0 0.0
    %180 = vmatprep.subr.mxu0 0.0
    %181 = vmatpush1.msra.mxu0 0.0
    %182 = vmatprep.subr.mxu0 0.0
    %183 = vmatpush1.msra.mxu0 0.0
    %184 = vmatprep.subr.mxu0 0.0
    %185 = vmatpush1.msra.mxu0 0.0
    %186 = vmatprep.subr.mxu0 0.0
    %187 = vmatpush1.msra.mxu0 0.0
    %188 = vmatprep.subr.mxu0 0.0
    %189 = vmatpush1.msra.mxu0 0.0
    %190 = vmatprep.subr.mxu0 0.0
    %191 = vmatpush1.msra.mxu0 0.0
    %192 = vmatprep.subr.mxu0 0.0
    %193 = vmatpush1.msra.mxu0 0.0
    %194 = vmatprep.subr.mxu0 0.0
    %195 = vmatpush1.msra.mxu0 0.0
    %196 = vmatprep.subr.mxu0 0.0
    %197 = vmatpush1.msra.mxu0 0.0
    %198 = vmatprep.subr.mxu0 0.0
    %199 = vmatpush1.msra.mxu0 0.0
    %200 = vmatprep.subr.mxu0 0.0
    %201 = vmatpush1.msra.mxu0 0.0
    %202 = vmatprep.subr.mxu0 0.0
    %203 = vmatpush1.msra.mxu0 0.0
    %204 = vmatprep.subr.mxu0 0.0
    %205 = vmatpush1.msra.mxu0 0.0
    %206 = vmatprep.subr.mxu0 0.0
    %207 = vmatpush1.msra.mxu0 0.0
    %208 = vmatprep.subr.mxu0 0.0
    %209 = vmatpush1.msra.mxu0 0.0
    %210 = vmatprep.subr.mxu0 0.0
    %211 = vmatpush1.msra.mxu0 0.0
    %212 = vmatprep.subr.mxu0 0.0
    %213 = vmatpush1.msra.mxu0 0.0
    %214 = vmatprep.subr.mxu0 0.0
    %215 = vmatpush1.msra.mxu0 0.0
    %216 = vmatprep.subr.mxu0 0.0
    %217 = vmatpush1.msra.mxu0 0.0
    %218 = vmatprep.subr.mxu0 0.0
    %219 = vmatpush1.msra.mxu0 0.0
    %220 = vmatprep.subr.mxu0 0.0
    %221 = vmatpush1.msra.mxu0 0.0
    %222 = vmatprep.subr.mxu0 0.0
    %223 = vmatpush1.msra.mxu0 0.0
    %224 = vmatprep.subr.mxu0 0.0
    %225 = vmatpush1.msra.mxu0 0.0
    %226 = vmatprep.subr.mxu0 0.0
    %227 = vmatpush1.msra.mxu0 0.0
    %228 = vmatprep.subr.mxu0 0.0
    %229 = vmatpush1.msra.mxu0 0.0
    %230 = vmatprep.subr.mxu0 0.0
    %231 = vmatpush1.msra.mxu0 0.0
    %232 = vmatprep.mubr.f32.mxu0 0.0
    %233 = vmatmul.mubr.f32.gmra.mrb[0].mxu0 %v73
    %v234 = vpop.f32.mrb[0].mxu0
    %v235 = vadd.f32 %v69, %v234
    %v236 = vpop.f32.mrb[0].mxu0
    %237 = vmatprep.mubr.f32.mxu0 0.0
    %238 = vmatmul.mubr.f32.gmra.mrb[0].mxu0 %v76
    %v239 = vpop.f32.mrb[0].mxu0
    %v240 = vadd.f32 %v69, %v239
    %v241 = vpop.f32.mrb[0].mxu0
    %242 = vmatprep.mubr.f32.mxu0 0.0
    %243 = vmatmul.mubr.f32.gmra.mrb[0].mxu0 %v79
    %v244 = vpop.f32.mrb[0].mxu0
    %v245 = vadd.f32 %v69, %v244
    %v246 = vpop.f32.mrb[0].mxu0
    %247 = vmatprep.mubr.f32.mxu0 0.0
    %248 = vmatmul.mubr.f32.gmra.mrb[0].mxu0 %v82
    %v249 = vpop.f32.mrb[0].mxu0
    %v250 = vadd.f32 %v69, %v249
    %v251 = vpop.f32.mrb[0].mxu0
    %252 = vmatprep.mubr.f32.mxu0 0.0
    %253 = vmatmul.mubr.f32.gmra.mrb[0].mxu0 %v85
    %v254 = vpop.f32.mrb[0].mxu0
    %v255 = vadd.f32 %v69, %v254
    %v256 = vpop.f32.mrb[0].mxu0
    %257 = vmatprep.mubr.f32.mxu0 0.0
    %258 = vmatmul.mubr.f32.gmra.mrb[0].mxu0 %v88
    %v259 = vpop.f32.mrb[0].mxu0
    %v260 = vadd.f32 %v69, %v259
    %v261 = vpop.f32.mrb[0].mxu0
    %262 = vmatprep.mubr.f32.mxu0 0.0
    %263 = vmatmul.mubr.f32.gmra.mrb[0].mxu0 %v91
    %v264 = vpop.f32.mrb[0].mxu0
    %v265 = vadd.f32 %v69, %v264
    %v266 = vpop.f32.mrb[0].mxu0
    %267 = vmatprep.mubr.f32.mxu0 0.0
    %268 = vmatmul.mubr.f32.gmra.mrb[0].mxu0 %v94
    %v269 = vpop.f32.mrb[0].mxu0
    %v270 = vadd.f32 %v69, %v269
    %v271 = vpop.f32.mrb[0].mxu0
    %272 = vmatprep.mubr.f32.mxu0 0.0
    %273 = vmatmul.mubr.f32.gmra.mrb[0].mxu0 %v97
    %v274 = vpop.f32.mrb[0].mxu0
    %v275 = vadd.f32 %v69, %v274
    %v276 = vpop.f32.mrb[0].mxu0
    %277 = vmatprep.mubr.f32.mxu0 0.0
    %278 = vmatmul.mubr.f32.gmra.mrb[0].mxu0 %v100
    %v279 = vpop.f32.mrb[0].mxu0
    %v280 = vadd.f32 %v69, %v279
    %v281 = vpop.f32.mrb[0].mxu0
    %282 = vmatprep.mubr.f32.mxu0 0.0
    %283 = vmatmul.mubr.f32.gmra.mrb[0].mxu0 %v103
    %v284 = vpop.f32.mrb[0].mxu0
    %v285 = vadd.f32 %v69, %v284
    %v286 = vpop.f32.mrb[0].mxu0
    %287 = vmatprep.mubr.f32.mxu0 0.0
    %288 = vmatmul.mubr.f32.gmra.mrb[0].mxu0 %v106
    %v289 = vpop.f32.mrb[0].mxu0
    %v290 = vadd.f32 %v69, %v289
    %v291 = vpop.f32.mrb[0].mxu0
    %292 = vmatprep.mubr.f32.mxu0 0.0
    %293 = vmatmul.mubr.f32.gmra.mrb[0].mxu0 %v109
    %v294 = vpop.f32.mrb[0].mxu0
    %v295 = vadd.f32 %v69, %v294
    %v296 = vpop.f32.mrb[0].mxu0
    %297 = vmatprep.mubr.f32.mxu0 0.0
    %298 = vmatmul.mubr.f32.gmra.mrb[0].mxu0 %v112
    %v299 = vpop.f32.mrb[0].mxu0
    %v300 = vadd.f32 %v69, %v299
    %v301 = vpop.f32.mrb[0].mxu0
    %302 = vmatprep.mubr.f32.mxu0 0.0
    %303 = vmatmul.mubr.f32.gmra.mrb[0].mxu0 %v115
    %v304 = vpop.f32.mrb[0].mxu0
    %v305 = vadd.f32 %v69, %v304
    %v306 = vpop.f32.mrb[0].mxu0
    %307 = vmatprep.mubr.f32.mxu0 0.0
    %308 = vmatmul.mubr.f32.gmra.mrb[0].mxu0 %v118
    %v309 = vpop.f32.mrb[0].mxu0
    %v310 = vadd.f32 %v69, %v309
    %v311 = vpop.f32.mrb[0].mxu0
    %312 = vmatprep.mubr.f32.mxu0 0.0
    %313 = vmatmul.mubr.f32.gmra.mrb[0].mxu0 %v121
    %v314 = vpop.f32.mrb[0].mxu0
    %v315 = vadd.f32 %v69, %v314
    %v316 = vpop.f32.mrb[0].mxu0
    %317 = vmatprep.mubr.f32.mxu0 0.0
    %318 = vmatmul.mubr.f32.gmra.mrb[0].mxu0 %v124
    %v319 = vpop.f32.mrb[0].mxu0
    %v320 = vadd.f32 %v69, %v319
    %v321 = vpop.f32.mrb[0].mxu0
    %322 = vmatprep.mubr.f32.mxu0 0.0
    %323 = vmatmul.mubr.f32.gmra.mrb[0].mxu0 %v127
    %v324 = vpop.f32.mrb[0].mxu0
    %v325 = vadd.f32 %v69, %v324
    %v326 = vpop.f32.mrb[0].mxu0
    %327 = vmatprep.mubr.f32.mxu0 0.0
    %328 = vmatmul.mubr.f32.gmra.mrb[0].mxu0 %v130
    %v329 = vpop.f32.mrb[0].mxu0
    %v330 = vadd.f32 %v69, %v329
    %v331 = vpop.f32.mrb[0].mxu0
    %332 = vmatprep.mubr.f32.mxu0 0.0
    %333 = vmatmul.mubr.f32.gmra.mrb[0].mxu0 %v133
    %v334 = vpop.f32.mrb[0].mxu0
    %v335 = vadd.f32 %v69, %v334
    %v336 = vpop.f32.mrb[0].mxu0
    %337 = vmatprep.mubr.f32.mxu0 0.0
    %338 = vmatmul.mubr.f32.gmra.mrb[0].mxu0 %v136
    %v339 = vpop.f32.mrb[0].mxu0
    %v340 = vadd.f32 %v69, %v339
    %v341 = vpop.f32.mrb[0].mxu0
    %342 = vmatprep.mubr.f32.mxu0 0.0
    %343 = vmatmul.mubr.f32.gmra.mrb[0].mxu0 %v139
    %v344 = vpop.f32.mrb[0].mxu0
    %v345 = vadd.f32 %v69, %v344
    %v346 = vpop.f32.mrb[0].mxu0
    %347 = vmatprep.mubr.f32.mxu0 0.0
    %348 = vmatmul.mubr.f32.gmra.mrb[0].mxu0 %v142
    %v349 = vpop.f32.mrb[0].mxu0
    %v350 = vadd.f32 %v69, %v349
    %v351 = vpop.f32.mrb[0].mxu0
    %352 = vmatprep.mubr.f32.mxu0 0.0
    %353 = vmatmul.mubr.f32.gmra.mrb[0].mxu0 %v145
    %v354 = vpop.f32.mrb[0].mxu0
    %v355 = vadd.f32 %v69, %v354
    %v356 = vpop.f32.mrb[0].mxu0
    %357 = vmatprep.mubr.f32.mxu0 0.0
    %358 = vmatmul.mubr.f32.gmra.mrb[0].mxu0 %v148
    %v359 = vpop.f32.mrb[0].mxu0
    %v360 = vadd.f32 %v69, %v359
    %v361 = vpop.f32.mrb[0].mxu0
    %362 = vmatprep.mubr.f32.mxu0 0.0
    %363 = vmatmul.mubr.f32.gmra.mrb[0].mxu0 %v151
    %v364 = vpop.f32.mrb[0].mxu0
    %v365 = vadd.f32 %v69, %v364
    %v366 = vpop.f32.mrb[0].mxu0
    %367 = vmatprep.mubr.f32.mxu0 0.0
    %368 = vmatmul.mubr.f32.gmra.mrb[0].mxu0 %v154
    %v369 = vpop.f32.mrb[0].mxu0
    %v370 = vadd.f32 %v69, %v369
    %v371 = vpop.f32.mrb[0].mxu0
    %372 = vmatprep.mubr.f32.mxu0 0.0
    %373 = vmatmul.mubr.f32.gmra.mrb[0].mxu0 %v157
    %v374 = vpop.f32.mrb[0].mxu0
    %v375 = vadd.f32 %v69, %v374
    %v376 = vpop.f32.mrb[0].mxu0
    %377 = vmatprep.mubr.f32.mxu0 0.0
    %378 = vmatmul.mubr.f32.gmra.mrb[0].mxu0 %v160
    %v379 = vpop.f32.mrb[0].mxu0
    %v380 = vadd.f32 %v69, %v379
    %v381 = vpop.f32.mrb[0].mxu0
    %382 = vmatprep.mubr.f32.mxu0 0.0
    %383 = vmatmul.mubr.f32.gmra.mrb[0].mxu0 %v163
    %v384 = vpop.f32.mrb[0].mxu0
    %v385 = vadd.f32 %v69, %v384
    %v386 = vpop.f32.mrb[0].mxu0
    %387 = vmatprep.mubr.f32.mxu0 0.0
    %388 = vmatmul.mubr.f32.gmra.mrb[0].mxu0 %v166
    %v389 = vpop.f32.mrb[0].mxu0
    %v390 = vadd.f32 %v69, %v389
    %v391 = vpop.f32.mrb[0].mxu0
    %392 = vdwg.mxu0
    %v393 = vxor.u32 %v235, 2147483648
    %v394 = vxor.u32 %v240, 2147483648
    %v395 = vxor.u32 %v245, 2147483648
    %v396 = vxor.u32 %v250, 2147483648
    %v397 = vxor.u32 %v255, 2147483648
    %v398 = vxor.u32 %v260, 2147483648
    %v399 = vxor.u32 %v265, 2147483648
    %v400 = vxor.u32 %v270, 2147483648
    %v401 = vxor.u32 %v275, 2147483648
    %v402 = vxor.u32 %v280, 2147483648
    %v403 = vxor.u32 %v285, 2147483648
    %v404 = vxor.u32 %v290, 2147483648
    %v405 = vxor.u32 %v295, 2147483648
    %v406 = vxor.u32 %v300, 2147483648
    %v407 = vxor.u32 %v305, 2147483648
    %v408 = vxor.u32 %v310, 2147483648
    %v409 = vxor.u32 %v315, 2147483648
    %v410 = vxor.u32 %v320, 2147483648
    %v411 = vxor.u32 %v325, 2147483648
    %v412 = vxor.u32 %v330, 2147483648
    %v413 = vxor.u32 %v335, 2147483648
    %v414 = vxor.u32 %v340, 2147483648
    %v415 = vxor.u32 %v345, 2147483648
    %v416 = vxor.u32 %v350, 2147483648
    %v417 = vxor.u32 %v355, 2147483648
    %v418 = vxor.u32 %v360, 2147483648
    %v419 = vxor.u32 %v365, 2147483648
    %v420 = vxor.u32 %v370, 2147483648
    %v421 = vxor.u32 %v375, 2147483648
    %v422 = vxor.u32 %v380, 2147483648
    %v423 = vxor.u32 %v385, 2147483648
    %v424 = vxor.u32 %v390, 2147483648
    %v425 = vmul.f32 %v393, 1.442695
    %v426 = vpow.pop %v425
    %v427 = vmul.f32 %v394, 1.442695
    %v428 = vpow.pop %v427
    %v429 = vmul.f32 %v395, 1.442695
    %v430 = vpow.pop %v429
    %v431 = vmul.f32 %v396, 1.442695
    %v432 = vpow.pop %v431
    %v433 = vmul.f32 %v397, 1.442695
    %v434 = vpow.pop %v433
    %v435 = vmul.f32 %v398, 1.442695
    %v436 = vpow.pop %v435
    %v437 = vmul.f32 %v399, 1.442695
    %v438 = vpow.pop %v437
    %v439 = vmul.f32 %v400, 1.442695
    %v440 = vpow.pop %v439
    %v441 = vmul.f32 %v401, 1.442695
    %v442 = vpow.pop %v441
    %v443 = vmul.f32 %v402, 1.442695
    %v444 = vpow.pop %v443
    %v445 = vmul.f32 %v403, 1.442695
    %v446 = vpow.pop %v445
    %v447 = vmul.f32 %v404, 1.442695
    %v448 = vpow.pop %v447
    %v449 = vmul.f32 %v405, 1.442695
    %v450 = vpow.pop %v449
    %v451 = vmul.f32 %v406, 1.442695
    %v452 = vpow.pop %v451
    %v453 = vmul.f32 %v407, 1.442695
    %v454 = vpow.pop %v453
    %v455 = vmul.f32 %v408, 1.442695
    %v456 = vpow.pop %v455
    %v457 = vmul.f32 %v409, 1.442695
    %v458 = vpow.pop %v457
    %v459 = vmul.f32 %v410, 1.442695
    %v460 = vpow.pop %v459
    %v461 = vmul.f32 %v411, 1.442695
    %v462 = vpow.pop %v461
    %v463 = vmul.f32 %v412, 1.442695
    %v464 = vpow.pop %v463
    %v465 = vmul.f32 %v413, 1.442695
    %v466 = vpow.pop %v465
    %v467 = vmul.f32 %v414, 1.442695
    %v468 = vpow.pop %v467
    %v469 = vmul.f32 %v415, 1.442695
    %v470 = vpow.pop %v469
    %v471 = vmul.f32 %v416, 1.442695
    %v472 = vpow.pop %v471
    %v473 = vmul.f32 %v417, 1.442695
    %v474 = vpow.pop %v473
    %v475 = vmul.f32 %v418, 1.442695
    %v476 = vpow.pop %v475
    %v477 = vmul.f32 %v419, 1.442695
    %v478 = vpow.pop %v477
    %v479 = vmul.f32 %v420, 1.442695
    %v480 = vpow.pop %v479
    %v481 = vmul.f32 %v421, 1.442695
    %v482 = vpow.pop %v481
    %v483 = vmul.f32 %v422, 1.442695
    %v484 = vpow.pop %v483
    %v485 = vmul.f32 %v423, 1.442695
    %v486 = vpow.pop %v485
    %v487 = vmul.f32 %v424, 1.442695
    %v488 = vpow.pop %v487
    %v489 = vadd.f32 %v426, 1.0
    %v490 = vadd.f32 %v428, 1.0
    %v491 = vadd.f32 %v430, 1.0
    %v492 = vadd.f32 %v432, 1.0
    %v493 = vadd.f32 %v434, 1.0
    %v494 = vadd.f32 %v436, 1.0
    %v495 = vadd.f32 %v438, 1.0
    %v496 = vadd.f32 %v440, 1.0
    %v497 = vadd.f32 %v442, 1.0
    %v498 = vadd.f32 %v444, 1.0
    %v499 = vadd.f32 %v446, 1.0
    %v500 = vadd.f32 %v448, 1.0
    %v501 = vadd.f32 %v450, 1.0
    %v502 = vadd.f32 %v452, 1.0
    %v503 = vadd.f32 %v454, 1.0
    %v504 = vadd.f32 %v456, 1.0
    %v505 = vadd.f32 %v458, 1.0
    %v506 = vadd.f32 %v460, 1.0
    %v507 = vadd.f32 %v462, 1.0
    %v508 = vadd.f32 %v464, 1.0
    %v509 = vadd.f32 %v466, 1.0
    %v510 = vadd.f32 %v468, 1.0
    %v511 = vadd.f32 %v470, 1.0
    %v512 = vadd.f32 %v472, 1.0
    %v513 = vadd.f32 %v474, 1.0
    %v514 = vadd.f32 %v476, 1.0
    %v515 = vadd.f32 %v478, 1.0
    %v516 = vadd.f32 %v480, 1.0
    %v517 = vadd.f32 %v482, 1.0
    %v518 = vadd.f32 %v484, 1.0
    %v519 = vadd.f32 %v486, 1.0
    %v520 = vadd.f32 %v488, 1.0
    %v521 = vrcp.pop %v489
    %v522 = vmul.f32 1.0, %v521
    %v523 = vrcp.pop %v490
    %v524 = vmul.f32 1.0, %v523
    %v525 = vrcp.pop %v491
    %v526 = vmul.f32 1.0, %v525
    %v527 = vrcp.pop %v492
    %v528 = vmul.f32 1.0, %v527
    %v529 = vrcp.pop %v493
    %v530 = vmul.f32 1.0, %v529
    %v531 = vrcp.pop %v494
    %v532 = vmul.f32 1.0, %v531
    %v533 = vrcp.pop %v495
    %v534 = vmul.f32 1.0, %v533
    %v535 = vrcp.pop %v496
    %v536 = vmul.f32 1.0, %v535
    %v537 = vrcp.pop %v497
    %v538 = vmul.f32 1.0, %v537
    %v539 = vrcp.pop %v498
    %v540 = vmul.f32 1.0, %v539
    %v541 = vrcp.pop %v499
    %v542 = vmul.f32 1.0, %v541
    %v543 = vrcp.pop %v500
    %v544 = vmul.f32 1.0, %v543
    %v545 = vrcp.pop %v501
    %v546 = vmul.f32 1.0, %v545
    %v547 = vrcp.pop %v502
    %v548 = vmul.f32 1.0, %v547
    %v549 = vrcp.pop %v503
    %v550 = vmul.f32 1.0, %v549
    %v551 = vrcp.pop %v504
    %v552 = vmul.f32 1.0, %v551
    %v553 = vrcp.pop %v505
    %v554 = vmul.f32 1.0, %v553
    %v555 = vrcp.pop %v506
    %v556 = vmul.f32 1.0, %v555
    %v557 = vrcp.pop %v507
    %v558 = vmul.f32 1.0, %v557
    %v559 = vrcp.pop %v508
    %v560 = vmul.f32 1.0, %v559
    %v561 = vrcp.pop %v509
    %v562 = vmul.f32 1.0, %v561
    %v563 = vrcp.pop %v510
    %v564 = vmul.f32 1.0, %v563
    %v565 = vrcp.pop %v511
    %v566 = vmul.f32 1.0, %v565
    %v567 = vrcp.pop %v512
    %v568 = vmul.f32 1.0, %v567
    %v569 = vrcp.pop %v513
    %v570 = vmul.f32 1.0, %v569
    %v571 = vrcp.pop %v514
    %v572 = vmul.f32 1.0, %v571
    %v573 = vrcp.pop %v515
    %v574 = vmul.f32 1.0, %v573
    %v575 = vrcp.pop %v516
    %v576 = vmul.f32 1.0, %v575
    %v577 = vrcp.pop %v517
    %v578 = vmul.f32 1.0, %v577
    %v579 = vrcp.pop %v518
    %v580 = vmul.f32 1.0, %v579
    %v581 = vrcp.pop %v519
    %v582 = vmul.f32 1.0, %v581
    %v583 = vrcp.pop %v520
    %v584 = vmul.f32 1.0, %v583
    %v585 = vmul.f32 %v235, %v522
    %v586 = vmul.f32 %v240, %v524
    %v587 = vmul.f32 %v245, %v526
    %v588 = vmul.f32 %v250, %v528
    %v589 = vmul.f32 %v255, %v530
    %v590 = vmul.f32 %v260, %v532
    %v591 = vmul.f32 %v265, %v534
    %v592 = vmul.f32 %v270, %v536
    %v593 = vmul.f32 %v275, %v538
    %v594 = vmul.f32 %v280, %v540
    %v595 = vmul.f32 %v285, %v542
    %v596 = vmul.f32 %v290, %v544
    %v597 = vmul.f32 %v295, %v546
    %v598 = vmul.f32 %v300, %v548
    %v599 = vmul.f32 %v305, %v550
    %v600 = vmul.f32 %v310, %v552
    %v601 = vmul.f32 %v315, %v554
    %v602 = vmul.f32 %v320, %v556
    %v603 = vmul.f32 %v325, %v558
    %v604 = vmul.f32 %v330, %v560
    %v605 = vmul.f32 %v335, %v562
    %v606 = vmul.f32 %v340, %v564
    %v607 = vmul.f32 %v345, %v566
    %v608 = vmul.f32 %v350, %v568
    %v609 = vmul.f32 %v355, %v570
    %v610 = vmul.f32 %v360, %v572
    %v611 = vmul.f32 %v365, %v574
    %v612 = vmul.f32 %v370, %v576
    %v613 = vmul.f32 %v375, %v578
    %v614 = vmul.f32 %v380, %v580
    %v615 = vmul.f32 %v385, %v582
    %v616 = vmul.f32 %v390, %v584
    %v617 = vld [vmem:[%s3] sm:$0xff]
    %v618 = vld [vmem:[%s3 + $0x8] sm:$0xff]
    %v619 = vld [vmem:[%s3 + $0x10] sm:$0xff]
    %v620 = vld [vmem:[%s3 + $0x18] sm:$0xff]
    %v621 = vld [vmem:[%s3 + $0x20] sm:$0xff]
    %v622 = vld [vmem:[%s3 + $0x28] sm:$0xff]
    %v623 = vld [vmem:[%s3 + $0x30] sm:$0xff]
    %v624 = vld [vmem:[%s3 + $0x38] sm:$0xff]
    %v625 = vld [vmem:[%s4] sm:$0x1]
    %v627 = vlaneseq
    %v628 = vshrl.u32 %v627, 7
    %v629 = vsub.s32 0, %v628
    %v630 = vrot.slane %v625, %v629
    %vm632 = vcmask 523264
    %v634 = vsel %vm632, %v585, 0
    %v637 = vsel %vm632, %v586, 0
    %v640 = vsel %vm632, %v587, 0
    %v643 = vsel %vm632, %v588, 0
    %v646 = vsel %vm632, %v589, 0
    %v649 = vsel %vm632, %v590, 0
    %v652 = vsel %vm632, %v591, 0
    %v655 = vsel %vm632, %v592, 0
    %v658 = vsel %vm632, %v593, 0
    %v661 = vsel %vm632, %v594, 0
    %v664 = vsel %vm632, %v595, 0
    %v667 = vsel %vm632, %v596, 0
    %v670 = vsel %vm632, %v597, 0
    %v673 = vsel %vm632, %v598, 0
    %v676 = vsel %vm632, %v599, 0
    %v679 = vsel %vm632, %v600, 0
    %v682 = vsel %vm632, %v601, 0
    %v685 = vsel %vm632, %v602, 0
    %v688 = vsel %vm632, %v603, 0
    %v691 = vsel %vm632, %v604, 0
    %v694 = vsel %vm632, %v605, 0
    %v697 = vsel %vm632, %v606, 0
    %v700 = vsel %vm632, %v607, 0
    %v703 = vsel %vm632, %v608, 0
    %v706 = vsel %vm632, %v609, 0
    %v709 = vsel %vm632, %v610, 0
    %v712 = vsel %vm632, %v611, 0
    %v715 = vsel %vm632, %v612, 0
    %v718 = vsel %vm632, %v613, 0
    %v721 = vsel %vm632, %v614, 0
    %v724 = vsel %vm632, %v615, 0
    %v727 = vsel %vm632, %v616, 0
    %729 = vmatprep.subr.mxu0 0.0
    %730 = vmatpush1.msra.mxu0 %v617
    %731 = vmatprep.subr.mxu0 0.0
    %732 = vmatpush1.msra.mxu0 %v618
    %733 = vmatprep.subr.mxu0 0.0
    %734 = vmatpush1.msra.mxu0 %v619
    %735 = vmatprep.subr.mxu0 0.0
    %736 = vmatpush1.msra.mxu0 %v620
    %737 = vmatprep.subr.mxu0 0.0
    %738 = vmatpush1.msra.mxu0 %v621
    %739 = vmatprep.subr.mxu0 0.0
    %740 = vmatpush1.msra.mxu0 %v622
    %741 = vmatprep.subr.mxu0 0.0
    %742 = vmatpush1.msra.mxu0 %v623
    %743 = vmatprep.subr.mxu0 0.0
    %744 = vmatpush1.msra.mxu0 %v624
    %745 = vmatprep.subr.mxu0 0.0
    %746 = vmatpush1.msra.mxu0 0.0
    %747 = vmatprep.subr.mxu0 0.0
    %748 = vmatpush1.msra.mxu0 0.0
    %749 = vmatprep.subr.mxu0 0.0
    %750 = vmatpush1.msra.mxu0 0.0
    %751 = vmatprep.subr.mxu0 0.0
    %752 = vmatpush1.msra.mxu0 0.0
    %753 = vmatprep.subr.mxu0 0.0
    %754 = vmatpush1.msra.mxu0 0.0
    %755 = vmatprep.subr.mxu0 0.0
    %756 = vmatpush1.msra.mxu0 0.0
    %757 = vmatprep.subr.mxu0 0.0
    %758 = vmatpush1.msra.mxu0 0.0
    %759 = vmatprep.subr.mxu0 0.0
    %760 = vmatpush1.msra.mxu0 0.0
    %761 = vmatprep.subr.mxu0 0.0
    %762 = vmatpush1.msra.mxu0 0.0
    %763 = vmatprep.subr.mxu0 0.0
    %764 = vmatpush1.msra.mxu0 0.0
    %765 = vmatprep.subr.mxu0 0.0
    %766 = vmatpush1.msra.mxu0 0.0
    %767 = vmatprep.subr.mxu0 0.0
    %768 = vmatpush1.msra.mxu0 0.0
    %769 = vmatprep.subr.mxu0 0.0
    %770 = vmatpush1.msra.mxu0 0.0
    %771 = vmatprep.subr.mxu0 0.0
    %772 = vmatpush1.msra.mxu0 0.0
    %773 = vmatprep.subr.mxu0 0.0
    %774 = vmatpush1.msra.mxu0 0.0
    %775 = vmatprep.subr.mxu0 0.0
    %776 = vmatpush1.msra.mxu0 0.0
    %777 = vmatprep.subr.mxu0 0.0
    %778 = vmatpush1.msra.mxu0 0.0
    %779 = vmatprep.subr.mxu0 0.0
    %780 = vmatpush1.msra.mxu0 0.0
    %781 = vmatprep.subr.mxu0 0.0
    %782 = vmatpush1.msra.mxu0 0.0
    %783 = vmatprep.subr.mxu0 0.0
    %784 = vmatpush1.msra.mxu0 0.0
    %785 = vmatprep.subr.mxu0 0.0
    %786 = vmatpush1.msra.mxu0 0.0
    %787 = vmatprep.subr.mxu0 0.0
    %788 = vmatpush1.msra.mxu0 0.0
    %789 = vmatprep.subr.mxu0 0.0
    %790 = vmatpush1.msra.mxu0 0.0
    %791 = vmatprep.subr.mxu0 0.0
    %792 = vmatpush1.msra.mxu0 0.0
    %793 = vmatprep.mubr.f32.mxu0 0.0
    %794 = vmatmul.mubr.f32.gmra.mrb[0].mxu0 %v634
    %v795 = vpop.f32.mrb[0].mxu0
    %v796 = vadd.f32 %v630, %v795
    %v797 = vpop.f32.mrb[0].mxu0
    %798 = vmatprep.mubr.f32.mxu0 0.0
    %799 = vmatmul.mubr.f32.gmra.mrb[0].mxu0 %v637
    %v800 = vpop.f32.mrb[0].mxu0
    %v801 = vadd.f32 %v630, %v800
    %v802 = vpop.f32.mrb[0].mxu0
    %803 = vmatprep.mubr.f32.mxu0 0.0
    %804 = vmatmul.mubr.f32.gmra.mrb[0].mxu0 %v640
    %v805 = vpop.f32.mrb[0].mxu0
    %v806 = vadd.f32 %v630, %v805
    %v807 = vpop.f32.mrb[0].mxu0
    %808 = vmatprep.mubr.f32.mxu0 0.0
    %809 = vmatmul.mubr.f32.gmra.mrb[0].mxu0 %v643
    %v810 = vpop.f32.mrb[0].mxu0
    %v811 = vadd.f32 %v630, %v810
    %v812 = vpop.f32.mrb[0].mxu0
    %813 = vmatprep.mubr.f32.mxu0 0.0
    %814 = vmatmul.mubr.f32.gmra.mrb[0].mxu0 %v646
    %v815 = vpop.f32.mrb[0].mxu0
    %v816 = vadd.f32 %v630, %v815
    %v817 = vpop.f32.mrb[0].mxu0
    %818 = vmatprep.mubr.f32.mxu0 0.0
    %819 = vmatmul.mubr.f32.gmra.mrb[0].mxu0 %v649
    %v820 = vpop.f32.mrb[0].mxu0
    %v821 = vadd.f32 %v630, %v820
    %v822 = vpop.f32.mrb[0].mxu0
    %823 = vmatprep.mubr.f32.mxu0 0.0
    %824 = vmatmul.mubr.f32.gmra.mrb[0].mxu0 %v652
    %v825 = vpop.f32.mrb[0].mxu0
    %v826 = vadd.f32 %v630, %v825
    %v827 = vpop.f32.mrb[0].mxu0
    %828 = vmatprep.mubr.f32.mxu0 0.0
    %829 = vmatmul.mubr.f32.gmra.mrb[0].mxu0 %v655
    %v830 = vpop.f32.mrb[0].mxu0
    %v831 = vadd.f32 %v630, %v830
    %v832 = vpop.f32.mrb[0].mxu0
    %833 = vmatprep.mubr.f32.mxu0 0.0
    %834 = vmatmul.mubr.f32.gmra.mrb[0].mxu0 %v658
    %v835 = vpop.f32.mrb[0].mxu0
    %v836 = vadd.f32 %v630, %v835
    %v837 = vpop.f32.mrb[0].mxu0
    %838 = vmatprep.mubr.f32.mxu0 0.0
    %839 = vmatmul.mubr.f32.gmra.mrb[0].mxu0 %v661
    %v840 = vpop.f32.mrb[0].mxu0
    %v841 = vadd.f32 %v630, %v840
    %v842 = vpop.f32.mrb[0].mxu0
    %843 = vmatprep.mubr.f32.mxu0 0.0
    %844 = vmatmul.mubr.f32.gmra.mrb[0].mxu0 %v664
    %v845 = vpop.f32.mrb[0].mxu0
    %v846 = vadd.f32 %v630, %v845
    %v847 = vpop.f32.mrb[0].mxu0
    %848 = vmatprep.mubr.f32.mxu0 0.0
    %849 = vmatmul.mubr.f32.gmra.mrb[0].mxu0 %v667
    %v850 = vpop.f32.mrb[0].mxu0
    %v851 = vadd.f32 %v630, %v850
    %v852 = vpop.f32.mrb[0].mxu0
    %853 = vmatprep.mubr.f32.mxu0 0.0
    %854 = vmatmul.mubr.f32.gmra.mrb[0].mxu0 %v670
    %v855 = vpop.f32.mrb[0].mxu0
    %v856 = vadd.f32 %v630, %v855
    %v857 = vpop.f32.mrb[0].mxu0
    %858 = vmatprep.mubr.f32.mxu0 0.0
    %859 = vmatmul.mubr.f32.gmra.mrb[0].mxu0 %v673
    %v860 = vpop.f32.mrb[0].mxu0
    %v861 = vadd.f32 %v630, %v860
    %v862 = vpop.f32.mrb[0].mxu0
    %863 = vmatprep.mubr.f32.mxu0 0.0
    %864 = vmatmul.mubr.f32.gmra.mrb[0].mxu0 %v676
    %v865 = vpop.f32.mrb[0].mxu0
    %v866 = vadd.f32 %v630, %v865
    %v867 = vpop.f32.mrb[0].mxu0
    %868 = vmatprep.mubr.f32.mxu0 0.0
    %869 = vmatmul.mubr.f32.gmra.mrb[0].mxu0 %v679
    %v870 = vpop.f32.mrb[0].mxu0
    %v871 = vadd.f32 %v630, %v870
    %v872 = vpop.f32.mrb[0].mxu0
    %873 = vmatprep.mubr.f32.mxu0 0.0
    %874 = vmatmul.mubr.f32.gmra.mrb[0].mxu0 %v682
    %v875 = vpop.f32.mrb[0].mxu0
    %v876 = vadd.f32 %v630, %v875
    %v877 = vpop.f32.mrb[0].mxu0
    %878 = vmatprep.mubr.f32.mxu0 0.0
    %879 = vmatmul.mubr.f32.gmra.mrb[0].mxu0 %v685
    %v880 = vpop.f32.mrb[0].mxu0
    %v881 = vadd.f32 %v630, %v880
    %v882 = vpop.f32.mrb[0].mxu0
    %883 = vmatprep.mubr.f32.mxu0 0.0
    %884 = vmatmul.mubr.f32.gmra.mrb[0].mxu0 %v688
    %v885 = vpop.f32.mrb[0].mxu0
    %v886 = vadd.f32 %v630, %v885
    %v887 = vpop.f32.mrb[0].mxu0
    %888 = vmatprep.mubr.f32.mxu0 0.0
    %889 = vmatmul.mubr.f32.gmra.mrb[0].mxu0 %v691
    %v890 = vpop.f32.mrb[0].mxu0
    %v891 = vadd.f32 %v630, %v890
    %v892 = vpop.f32.mrb[0].mxu0
    %893 = vmatprep.mubr.f32.mxu0 0.0
    %894 = vmatmul.mubr.f32.gmra.mrb[0].mxu0 %v694
    %v895 = vpop.f32.mrb[0].mxu0
    %v896 = vadd.f32 %v630, %v895
    %v897 = vpop.f32.mrb[0].mxu0
    %898 = vmatprep.mubr.f32.mxu0 0.0
    %899 = vmatmul.mubr.f32.gmra.mrb[0].mxu0 %v697
    %v900 = vpop.f32.mrb[0].mxu0
    %v901 = vadd.f32 %v630, %v900
    %v902 = vpop.f32.mrb[0].mxu0
    %903 = vmatprep.mubr.f32.mxu0 0.0
    %904 = vmatmul.mubr.f32.gmra.mrb[0].mxu0 %v700
    %v905 = vpop.f32.mrb[0].mxu0
    %v906 = vadd.f32 %v630, %v905
    %v907 = vpop.f32.mrb[0].mxu0
    %908 = vmatprep.mubr.f32.mxu0 0.0
    %909 = vmatmul.mubr.f32.gmra.mrb[0].mxu0 %v703
    %v910 = vpop.f32.mrb[0].mxu0
    %v911 = vadd.f32 %v630, %v910
    %v912 = vpop.f32.mrb[0].mxu0
    %913 = vmatprep.mubr.f32.mxu0 0.0
    %914 = vmatmul.mubr.f32.gmra.mrb[0].mxu0 %v706
    %v915 = vpop.f32.mrb[0].mxu0
    %v916 = vadd.f32 %v630, %v915
    %v917 = vpop.f32.mrb[0].mxu0
    %918 = vmatprep.mubr.f32.mxu0 0.0
    %919 = vmatmul.mubr.f32.gmra.mrb[0].mxu0 %v709
    %v920 = vpop.f32.mrb[0].mxu0
    %v921 = vadd.f32 %v630, %v920
    %v922 = vpop.f32.mrb[0].mxu0
    %923 = vmatprep.mubr.f32.mxu0 0.0
    %924 = vmatmul.mubr.f32.gmra.mrb[0].mxu0 %v712
    %v925 = vpop.f32.mrb[0].mxu0
    %v926 = vadd.f32 %v630, %v925
    %v927 = vpop.f32.mrb[0].mxu0
    %928 = vmatprep.mubr.f32.mxu0 0.0
    %929 = vmatmul.mubr.f32.gmra.mrb[0].mxu0 %v715
    %v930 = vpop.f32.mrb[0].mxu0
    %v931 = vadd.f32 %v630, %v930
    %v932 = vpop.f32.mrb[0].mxu0
    %933 = vmatprep.mubr.f32.mxu0 0.0
    %934 = vmatmul.mubr.f32.gmra.mrb[0].mxu0 %v718
    %v935 = vpop.f32.mrb[0].mxu0
    %v936 = vadd.f32 %v630, %v935
    %v937 = vpop.f32.mrb[0].mxu0
    %938 = vmatprep.mubr.f32.mxu0 0.0
    %939 = vmatmul.mubr.f32.gmra.mrb[0].mxu0 %v721
    %v940 = vpop.f32.mrb[0].mxu0
    %v941 = vadd.f32 %v630, %v940
    %v942 = vpop.f32.mrb[0].mxu0
    %943 = vmatprep.mubr.f32.mxu0 0.0
    %944 = vmatmul.mubr.f32.gmra.mrb[0].mxu0 %v724
    %v945 = vpop.f32.mrb[0].mxu0
    %v946 = vadd.f32 %v630, %v945
    %v947 = vpop.f32.mrb[0].mxu0
    %948 = vmatprep.mubr.f32.mxu0 0.0
    %949 = vmatmul.mubr.f32.gmra.mrb[0].mxu0 %v727
    %v950 = vpop.f32.mrb[0].mxu0
    %v951 = vadd.f32 %v630, %v950
    %v952 = vpop.f32.mrb[0].mxu0
    %953 = vdwg.mxu0
    %v954 = vxor.u32 %v796, 2147483648
    %v955 = vxor.u32 %v801, 2147483648
    %v956 = vxor.u32 %v806, 2147483648
    %v957 = vxor.u32 %v811, 2147483648
    %v958 = vxor.u32 %v816, 2147483648
    %v959 = vxor.u32 %v821, 2147483648
    %v960 = vxor.u32 %v826, 2147483648
    %v961 = vxor.u32 %v831, 2147483648
    %v962 = vxor.u32 %v836, 2147483648
    %v963 = vxor.u32 %v841, 2147483648
    %v964 = vxor.u32 %v846, 2147483648
    %v965 = vxor.u32 %v851, 2147483648
    %v966 = vxor.u32 %v856, 2147483648
    %v967 = vxor.u32 %v861, 2147483648
    %v968 = vxor.u32 %v866, 2147483648
    %v969 = vxor.u32 %v871, 2147483648
    %v970 = vxor.u32 %v876, 2147483648
    %v971 = vxor.u32 %v881, 2147483648
    %v972 = vxor.u32 %v886, 2147483648
    %v973 = vxor.u32 %v891, 2147483648
    %v974 = vxor.u32 %v896, 2147483648
    %v975 = vxor.u32 %v901, 2147483648
    %v976 = vxor.u32 %v906, 2147483648
    %v977 = vxor.u32 %v911, 2147483648
    %v978 = vxor.u32 %v916, 2147483648
    %v979 = vxor.u32 %v921, 2147483648
    %v980 = vxor.u32 %v926, 2147483648
    %v981 = vxor.u32 %v931, 2147483648
    %v982 = vxor.u32 %v936, 2147483648
    %v983 = vxor.u32 %v941, 2147483648
    %v984 = vxor.u32 %v946, 2147483648
    %v985 = vxor.u32 %v951, 2147483648
    %v986 = vmul.f32 %v954, 1.442695
    %v987 = vpow.pop %v986
    %v988 = vmul.f32 %v955, 1.442695
    %v989 = vpow.pop %v988
    %v990 = vmul.f32 %v956, 1.442695
    %v991 = vpow.pop %v990
    %v992 = vmul.f32 %v957, 1.442695
    %v993 = vpow.pop %v992
    %v994 = vmul.f32 %v958, 1.442695
    %v995 = vpow.pop %v994
    %v996 = vmul.f32 %v959, 1.442695
    %v997 = vpow.pop %v996
    %v998 = vmul.f32 %v960, 1.442695
    %v999 = vpow.pop %v998
    %v1000 = vmul.f32 %v961, 1.442695
    %v1001 = vpow.pop %v1000
    %v1002 = vmul.f32 %v962, 1.442695
    %v1003 = vpow.pop %v1002
    %v1004 = vmul.f32 %v963, 1.442695
    %v1005 = vpow.pop %v1004
    %v1006 = vmul.f32 %v964, 1.442695
    %v1007 = vpow.pop %v1006
    %v1008 = vmul.f32 %v965, 1.442695
    %v1009 = vpow.pop %v1008
    %v1010 = vmul.f32 %v966, 1.442695
    %v1011 = vpow.pop %v1010
    %v1012 = vmul.f32 %v967, 1.442695
    %v1013 = vpow.pop %v1012
    %v1014 = vmul.f32 %v968, 1.442695
    %v1015 = vpow.pop %v1014
    %v1016 = vmul.f32 %v969, 1.442695
    %v1017 = vpow.pop %v1016
    %v1018 = vmul.f32 %v970, 1.442695
    %v1019 = vpow.pop %v1018
    %v1020 = vmul.f32 %v971, 1.442695
    %v1021 = vpow.pop %v1020
    %v1022 = vmul.f32 %v972, 1.442695
    %v1023 = vpow.pop %v1022
    %v1024 = vmul.f32 %v973, 1.442695
    %v1025 = vpow.pop %v1024
    %v1026 = vmul.f32 %v974, 1.442695
    %v1027 = vpow.pop %v1026
    %v1028 = vmul.f32 %v975, 1.442695
    %v1029 = vpow.pop %v1028
    %v1030 = vmul.f32 %v976, 1.442695
    %v1031 = vpow.pop %v1030
    %v1032 = vmul.f32 %v977, 1.442695
    %v1033 = vpow.pop %v1032
    %v1034 = vmul.f32 %v978, 1.442695
    %v1035 = vpow.pop %v1034
    %v1036 = vmul.f32 %v979, 1.442695
    %v1037 = vpow.pop %v1036
    %v1038 = vmul.f32 %v980, 1.442695
    %v1039 = vpow.pop %v1038
    %v1040 = vmul.f32 %v981, 1.442695
    %v1041 = vpow.pop %v1040
    %v1042 = vmul.f32 %v982, 1.442695
    %v1043 = vpow.pop %v1042
    %v1044 = vmul.f32 %v983, 1.442695
    %v1045 = vpow.pop %v1044
    %v1046 = vmul.f32 %v984, 1.442695
    %v1047 = vpow.pop %v1046
    %v1048 = vmul.f32 %v985, 1.442695
    %v1049 = vpow.pop %v1048
    %v1050 = vadd.f32 %v987, 1.0
    %v1051 = vadd.f32 %v989, 1.0
    %v1052 = vadd.f32 %v991, 1.0
    %v1053 = vadd.f32 %v993, 1.0
    %v1054 = vadd.f32 %v995, 1.0
    %v1055 = vadd.f32 %v997, 1.0
    %v1056 = vadd.f32 %v999, 1.0
    %v1057 = vadd.f32 %v1001, 1.0
    %v1058 = vadd.f32 %v1003, 1.0
    %v1059 = vadd.f32 %v1005, 1.0
    %v1060 = vadd.f32 %v1007, 1.0
    %v1061 = vadd.f32 %v1009, 1.0
    %v1062 = vadd.f32 %v1011, 1.0
    %v1063 = vadd.f32 %v1013, 1.0
    %v1064 = vadd.f32 %v1015, 1.0
    %v1065 = vadd.f32 %v1017, 1.0
    %v1066 = vadd.f32 %v1019, 1.0
    %v1067 = vadd.f32 %v1021, 1.0
    %v1068 = vadd.f32 %v1023, 1.0
    %v1069 = vadd.f32 %v1025, 1.0
    %v1070 = vadd.f32 %v1027, 1.0
    %v1071 = vadd.f32 %v1029, 1.0
    %v1072 = vadd.f32 %v1031, 1.0
    %v1073 = vadd.f32 %v1033, 1.0
    %v1074 = vadd.f32 %v1035, 1.0
    %v1075 = vadd.f32 %v1037, 1.0
    %v1076 = vadd.f32 %v1039, 1.0
    %v1077 = vadd.f32 %v1041, 1.0
    %v1078 = vadd.f32 %v1043, 1.0
    %v1079 = vadd.f32 %v1045, 1.0
    %v1080 = vadd.f32 %v1047, 1.0
    %v1081 = vadd.f32 %v1049, 1.0
    %v1082 = vrcp.pop %v1050
    %v1083 = vmul.f32 1.0, %v1082
    %v1084 = vrcp.pop %v1051
    %v1085 = vmul.f32 1.0, %v1084
    %v1086 = vrcp.pop %v1052
    %v1087 = vmul.f32 1.0, %v1086
    %v1088 = vrcp.pop %v1053
    %v1089 = vmul.f32 1.0, %v1088
    %v1090 = vrcp.pop %v1054
    %v1091 = vmul.f32 1.0, %v1090
    %v1092 = vrcp.pop %v1055
    %v1093 = vmul.f32 1.0, %v1092
    %v1094 = vrcp.pop %v1056
    %v1095 = vmul.f32 1.0, %v1094
    %v1096 = vrcp.pop %v1057
    %v1097 = vmul.f32 1.0, %v1096
    %v1098 = vrcp.pop %v1058
    %v1099 = vmul.f32 1.0, %v1098
    %v1100 = vrcp.pop %v1059
    %v1101 = vmul.f32 1.0, %v1100
    %v1102 = vrcp.pop %v1060
    %v1103 = vmul.f32 1.0, %v1102
    %v1104 = vrcp.pop %v1061
    %v1105 = vmul.f32 1.0, %v1104
    %v1106 = vrcp.pop %v1062
    %v1107 = vmul.f32 1.0, %v1106
    %v1108 = vrcp.pop %v1063
    %v1109 = vmul.f32 1.0, %v1108
    %v1110 = vrcp.pop %v1064
    %v1111 = vmul.f32 1.0, %v1110
    %v1112 = vrcp.pop %v1065
    %v1113 = vmul.f32 1.0, %v1112
    %v1114 = vrcp.pop %v1066
    %v1115 = vmul.f32 1.0, %v1114
    %v1116 = vrcp.pop %v1067
    %v1117 = vmul.f32 1.0, %v1116
    %v1118 = vrcp.pop %v1068
    %v1119 = vmul.f32 1.0, %v1118
    %v1120 = vrcp.pop %v1069
    %v1121 = vmul.f32 1.0, %v1120
    %v1122 = vrcp.pop %v1070
    %v1123 = vmul.f32 1.0, %v1122
    %v1124 = vrcp.pop %v1071
    %v1125 = vmul.f32 1.0, %v1124
    %v1126 = vrcp.pop %v1072
    %v1127 = vmul.f32 1.0, %v1126
    %v1128 = vrcp.pop %v1073
    %v1129 = vmul.f32 1.0, %v1128
    %v1130 = vrcp.pop %v1074
    %v1131 = vmul.f32 1.0, %v1130
    %v1132 = vrcp.pop %v1075
    %v1133 = vmul.f32 1.0, %v1132
    %v1134 = vrcp.pop %v1076
    %v1135 = vmul.f32 1.0, %v1134
    %v1136 = vrcp.pop %v1077
    %v1137 = vmul.f32 1.0, %v1136
    %v1138 = vrcp.pop %v1078
    %v1139 = vmul.f32 1.0, %v1138
    %v1140 = vrcp.pop %v1079
    %v1141 = vmul.f32 1.0, %v1140
    %v1142 = vrcp.pop %v1080
    %v1143 = vmul.f32 1.0, %v1142
    %v1144 = vrcp.pop %v1081
    %v1145 = vmul.f32 1.0, %v1144
    %v1146 = vmul.f32 %v796, %v1083
    %v1147 = vmul.f32 %v801, %v1085
    %v1148 = vmul.f32 %v806, %v1087
    %v1149 = vmul.f32 %v811, %v1089
    %v1150 = vmul.f32 %v816, %v1091
    %v1151 = vmul.f32 %v821, %v1093
    %v1152 = vmul.f32 %v826, %v1095
    %v1153 = vmul.f32 %v831, %v1097
    %v1154 = vmul.f32 %v836, %v1099
    %v1155 = vmul.f32 %v841, %v1101
    %v1156 = vmul.f32 %v846, %v1103
    %v1157 = vmul.f32 %v851, %v1105
    %v1158 = vmul.f32 %v856, %v1107
    %v1159 = vmul.f32 %v861, %v1109
    %v1160 = vmul.f32 %v866, %v1111
    %v1161 = vmul.f32 %v871, %v1113
    %v1162 = vmul.f32 %v876, %v1115
    %v1163 = vmul.f32 %v881, %v1117
    %v1164 = vmul.f32 %v886, %v1119
    %v1165 = vmul.f32 %v891, %v1121
    %v1166 = vmul.f32 %v896, %v1123
    %v1167 = vmul.f32 %v901, %v1125
    %v1168 = vmul.f32 %v906, %v1127
    %v1169 = vmul.f32 %v911, %v1129
    %v1170 = vmul.f32 %v916, %v1131
    %v1171 = vmul.f32 %v921, %v1133
    %v1172 = vmul.f32 %v926, %v1135
    %v1173 = vmul.f32 %v931, %v1137
    %v1174 = vmul.f32 %v936, %v1139
    %v1175 = vmul.f32 %v941, %v1141
    %v1176 = vmul.f32 %v946, %v1143
    %v1177 = vmul.f32 %v951, %v1145
    %v1178 = vld [vmem:[%s5] sm:$0x1]
    %v1180 = vlaneseq
    %v1181 = vshrl.u32 %v1180, 7
    %v1182 = vsub.s32 0, %v1181
    %v1183 = vrot.slane %v1178, %v1182
    %v1185 = vmul.f32 %v1146, %v1183
    %v1186 = vmul.f32 %v1147, %v1183
    %v1187 = vmul.f32 %v1148, %v1183
    %v1188 = vmul.f32 %v1149, %v1183
    %v1189 = vmul.f32 %v1150, %v1183
    %v1190 = vmul.f32 %v1151, %v1183
    %v1191 = vmul.f32 %v1152, %v1183
    %v1192 = vmul.f32 %v1153, %v1183
    %v1193 = vmul.f32 %v1154, %v1183
    %v1194 = vmul.f32 %v1155, %v1183
    %v1195 = vmul.f32 %v1156, %v1183
    %v1196 = vmul.f32 %v1157, %v1183
    %v1197 = vmul.f32 %v1158, %v1183
    %v1198 = vmul.f32 %v1159, %v1183
    %v1199 = vmul.f32 %v1160, %v1183
    %v1200 = vmul.f32 %v1161, %v1183
    %v1201 = vmul.f32 %v1162, %v1183
    %v1202 = vmul.f32 %v1163, %v1183
    %v1203 = vmul.f32 %v1164, %v1183
    %v1204 = vmul.f32 %v1165, %v1183
    %v1205 = vmul.f32 %v1166, %v1183
    %v1206 = vmul.f32 %v1167, %v1183
    %v1207 = vmul.f32 %v1168, %v1183
    %v1208 = vmul.f32 %v1169, %v1183
    %v1209 = vmul.f32 %v1170, %v1183
    %v1210 = vmul.f32 %v1171, %v1183
    %v1211 = vmul.f32 %v1172, %v1183
    %v1212 = vmul.f32 %v1173, %v1183
    %v1213 = vmul.f32 %v1174, %v1183
    %v1214 = vmul.f32 %v1175, %v1183
    %v1215 = vmul.f32 %v1176, %v1183
    %v1216 = vmul.f32 %v1177, %v1183
    %v1217 = vsel %vm71, %v1185, 0.0
    %1218 = vadd.xlane.f32.xlu0 %v1217
    %v1219 = vpop.xlane.xlu0 %1218
    %v1220 = vsel %vm71, %v1186, 0.0
    %1221 = vadd.xlane.f32.xlu0 %v1220
    %v1222 = vpop.xlane.xlu0 %1221
    %v1223 = vsel %vm71, %v1187, 0.0
    %1224 = vadd.xlane.f32.xlu0 %v1223
    %v1225 = vpop.xlane.xlu0 %1224
    %v1226 = vsel %vm71, %v1188, 0.0
    %1227 = vadd.xlane.f32.xlu0 %v1226
    %v1228 = vpop.xlane.xlu0 %1227
    %v1229 = vsel %vm71, %v1189, 0.0
    %1230 = vadd.xlane.f32.xlu0 %v1229
    %v1231 = vpop.xlane.xlu0 %1230
    %v1232 = vsel %vm71, %v1190, 0.0
    %1233 = vadd.xlane.f32.xlu0 %v1232
    %v1234 = vpop.xlane.xlu0 %1233
    %v1235 = vsel %vm71, %v1191, 0.0
    %1236 = vadd.xlane.f32.xlu0 %v1235
    %v1237 = vpop.xlane.xlu0 %1236
    %v1238 = vsel %vm71, %v1192, 0.0
    %1239 = vadd.xlane.f32.xlu0 %v1238
    %v1240 = vpop.xlane.xlu0 %1239
    %v1241 = vsel %vm71, %v1193, 0.0
    %1242 = vadd.xlane.f32.xlu0 %v1241
    %v1243 = vpop.xlane.xlu0 %1242
    %v1244 = vsel %vm71, %v1194, 0.0
    %1245 = vadd.xlane.f32.xlu0 %v1244
    %v1246 = vpop.xlane.xlu0 %1245
    %v1247 = vsel %vm71, %v1195, 0.0
    %1248 = vadd.xlane.f32.xlu0 %v1247
    %v1249 = vpop.xlane.xlu0 %1248
    %v1250 = vsel %vm71, %v1196, 0.0
    %1251 = vadd.xlane.f32.xlu0 %v1250
    %v1252 = vpop.xlane.xlu0 %1251
    %v1253 = vsel %vm71, %v1197, 0.0
    %1254 = vadd.xlane.f32.xlu0 %v1253
    %v1255 = vpop.xlane.xlu0 %1254
    %v1256 = vsel %vm71, %v1198, 0.0
    %1257 = vadd.xlane.f32.xlu0 %v1256
    %v1258 = vpop.xlane.xlu0 %1257
    %v1259 = vsel %vm71, %v1199, 0.0
    %1260 = vadd.xlane.f32.xlu0 %v1259
    %v1261 = vpop.xlane.xlu0 %1260
    %v1262 = vsel %vm71, %v1200, 0.0
    %1263 = vadd.xlane.f32.xlu0 %v1262
    %v1264 = vpop.xlane.xlu0 %1263
    %v1265 = vsel %vm71, %v1201, 0.0
    %1266 = vadd.xlane.f32.xlu0 %v1265
    %v1267 = vpop.xlane.xlu0 %1266
    %v1268 = vsel %vm71, %v1202, 0.0
    %1269 = vadd.xlane.f32.xlu0 %v1268
    %v1270 = vpop.xlane.xlu0 %1269
    %v1271 = vsel %vm71, %v1203, 0.0
    %1272 = vadd.xlane.f32.xlu0 %v1271
    %v1273 = vpop.xlane.xlu0 %1272
    %v1274 = vsel %vm71, %v1204, 0.0
    %1275 = vadd.xlane.f32.xlu0 %v1274
    %v1276 = vpop.xlane.xlu0 %1275
    %v1277 = vsel %vm71, %v1205, 0.0
    %1278 = vadd.xlane.f32.xlu0 %v1277
    %v1279 = vpop.xlane.xlu0 %1278
    %v1280 = vsel %vm71, %v1206, 0.0
    %1281 = vadd.xlane.f32.xlu0 %v1280
    %v1282 = vpop.xlane.xlu0 %1281
    %v1283 = vsel %vm71, %v1207, 0.0
    %1284 = vadd.xlane.f32.xlu0 %v1283
    %v1285 = vpop.xlane.xlu0 %1284
    %v1286 = vsel %vm71, %v1208, 0.0
    %1287 = vadd.xlane.f32.xlu0 %v1286
    %v1288 = vpop.xlane.xlu0 %1287
    %v1289 = vsel %vm71, %v1209, 0.0
    %1290 = vadd.xlane.f32.xlu0 %v1289
    %v1291 = vpop.xlane.xlu0 %1290
    %v1292 = vsel %vm71, %v1210, 0.0
    %1293 = vadd.xlane.f32.xlu0 %v1292
    %v1294 = vpop.xlane.xlu0 %1293
    %v1295 = vsel %vm71, %v1211, 0.0
    %1296 = vadd.xlane.f32.xlu0 %v1295
    %v1297 = vpop.xlane.xlu0 %1296
    %v1298 = vsel %vm71, %v1212, 0.0
    %1299 = vadd.xlane.f32.xlu0 %v1298
    %v1300 = vpop.xlane.xlu0 %1299
    %v1301 = vsel %vm71, %v1213, 0.0
    %1302 = vadd.xlane.f32.xlu0 %v1301
    %v1303 = vpop.xlane.xlu0 %1302
    %v1304 = vsel %vm71, %v1214, 0.0
    %1305 = vadd.xlane.f32.xlu0 %v1304
    %v1306 = vpop.xlane.xlu0 %1305
    %v1307 = vsel %vm71, %v1215, 0.0
    %1308 = vadd.xlane.f32.xlu0 %v1307
    %v1309 = vpop.xlane.xlu0 %1308
    %v1310 = vsel %vm71, %v1216, 0.0
    %1311 = vadd.xlane.f32.xlu0 %v1310
    %v1312 = vpop.xlane.xlu0 %1311
    %s1313 = sld [smem:[#allocation2]]
    %v1314 = vstv %s1313
    %v1315 = vadd.f32 %v1219, %v1314
    %v1316 = vadd.f32 %v1222, %v1314
    %v1317 = vadd.f32 %v1225, %v1314
    %v1318 = vadd.f32 %v1228, %v1314
    %v1319 = vadd.f32 %v1231, %v1314
    %v1320 = vadd.f32 %v1234, %v1314
    %v1321 = vadd.f32 %v1237, %v1314
    %v1322 = vadd.f32 %v1240, %v1314
    %v1323 = vadd.f32 %v1243, %v1314
    %v1324 = vadd.f32 %v1246, %v1314
    %v1325 = vadd.f32 %v1249, %v1314
    %v1326 = vadd.f32 %v1252, %v1314
    %v1327 = vadd.f32 %v1255, %v1314
    %v1328 = vadd.f32 %v1258, %v1314
    %v1329 = vadd.f32 %v1261, %v1314
    %v1330 = vadd.f32 %v1264, %v1314
    %v1331 = vadd.f32 %v1267, %v1314
    %v1332 = vadd.f32 %v1270, %v1314
    %v1333 = vadd.f32 %v1273, %v1314
    %v1334 = vadd.f32 %v1276, %v1314
    %v1335 = vadd.f32 %v1279, %v1314
    %v1336 = vadd.f32 %v1282, %v1314
    %v1337 = vadd.f32 %v1285, %v1314
    %v1338 = vadd.f32 %v1288, %v1314
    %v1339 = vadd.f32 %v1291, %v1314
    %v1340 = vadd.f32 %v1294, %v1314
    %v1341 = vadd.f32 %v1297, %v1314
    %v1342 = vadd.f32 %v1300, %v1314
    %v1343 = vadd.f32 %v1303, %v1314
    %v1344 = vadd.f32 %v1306, %v1314
    %v1345 = vadd.f32 %v1309, %v1314
    %v1346 = vadd.f32 %v1312, %v1314
    %v1379 = vlaneseq
    %v1380 = vshrl.u32 %v1379, 7
    %v1381 = vsub.s32 0, %v1380
    %v1382 = vrot.slane %v1315, %v1381
    %v1383 = vlaneseq
    %v1384 = vshrl.u32 %v1383, 7
    %v1385 = vsub.s32 1, %v1384
    %v1386 = vrot.slane %v1315, %v1385
    %v1387 = vlaneseq
    %v1388 = vshrl.u32 %v1387, 7
    %v1389 = vsub.s32 2, %v1388
    %v1390 = vrot.slane %v1315, %v1389
    %v1391 = vlaneseq
    %v1392 = vshrl.u32 %v1391, 7
    %v1393 = vsub.s32 3, %v1392
    %v1394 = vrot.slane %v1315, %v1393
    %v1395 = vlaneseq
    %v1396 = vshrl.u32 %v1395, 7
    %v1397 = vsub.s32 4, %v1396
    %v1398 = vrot.slane %v1315, %v1397
    %v1399 = vlaneseq
    %v1400 = vshrl.u32 %v1399, 7
    %v1401 = vsub.s32 5, %v1400
    %v1402 = vrot.slane %v1315, %v1401
    %v1403 = vlaneseq
    %v1404 = vshrl.u32 %v1403, 7
    %v1405 = vsub.s32 6, %v1404
    %v1406 = vrot.slane %v1315, %v1405
    %v1407 = vlaneseq
    %v1408 = vshrl.u32 %v1407, 7
    %v1409 = vsub.s32 7, %v1408
    %v1410 = vrot.slane %v1315, %v1409
    %v1411 = vlaneseq
    %v1412 = vshrl.u32 %v1411, 7
    %v1413 = vsub.s32 0, %v1412
    %v1414 = vrot.slane %v1316, %v1413
    %v1415 = vlaneseq
    %v1416 = vshrl.u32 %v1415, 7
    %v1417 = vsub.s32 1, %v1416
    %v1418 = vrot.slane %v1316, %v1417
    %v1419 = vlaneseq
    %v1420 = vshrl.u32 %v1419, 7
    %v1421 = vsub.s32 2, %v1420
    %v1422 = vrot.slane %v1316, %v1421
    %v1423 = vlaneseq
    %v1424 = vshrl.u32 %v1423, 7
    %v1425 = vsub.s32 3, %v1424
    %v1426 = vrot.slane %v1316, %v1425
    %v1427 = vlaneseq
    %v1428 = vshrl.u32 %v1427, 7
    %v1429 = vsub.s32 4, %v1428
    %v1430 = vrot.slane %v1316, %v1429
    %v1431 = vlaneseq
    %v1432 = vshrl.u32 %v1431, 7
    %v1433 = vsub.s32 5, %v1432
    %v1434 = vrot.slane %v1316, %v1433
    %v1435 = vlaneseq
    %v1436 = vshrl.u32 %v1435, 7
    %v1437 = vsub.s32 6, %v1436
    %v1438 = vrot.slane %v1316, %v1437
    %v1439 = vlaneseq
    %v1440 = vshrl.u32 %v1439, 7
    %v1441 = vsub.s32 7, %v1440
    %v1442 = vrot.slane %v1316, %v1441
    %v1443 = vlaneseq
    %v1444 = vshrl.u32 %v1443, 7
    %v1445 = vsub.s32 0, %v1444
    %v1446 = vrot.slane %v1317, %v1445
    %v1447 = vlaneseq
    %v1448 = vshrl.u32 %v1447, 7
    %v1449 = vsub.s32 1, %v1448
    %v1450 = vrot.slane %v1317, %v1449
    %v1451 = vlaneseq
    %v1452 = vshrl.u32 %v1451, 7
    %v1453 = vsub.s32 2, %v1452
    %v1454 = vrot.slane %v1317, %v1453
    %v1455 = vlaneseq
    %v1456 = vshrl.u32 %v1455, 7
    %v1457 = vsub.s32 3, %v1456
    %v1458 = vrot.slane %v1317, %v1457
    %v1459 = vlaneseq
    %v1460 = vshrl.u32 %v1459, 7
    %v1461 = vsub.s32 4, %v1460
    %v1462 = vrot.slane %v1317, %v1461
    %v1463 = vlaneseq
    %v1464 = vshrl.u32 %v1463, 7
    %v1465 = vsub.s32 5, %v1464
    %v1466 = vrot.slane %v1317, %v1465
    %v1467 = vlaneseq
    %v1468 = vshrl.u32 %v1467, 7
    %v1469 = vsub.s32 6, %v1468
    %v1470 = vrot.slane %v1317, %v1469
    %v1471 = vlaneseq
    %v1472 = vshrl.u32 %v1471, 7
    %v1473 = vsub.s32 7, %v1472
    %v1474 = vrot.slane %v1317, %v1473
    %v1475 = vlaneseq
    %v1476 = vshrl.u32 %v1475, 7
    %v1477 = vsub.s32 0, %v1476
    %v1478 = vrot.slane %v1318, %v1477
    %v1479 = vlaneseq
    %v1480 = vshrl.u32 %v1479, 7
    %v1481 = vsub.s32 1, %v1480
    %v1482 = vrot.slane %v1318, %v1481
    %v1483 = vlaneseq
    %v1484 = vshrl.u32 %v1483, 7
    %v1485 = vsub.s32 2, %v1484
    %v1486 = vrot.slane %v1318, %v1485
    %v1487 = vlaneseq
    %v1488 = vshrl.u32 %v1487, 7
    %v1489 = vsub.s32 3, %v1488
    %v1490 = vrot.slane %v1318, %v1489
    %v1491 = vlaneseq
    %v1492 = vshrl.u32 %v1491, 7
    %v1493 = vsub.s32 4, %v1492
    %v1494 = vrot.slane %v1318, %v1493
    %v1495 = vlaneseq
    %v1496 = vshrl.u32 %v1495, 7
    %v1497 = vsub.s32 5, %v1496
    %v1498 = vrot.slane %v1318, %v1497
    %v1499 = vlaneseq
    %v1500 = vshrl.u32 %v1499, 7
    %v1501 = vsub.s32 6, %v1500
    %v1502 = vrot.slane %v1318, %v1501
    %v1503 = vlaneseq
    %v1504 = vshrl.u32 %v1503, 7
    %v1505 = vsub.s32 7, %v1504
    %v1506 = vrot.slane %v1318, %v1505
    %v1507 = vlaneseq
    %v1508 = vshrl.u32 %v1507, 7
    %v1509 = vsub.s32 0, %v1508
    %v1510 = vrot.slane %v1319, %v1509
    %v1511 = vlaneseq
    %v1512 = vshrl.u32 %v1511, 7
    %v1513 = vsub.s32 1, %v1512
    %v1514 = vrot.slane %v1319, %v1513
    %v1515 = vlaneseq
    %v1516 = vshrl.u32 %v1515, 7
    %v1517 = vsub.s32 2, %v1516
    %v1518 = vrot.slane %v1319, %v1517
    %v1519 = vlaneseq
    %v1520 = vshrl.u32 %v1519, 7
    %v1521 = vsub.s32 3, %v1520
    %v1522 = vrot.slane %v1319, %v1521
    %v1523 = vlaneseq
    %v1524 = vshrl.u32 %v1523, 7
    %v1525 = vsub.s32 4, %v1524
    %v1526 = vrot.slane %v1319, %v1525
    %v1527 = vlaneseq
    %v1528 = vshrl.u32 %v1527, 7
    %v1529 = vsub.s32 5, %v1528
    %v1530 = vrot.slane %v1319, %v1529
    %v1531 = vlaneseq
    %v1532 = vshrl.u32 %v1531, 7
    %v1533 = vsub.s32 6, %v1532
    %v1534 = vrot.slane %v1319, %v1533
    %v1535 = vlaneseq
    %v1536 = vshrl.u32 %v1535, 7
    %v1537 = vsub.s32 7, %v1536
    %v1538 = vrot.slane %v1319, %v1537
    %v1539 = vlaneseq
    %v1540 = vshrl.u32 %v1539, 7
    %v1541 = vsub.s32 0, %v1540
    %v1542 = vrot.slane %v1320, %v1541
    %v1543 = vlaneseq
    %v1544 = vshrl.u32 %v1543, 7
    %v1545 = vsub.s32 1, %v1544
    %v1546 = vrot.slane %v1320, %v1545
    %v1547 = vlaneseq
    %v1548 = vshrl.u32 %v1547, 7
    %v1549 = vsub.s32 2, %v1548
    %v1550 = vrot.slane %v1320, %v1549
    %v1551 = vlaneseq
    %v1552 = vshrl.u32 %v1551, 7
    %v1553 = vsub.s32 3, %v1552
    %v1554 = vrot.slane %v1320, %v1553
    %v1555 = vlaneseq
    %v1556 = vshrl.u32 %v1555, 7
    %v1557 = vsub.s32 4, %v1556
    %v1558 = vrot.slane %v1320, %v1557
    %v1559 = vlaneseq
    %v1560 = vshrl.u32 %v1559, 7
    %v1561 = vsub.s32 5, %v1560
    %v1562 = vrot.slane %v1320, %v1561
    %v1563 = vlaneseq
    %v1564 = vshrl.u32 %v1563, 7
    %v1565 = vsub.s32 6, %v1564
    %v1566 = vrot.slane %v1320, %v1565
    %v1567 = vlaneseq
    %v1568 = vshrl.u32 %v1567, 7
    %v1569 = vsub.s32 7, %v1568
    %v1570 = vrot.slane %v1320, %v1569
    %v1571 = vlaneseq
    %v1572 = vshrl.u32 %v1571, 7
    %v1573 = vsub.s32 0, %v1572
    %v1574 = vrot.slane %v1321, %v1573
    %v1575 = vlaneseq
    %v1576 = vshrl.u32 %v1575, 7
    %v1577 = vsub.s32 1, %v1576
    %v1578 = vrot.slane %v1321, %v1577
    %v1579 = vlaneseq
    %v1580 = vshrl.u32 %v1579, 7
    %v1581 = vsub.s32 2, %v1580
    %v1582 = vrot.slane %v1321, %v1581
    %v1583 = vlaneseq
    %v1584 = vshrl.u32 %v1583, 7
    %v1585 = vsub.s32 3, %v1584
    %v1586 = vrot.slane %v1321, %v1585
    %v1587 = vlaneseq
    %v1588 = vshrl.u32 %v1587, 7
    %v1589 = vsub.s32 4, %v1588
    %v1590 = vrot.slane %v1321, %v1589
    %v1591 = vlaneseq
    %v1592 = vshrl.u32 %v1591, 7
    %v1593 = vsub.s32 5, %v1592
    %v1594 = vrot.slane %v1321, %v1593
    %v1595 = vlaneseq
    %v1596 = vshrl.u32 %v1595, 7
    %v1597 = vsub.s32 6, %v1596
    %v1598 = vrot.slane %v1321, %v1597
    %v1599 = vlaneseq
    %v1600 = vshrl.u32 %v1599, 7
    %v1601 = vsub.s32 7, %v1600
    %v1602 = vrot.slane %v1321, %v1601
    %v1603 = vlaneseq
    %v1604 = vshrl.u32 %v1603, 7
    %v1605 = vsub.s32 0, %v1604
    %v1606 = vrot.slane %v1322, %v1605
    %v1607 = vlaneseq
    %v1608 = vshrl.u32 %v1607, 7
    %v1609 = vsub.s32 1, %v1608
    %v1610 = vrot.slane %v1322, %v1609
    %v1611 = vlaneseq
    %v1612 = vshrl.u32 %v1611, 7
    %v1613 = vsub.s32 2, %v1612
    %v1614 = vrot.slane %v1322, %v1613
    %v1615 = vlaneseq
    %v1616 = vshrl.u32 %v1615, 7
    %v1617 = vsub.s32 3, %v1616
    %v1618 = vrot.slane %v1322, %v1617
    %v1619 = vlaneseq
    %v1620 = vshrl.u32 %v1619, 7
    %v1621 = vsub.s32 4, %v1620
    %v1622 = vrot.slane %v1322, %v1621
    %v1623 = vlaneseq
    %v1624 = vshrl.u32 %v1623, 7
    %v1625 = vsub.s32 5, %v1624
    %v1626 = vrot.slane %v1322, %v1625
    %v1627 = vlaneseq
    %v1628 = vshrl.u32 %v1627, 7
    %v1629 = vsub.s32 6, %v1628
    %v1630 = vrot.slane %v1322, %v1629
    %v1631 = vlaneseq
    %v1632 = vshrl.u32 %v1631, 7
    %v1633 = vsub.s32 7, %v1632
    %v1634 = vrot.slane %v1322, %v1633
    %v1635 = vlaneseq
    %v1636 = vshrl.u32 %v1635, 7
    %v1637 = vsub.s32 0, %v1636
    %v1638 = vrot.slane %v1323, %v1637
    %v1639 = vlaneseq
    %v1640 = vshrl.u32 %v1639, 7
    %v1641 = vsub.s32 1, %v1640
    %v1642 = vrot.slane %v1323, %v1641
    %v1643 = vlaneseq
    %v1644 = vshrl.u32 %v1643, 7
    %v1645 = vsub.s32 2, %v1644
    %v1646 = vrot.slane %v1323, %v1645
    %v1647 = vlaneseq
    %v1648 = vshrl.u32 %v1647, 7
    %v1649 = vsub.s32 3, %v1648
    %v1650 = vrot.slane %v1323, %v1649
    %v1651 = vlaneseq
    %v1652 = vshrl.u32 %v1651, 7
    %v1653 = vsub.s32 4, %v1652
    %v1654 = vrot.slane %v1323, %v1653
    %v1655 = vlaneseq
    %v1656 = vshrl.u32 %v1655, 7
    %v1657 = vsub.s32 5, %v1656
    %v1658 = vrot.slane %v1323, %v1657
    %v1659 = vlaneseq
    %v1660 = vshrl.u32 %v1659, 7
    %v1661 = vsub.s32 6, %v1660
    %v1662 = vrot.slane %v1323, %v1661
    %v1663 = vlaneseq
    %v1664 = vshrl.u32 %v1663, 7
    %v1665 = vsub.s32 7, %v1664
    %v1666 = vrot.slane %v1323, %v1665
    %v1667 = vlaneseq
    %v1668 = vshrl.u32 %v1667, 7
    %v1669 = vsub.s32 0, %v1668
    %v1670 = vrot.slane %v1324, %v1669
    %v1671 = vlaneseq
    %v1672 = vshrl.u32 %v1671, 7
    %v1673 = vsub.s32 1, %v1672
    %v1674 = vrot.slane %v1324, %v1673
    %v1675 = vlaneseq
    %v1676 = vshrl.u32 %v1675, 7
    %v1677 = vsub.s32 2, %v1676
    %v1678 = vrot.slane %v1324, %v1677
    %v1679 = vlaneseq
    %v1680 = vshrl.u32 %v1679, 7
    %v1681 = vsub.s32 3, %v1680
    %v1682 = vrot.slane %v1324, %v1681
    %v1683 = vlaneseq
    %v1684 = vshrl.u32 %v1683, 7
    %v1685 = vsub.s32 4, %v1684
    %v1686 = vrot.slane %v1324, %v1685
    %v1687 = vlaneseq
    %v1688 = vshrl.u32 %v1687, 7
    %v1689 = vsub.s32 5, %v1688
    %v1690 = vrot.slane %v1324, %v1689
    %v1691 = vlaneseq
    %v1692 = vshrl.u32 %v1691, 7
    %v1693 = vsub.s32 6, %v1692
    %v1694 = vrot.slane %v1324, %v1693
    %v1695 = vlaneseq
    %v1696 = vshrl.u32 %v1695, 7
    %v1697 = vsub.s32 7, %v1696
    %v1698 = vrot.slane %v1324, %v1697
    %v1699 = vlaneseq
    %v1700 = vshrl.u32 %v1699, 7
    %v1701 = vsub.s32 0, %v1700
    %v1702 = vrot.slane %v1325, %v1701
    %v1703 = vlaneseq
    %v1704 = vshrl.u32 %v1703, 7
    %v1705 = vsub.s32 1, %v1704
    %v1706 = vrot.slane %v1325, %v1705
    %v1707 = vlaneseq
    %v1708 = vshrl.u32 %v1707, 7
    %v1709 = vsub.s32 2, %v1708
    %v1710 = vrot.slane %v1325, %v1709
    %v1711 = vlaneseq
    %v1712 = vshrl.u32 %v1711, 7
    %v1713 = vsub.s32 3, %v1712
    %v1714 = vrot.slane %v1325, %v1713
    %v1715 = vlaneseq
    %v1716 = vshrl.u32 %v1715, 7
    %v1717 = vsub.s32 4, %v1716
    %v1718 = vrot.slane %v1325, %v1717
    %v1719 = vlaneseq
    %v1720 = vshrl.u32 %v1719, 7
    %v1721 = vsub.s32 5, %v1720
    %v1722 = vrot.slane %v1325, %v1721
    %v1723 = vlaneseq
    %v1724 = vshrl.u32 %v1723, 7
    %v1725 = vsub.s32 6, %v1724
    %v1726 = vrot.slane %v1325, %v1725
    %v1727 = vlaneseq
    %v1728 = vshrl.u32 %v1727, 7
    %v1729 = vsub.s32 7, %v1728
    %v1730 = vrot.slane %v1325, %v1729
    %v1731 = vlaneseq
    %v1732 = vshrl.u32 %v1731, 7
    %v1733 = vsub.s32 0, %v1732
    %v1734 = vrot.slane %v1326, %v1733
    %v1735 = vlaneseq
    %v1736 = vshrl.u32 %v1735, 7
    %v1737 = vsub.s32 1, %v1736
    %v1738 = vrot.slane %v1326, %v1737
    %v1739 = vlaneseq
    %v1740 = vshrl.u32 %v1739, 7
    %v1741 = vsub.s32 2, %v1740
    %v1742 = vrot.slane %v1326, %v1741
    %v1743 = vlaneseq
    %v1744 = vshrl.u32 %v1743, 7
    %v1745 = vsub.s32 3, %v1744
    %v1746 = vrot.slane %v1326, %v1745
    %v1747 = vlaneseq
    %v1748 = vshrl.u32 %v1747, 7
    %v1749 = vsub.s32 4, %v1748
    %v1750 = vrot.slane %v1326, %v1749
    %v1751 = vlaneseq
    %v1752 = vshrl.u32 %v1751, 7
    %v1753 = vsub.s32 5, %v1752
    %v1754 = vrot.slane %v1326, %v1753
    %v1755 = vlaneseq
    %v1756 = vshrl.u32 %v1755, 7
    %v1757 = vsub.s32 6, %v1756
    %v1758 = vrot.slane %v1326, %v1757
    %v1759 = vlaneseq
    %v1760 = vshrl.u32 %v1759, 7
    %v1761 = vsub.s32 7, %v1760
    %v1762 = vrot.slane %v1326, %v1761
    %v1763 = vlaneseq
    %v1764 = vshrl.u32 %v1763, 7
    %v1765 = vsub.s32 0, %v1764
    %v1766 = vrot.slane %v1327, %v1765
    %v1767 = vlaneseq
    %v1768 = vshrl.u32 %v1767, 7
    %v1769 = vsub.s32 1, %v1768
    %v1770 = vrot.slane %v1327, %v1769
    %v1771 = vlaneseq
    %v1772 = vshrl.u32 %v1771, 7
    %v1773 = vsub.s32 2, %v1772
    %v1774 = vrot.slane %v1327, %v1773
    %v1775 = vlaneseq
    %v1776 = vshrl.u32 %v1775, 7
    %v1777 = vsub.s32 3, %v1776
    %v1778 = vrot.slane %v1327, %v1777
    %v1779 = vlaneseq
    %v1780 = vshrl.u32 %v1779, 7
    %v1781 = vsub.s32 4, %v1780
    %v1782 = vrot.slane %v1327, %v1781
    %v1783 = vlaneseq
    %v1784 = vshrl.u32 %v1783, 7
    %v1785 = vsub.s32 5, %v1784
    %v1786 = vrot.slane %v1327, %v1785
    %v1787 = vlaneseq
    %v1788 = vshrl.u32 %v1787, 7
    %v1789 = vsub.s32 6, %v1788
    %v1790 = vrot.slane %v1327, %v1789
    %v1791 = vlaneseq
    %v1792 = vshrl.u32 %v1791, 7
    %v1793 = vsub.s32 7, %v1792
    %v1794 = vrot.slane %v1327, %v1793
    %v1795 = vlaneseq
    %v1796 = vshrl.u32 %v1795, 7
    %v1797 = vsub.s32 0, %v1796
    %v1798 = vrot.slane %v1328, %v1797
    %v1799 = vlaneseq
    %v1800 = vshrl.u32 %v1799, 7
    %v1801 = vsub.s32 1, %v1800
    %v1802 = vrot.slane %v1328, %v1801
    %v1803 = vlaneseq
    %v1804 = vshrl.u32 %v1803, 7
    %v1805 = vsub.s32 2, %v1804
    %v1806 = vrot.slane %v1328, %v1805
    %v1807 = vlaneseq
    %v1808 = vshrl.u32 %v1807, 7
    %v1809 = vsub.s32 3, %v1808
    %v1810 = vrot.slane %v1328, %v1809
    %v1811 = vlaneseq
    %v1812 = vshrl.u32 %v1811, 7
    %v1813 = vsub.s32 4, %v1812
    %v1814 = vrot.slane %v1328, %v1813
    %v1815 = vlaneseq
    %v1816 = vshrl.u32 %v1815, 7
    %v1817 = vsub.s32 5, %v1816
    %v1818 = vrot.slane %v1328, %v1817
    %v1819 = vlaneseq
    %v1820 = vshrl.u32 %v1819, 7
    %v1821 = vsub.s32 6, %v1820
    %v1822 = vrot.slane %v1328, %v1821
    %v1823 = vlaneseq
    %v1824 = vshrl.u32 %v1823, 7
    %v1825 = vsub.s32 7, %v1824
    %v1826 = vrot.slane %v1328, %v1825
    %v1827 = vlaneseq
    %v1828 = vshrl.u32 %v1827, 7
    %v1829 = vsub.s32 0, %v1828
    %v1830 = vrot.slane %v1329, %v1829
    %v1831 = vlaneseq
    %v1832 = vshrl.u32 %v1831, 7
    %v1833 = vsub.s32 1, %v1832
    %v1834 = vrot.slane %v1329, %v1833
    %v1835 = vlaneseq
    %v1836 = vshrl.u32 %v1835, 7
    %v1837 = vsub.s32 2, %v1836
    %v1838 = vrot.slane %v1329, %v1837
    %v1839 = vlaneseq
    %v1840 = vshrl.u32 %v1839, 7
    %v1841 = vsub.s32 3, %v1840
    %v1842 = vrot.slane %v1329, %v1841
    %v1843 = vlaneseq
    %v1844 = vshrl.u32 %v1843, 7
    %v1845 = vsub.s32 4, %v1844
    %v1846 = vrot.slane %v1329, %v1845
    %v1847 = vlaneseq
    %v1848 = vshrl.u32 %v1847, 7
    %v1849 = vsub.s32 5, %v1848
    %v1850 = vrot.slane %v1329, %v1849
    %v1851 = vlaneseq
    %v1852 = vshrl.u32 %v1851, 7
    %v1853 = vsub.s32 6, %v1852
    %v1854 = vrot.slane %v1329, %v1853
    %v1855 = vlaneseq
    %v1856 = vshrl.u32 %v1855, 7
    %v1857 = vsub.s32 7, %v1856
    %v1858 = vrot.slane %v1329, %v1857
    %v1859 = vlaneseq
    %v1860 = vshrl.u32 %v1859, 7
    %v1861 = vsub.s32 0, %v1860
    %v1862 = vrot.slane %v1330, %v1861
    %v1863 = vlaneseq
    %v1864 = vshrl.u32 %v1863, 7
    %v1865 = vsub.s32 1, %v1864
    %v1866 = vrot.slane %v1330, %v1865
    %v1867 = vlaneseq
    %v1868 = vshrl.u32 %v1867, 7
    %v1869 = vsub.s32 2, %v1868
    %v1870 = vrot.slane %v1330, %v1869
    %v1871 = vlaneseq
    %v1872 = vshrl.u32 %v1871, 7
    %v1873 = vsub.s32 3, %v1872
    %v1874 = vrot.slane %v1330, %v1873
    %v1875 = vlaneseq
    %v1876 = vshrl.u32 %v1875, 7
    %v1877 = vsub.s32 4, %v1876
    %v1878 = vrot.slane %v1330, %v1877
    %v1879 = vlaneseq
    %v1880 = vshrl.u32 %v1879, 7
    %v1881 = vsub.s32 5, %v1880
    %v1882 = vrot.slane %v1330, %v1881
    %v1883 = vlaneseq
    %v1884 = vshrl.u32 %v1883, 7
    %v1885 = vsub.s32 6, %v1884
    %v1886 = vrot.slane %v1330, %v1885
    %v1887 = vlaneseq
    %v1888 = vshrl.u32 %v1887, 7
    %v1889 = vsub.s32 7, %v1888
    %v1890 = vrot.slane %v1330, %v1889
    %v1891 = vlaneseq
    %v1892 = vshrl.u32 %v1891, 7
    %v1893 = vsub.s32 0, %v1892
    %v1894 = vrot.slane %v1331, %v1893
    %v1895 = vlaneseq
    %v1896 = vshrl.u32 %v1895, 7
    %v1897 = vsub.s32 1, %v1896
    %v1898 = vrot.slane %v1331, %v1897
    %v1899 = vlaneseq
    %v1900 = vshrl.u32 %v1899, 7
    %v1901 = vsub.s32 2, %v1900
    %v1902 = vrot.slane %v1331, %v1901
    %v1903 = vlaneseq
    %v1904 = vshrl.u32 %v1903, 7
    %v1905 = vsub.s32 3, %v1904
    %v1906 = vrot.slane %v1331, %v1905
    %v1907 = vlaneseq
    %v1908 = vshrl.u32 %v1907, 7
    %v1909 = vsub.s32 4, %v1908
    %v1910 = vrot.slane %v1331, %v1909
    %v1911 = vlaneseq
    %v1912 = vshrl.u32 %v1911, 7
    %v1913 = vsub.s32 5, %v1912
    %v1914 = vrot.slane %v1331, %v1913
    %v1915 = vlaneseq
    %v1916 = vshrl.u32 %v1915, 7
    %v1917 = vsub.s32 6, %v1916
    %v1918 = vrot.slane %v1331, %v1917
    %v1919 = vlaneseq
    %v1920 = vshrl.u32 %v1919, 7
    %v1921 = vsub.s32 7, %v1920
    %v1922 = vrot.slane %v1331, %v1921
    %v1923 = vlaneseq
    %v1924 = vshrl.u32 %v1923, 7
    %v1925 = vsub.s32 0, %v1924
    %v1926 = vrot.slane %v1332, %v1925
    %v1927 = vlaneseq
    %v1928 = vshrl.u32 %v1927, 7
    %v1929 = vsub.s32 1, %v1928
    %v1930 = vrot.slane %v1332, %v1929
    %v1931 = vlaneseq
    %v1932 = vshrl.u32 %v1931, 7
    %v1933 = vsub.s32 2, %v1932
    %v1934 = vrot.slane %v1332, %v1933
    %v1935 = vlaneseq
    %v1936 = vshrl.u32 %v1935, 7
    %v1937 = vsub.s32 3, %v1936
    %v1938 = vrot.slane %v1332, %v1937
    %v1939 = vlaneseq
    %v1940 = vshrl.u32 %v1939, 7
    %v1941 = vsub.s32 4, %v1940
    %v1942 = vrot.slane %v1332, %v1941
    %v1943 = vlaneseq
    %v1944 = vshrl.u32 %v1943, 7
    %v1945 = vsub.s32 5, %v1944
    %v1946 = vrot.slane %v1332, %v1945
    %v1947 = vlaneseq
    %v1948 = vshrl.u32 %v1947, 7
    %v1949 = vsub.s32 6, %v1948
    %v1950 = vrot.slane %v1332, %v1949
    %v1951 = vlaneseq
    %v1952 = vshrl.u32 %v1951, 7
    %v1953 = vsub.s32 7, %v1952
    %v1954 = vrot.slane %v1332, %v1953
    %v1955 = vlaneseq
    %v1956 = vshrl.u32 %v1955, 7
    %v1957 = vsub.s32 0, %v1956
    %v1958 = vrot.slane %v1333, %v1957
    %v1959 = vlaneseq
    %v1960 = vshrl.u32 %v1959, 7
    %v1961 = vsub.s32 1, %v1960
    %v1962 = vrot.slane %v1333, %v1961
    %v1963 = vlaneseq
    %v1964 = vshrl.u32 %v1963, 7
    %v1965 = vsub.s32 2, %v1964
    %v1966 = vrot.slane %v1333, %v1965
    %v1967 = vlaneseq
    %v1968 = vshrl.u32 %v1967, 7
    %v1969 = vsub.s32 3, %v1968
    %v1970 = vrot.slane %v1333, %v1969
    %v1971 = vlaneseq
    %v1972 = vshrl.u32 %v1971, 7
    %v1973 = vsub.s32 4, %v1972
    %v1974 = vrot.slane %v1333, %v1973
    %v1975 = vlaneseq
    %v1976 = vshrl.u32 %v1975, 7
    %v1977 = vsub.s32 5, %v1976
    %v1978 = vrot.slane %v1333, %v1977
    %v1979 = vlaneseq
    %v1980 = vshrl.u32 %v1979, 7
    %v1981 = vsub.s32 6, %v1980
    %v1982 = vrot.slane %v1333, %v1981
    %v1983 = vlaneseq
    %v1984 = vshrl.u32 %v1983, 7
    %v1985 = vsub.s32 7, %v1984
    %v1986 = vrot.slane %v1333, %v1985
    %v1987 = vlaneseq
    %v1988 = vshrl.u32 %v1987, 7
    %v1989 = vsub.s32 0, %v1988
    %v1990 = vrot.slane %v1334, %v1989
    %v1991 = vlaneseq
    %v1992 = vshrl.u32 %v1991, 7
    %v1993 = vsub.s32 1, %v1992
    %v1994 = vrot.slane %v1334, %v1993
    %v1995 = vlaneseq
    %v1996 = vshrl.u32 %v1995, 7
    %v1997 = vsub.s32 2, %v1996
    %v1998 = vrot.slane %v1334, %v1997
    %v1999 = vlaneseq
    %v2000 = vshrl.u32 %v1999, 7
    %v2001 = vsub.s32 3, %v2000
    %v2002 = vrot.slane %v1334, %v2001
    %v2003 = vlaneseq
    %v2004 = vshrl.u32 %v2003, 7
    %v2005 = vsub.s32 4, %v2004
    %v2006 = vrot.slane %v1334, %v2005
    %v2007 = vlaneseq
    %v2008 = vshrl.u32 %v2007, 7
    %v2009 = vsub.s32 5, %v2008
    %v2010 = vrot.slane %v1334, %v2009
    %v2011 = vlaneseq
    %v2012 = vshrl.u32 %v2011, 7
    %v2013 = vsub.s32 6, %v2012
    %v2014 = vrot.slane %v1334, %v2013
    %v2015 = vlaneseq
    %v2016 = vshrl.u32 %v2015, 7
    %v2017 = vsub.s32 7, %v2016
    %v2018 = vrot.slane %v1334, %v2017
    %v2019 = vlaneseq
    %v2020 = vshrl.u32 %v2019, 7
    %v2021 = vsub.s32 0, %v2020
    %v2022 = vrot.slane %v1335, %v2021
    %v2023 = vlaneseq
    %v2024 = vshrl.u32 %v2023, 7
    %v2025 = vsub.s32 1, %v2024
    %v2026 = vrot.slane %v1335, %v2025
    %v2027 = vlaneseq
    %v2028 = vshrl.u32 %v2027, 7
    %v2029 = vsub.s32 2, %v2028
    %v2030 = vrot.slane %v1335, %v2029
    %v2031 = vlaneseq
    %v2032 = vshrl.u32 %v2031, 7
    %v2033 = vsub.s32 3, %v2032
    %v2034 = vrot.slane %v1335, %v2033
    %v2035 = vlaneseq
    %v2036 = vshrl.u32 %v2035, 7
    %v2037 = vsub.s32 4, %v2036
    %v2038 = vrot.slane %v1335, %v2037
    %v2039 = vlaneseq
    %v2040 = vshrl.u32 %v2039, 7
    %v2041 = vsub.s32 5, %v2040
    %v2042 = vrot.slane %v1335, %v2041
    %v2043 = vlaneseq
    %v2044 = vshrl.u32 %v2043, 7
    %v2045 = vsub.s32 6, %v2044
    %v2046 = vrot.slane %v1335, %v2045
    %v2047 = vlaneseq
    %v2048 = vshrl.u32 %v2047, 7
    %v2049 = vsub.s32 7, %v2048
    %v2050 = vrot.slane %v1335, %v2049
    %v2051 = vlaneseq
    %v2052 = vshrl.u32 %v2051, 7
    %v2053 = vsub.s32 0, %v2052
    %v2054 = vrot.slane %v1336, %v2053
    %v2055 = vlaneseq
    %v2056 = vshrl.u32 %v2055, 7
    %v2057 = vsub.s32 1, %v2056
    %v2058 = vrot.slane %v1336, %v2057
    %v2059 = vlaneseq
    %v2060 = vshrl.u32 %v2059, 7
    %v2061 = vsub.s32 2, %v2060
    %v2062 = vrot.slane %v1336, %v2061
    %v2063 = vlaneseq
    %v2064 = vshrl.u32 %v2063, 7
    %v2065 = vsub.s32 3, %v2064
    %v2066 = vrot.slane %v1336, %v2065
    %v2067 = vlaneseq
    %v2068 = vshrl.u32 %v2067, 7
    %v2069 = vsub.s32 4, %v2068
    %v2070 = vrot.slane %v1336, %v2069
    %v2071 = vlaneseq
    %v2072 = vshrl.u32 %v2071, 7
    %v2073 = vsub.s32 5, %v2072
    %v2074 = vrot.slane %v1336, %v2073
    %v2075 = vlaneseq
    %v2076 = vshrl.u32 %v2075, 7
    %v2077 = vsub.s32 6, %v2076
    %v2078 = vrot.slane %v1336, %v2077
    %v2079 = vlaneseq
    %v2080 = vshrl.u32 %v2079, 7
    %v2081 = vsub.s32 7, %v2080
    %v2082 = vrot.slane %v1336, %v2081
    %v2083 = vlaneseq
    %v2084 = vshrl.u32 %v2083, 7
    %v2085 = vsub.s32 0, %v2084
    %v2086 = vrot.slane %v1337, %v2085
    %v2087 = vlaneseq
    %v2088 = vshrl.u32 %v2087, 7
    %v2089 = vsub.s32 1, %v2088
    %v2090 = vrot.slane %v1337, %v2089
    %v2091 = vlaneseq
    %v2092 = vshrl.u32 %v2091, 7
    %v2093 = vsub.s32 2, %v2092
    %v2094 = vrot.slane %v1337, %v2093
    %v2095 = vlaneseq
    %v2096 = vshrl.u32 %v2095, 7
    %v2097 = vsub.s32 3, %v2096
    %v2098 = vrot.slane %v1337, %v2097
    %v2099 = vlaneseq
    %v2100 = vshrl.u32 %v2099, 7
    %v2101 = vsub.s32 4, %v2100
    %v2102 = vrot.slane %v1337, %v2101
    %v2103 = vlaneseq
    %v2104 = vshrl.u32 %v2103, 7
    %v2105 = vsub.s32 5, %v2104
    %v2106 = vrot.slane %v1337, %v2105
    %v2107 = vlaneseq
    %v2108 = vshrl.u32 %v2107, 7
    %v2109 = vsub.s32 6, %v2108
    %v2110 = vrot.slane %v1337, %v2109
    %v2111 = vlaneseq
    %v2112 = vshrl.u32 %v2111, 7
    %v2113 = vsub.s32 7, %v2112
    %v2114 = vrot.slane %v1337, %v2113
    %v2115 = vlaneseq
    %v2116 = vshrl.u32 %v2115, 7
    %v2117 = vsub.s32 0, %v2116
    %v2118 = vrot.slane %v1338, %v2117
    %v2119 = vlaneseq
    %v2120 = vshrl.u32 %v2119, 7
    %v2121 = vsub.s32 1, %v2120
    %v2122 = vrot.slane %v1338, %v2121
    %v2123 = vlaneseq
    %v2124 = vshrl.u32 %v2123, 7
    %v2125 = vsub.s32 2, %v2124
    %v2126 = vrot.slane %v1338, %v2125
    %v2127 = vlaneseq
    %v2128 = vshrl.u32 %v2127, 7
    %v2129 = vsub.s32 3, %v2128
    %v2130 = vrot.slane %v1338, %v2129
    %v2131 = vlaneseq
    %v2132 = vshrl.u32 %v2131, 7
    %v2133 = vsub.s32 4, %v2132
    %v2134 = vrot.slane %v1338, %v2133
    %v2135 = vlaneseq
    %v2136 = vshrl.u32 %v2135, 7
    %v2137 = vsub.s32 5, %v2136
    %v2138 = vrot.slane %v1338, %v2137
    %v2139 = vlaneseq
    %v2140 = vshrl.u32 %v2139, 7
    %v2141 = vsub.s32 6, %v2140
    %v2142 = vrot.slane %v1338, %v2141
    %v2143 = vlaneseq
    %v2144 = vshrl.u32 %v2143, 7
    %v2145 = vsub.s32 7, %v2144
    %v2146 = vrot.slane %v1338, %v2145
    %v2147 = vlaneseq
    %v2148 = vshrl.u32 %v2147, 7
    %v2149 = vsub.s32 0, %v2148
    %v2150 = vrot.slane %v1339, %v2149
    %v2151 = vlaneseq
    %v2152 = vshrl.u32 %v2151, 7
    %v2153 = vsub.s32 1, %v2152
    %v2154 = vrot.slane %v1339, %v2153
    %v2155 = vlaneseq
    %v2156 = vshrl.u32 %v2155, 7
    %v2157 = vsub.s32 2, %v2156
    %v2158 = vrot.slane %v1339, %v2157
    %v2159 = vlaneseq
    %v2160 = vshrl.u32 %v2159, 7
    %v2161 = vsub.s32 3, %v2160
    %v2162 = vrot.slane %v1339, %v2161
    %v2163 = vlaneseq
    %v2164 = vshrl.u32 %v2163, 7
    %v2165 = vsub.s32 4, %v2164
    %v2166 = vrot.slane %v1339, %v2165
    %v2167 = vlaneseq
    %v2168 = vshrl.u32 %v2167, 7
    %v2169 = vsub.s32 5, %v2168
    %v2170 = vrot.slane %v1339, %v2169
    %v2171 = vlaneseq
    %v2172 = vshrl.u32 %v2171, 7
    %v2173 = vsub.s32 6, %v2172
    %v2174 = vrot.slane %v1339, %v2173
    %v2175 = vlaneseq
    %v2176 = vshrl.u32 %v2175, 7
    %v2177 = vsub.s32 7, %v2176
    %v2178 = vrot.slane %v1339, %v2177
    %v2179 = vlaneseq
    %v2180 = vshrl.u32 %v2179, 7
    %v2181 = vsub.s32 0, %v2180
    %v2182 = vrot.slane %v1340, %v2181
    %v2183 = vlaneseq
    %v2184 = vshrl.u32 %v2183, 7
    %v2185 = vsub.s32 1, %v2184
    %v2186 = vrot.slane %v1340, %v2185
    %v2187 = vlaneseq
    %v2188 = vshrl.u32 %v2187, 7
    %v2189 = vsub.s32 2, %v2188
    %v2190 = vrot.slane %v1340, %v2189
    %v2191 = vlaneseq
    %v2192 = vshrl.u32 %v2191, 7
    %v2193 = vsub.s32 3, %v2192
    %v2194 = vrot.slane %v1340, %v2193
    %v2195 = vlaneseq
    %v2196 = vshrl.u32 %v2195, 7
    %v2197 = vsub.s32 4, %v2196
    %v2198 = vrot.slane %v1340, %v2197
    %v2199 = vlaneseq
    %v2200 = vshrl.u32 %v2199, 7
    %v2201 = vsub.s32 5, %v2200
    %v2202 = vrot.slane %v1340, %v2201
    %v2203 = vlaneseq
    %v2204 = vshrl.u32 %v2203, 7
    %v2205 = vsub.s32 6, %v2204
    %v2206 = vrot.slane %v1340, %v2205
    %v2207 = vlaneseq
    %v2208 = vshrl.u32 %v2207, 7
    %v2209 = vsub.s32 7, %v2208
    %v2210 = vrot.slane %v1340, %v2209
    %v2211 = vlaneseq
    %v2212 = vshrl.u32 %v2211, 7
    %v2213 = vsub.s32 0, %v2212
    %v2214 = vrot.slane %v1341, %v2213
    %v2215 = vlaneseq
    %v2216 = vshrl.u32 %v2215, 7
    %v2217 = vsub.s32 1, %v2216
    %v2218 = vrot.slane %v1341, %v2217
    %v2219 = vlaneseq
    %v2220 = vshrl.u32 %v2219, 7
    %v2221 = vsub.s32 2, %v2220
    %v2222 = vrot.slane %v1341, %v2221
    %v2223 = vlaneseq
    %v2224 = vshrl.u32 %v2223, 7
    %v2225 = vsub.s32 3, %v2224
    %v2226 = vrot.slane %v1341, %v2225
    %v2227 = vlaneseq
    %v2228 = vshrl.u32 %v2227, 7
    %v2229 = vsub.s32 4, %v2228
    %v2230 = vrot.slane %v1341, %v2229
    %v2231 = vlaneseq
    %v2232 = vshrl.u32 %v2231, 7
    %v2233 = vsub.s32 5, %v2232
    %v2234 = vrot.slane %v1341, %v2233
    %v2235 = vlaneseq
    %v2236 = vshrl.u32 %v2235, 7
    %v2237 = vsub.s32 6, %v2236
    %v2238 = vrot.slane %v1341, %v2237
    %v2239 = vlaneseq
    %v2240 = vshrl.u32 %v2239, 7
    %v2241 = vsub.s32 7, %v2240
    %v2242 = vrot.slane %v1341, %v2241
    %v2243 = vlaneseq
    %v2244 = vshrl.u32 %v2243, 7
    %v2245 = vsub.s32 0, %v2244
    %v2246 = vrot.slane %v1342, %v2245
    %v2247 = vlaneseq
    %v2248 = vshrl.u32 %v2247, 7
    %v2249 = vsub.s32 1, %v2248
    %v2250 = vrot.slane %v1342, %v2249
    %v2251 = vlaneseq
    %v2252 = vshrl.u32 %v2251, 7
    %v2253 = vsub.s32 2, %v2252
    %v2254 = vrot.slane %v1342, %v2253
    %v2255 = vlaneseq
    %v2256 = vshrl.u32 %v2255, 7
    %v2257 = vsub.s32 3, %v2256
    %v2258 = vrot.slane %v1342, %v2257
    %v2259 = vlaneseq
    %v2260 = vshrl.u32 %v2259, 7
    %v2261 = vsub.s32 4, %v2260
    %v2262 = vrot.slane %v1342, %v2261
    %v2263 = vlaneseq
    %v2264 = vshrl.u32 %v2263, 7
    %v2265 = vsub.s32 5, %v2264
    %v2266 = vrot.slane %v1342, %v2265
    %v2267 = vlaneseq
    %v2268 = vshrl.u32 %v2267, 7
    %v2269 = vsub.s32 6, %v2268
    %v2270 = vrot.slane %v1342, %v2269
    %v2271 = vlaneseq
    %v2272 = vshrl.u32 %v2271, 7
    %v2273 = vsub.s32 7, %v2272
    %v2274 = vrot.slane %v1342, %v2273
    %v2275 = vlaneseq
    %v2276 = vshrl.u32 %v2275, 7
    %v2277 = vsub.s32 0, %v2276
    %v2278 = vrot.slane %v1343, %v2277
    %v2279 = vlaneseq
    %v2280 = vshrl.u32 %v2279, 7
    %v2281 = vsub.s32 1, %v2280
    %v2282 = vrot.slane %v1343, %v2281
    %v2283 = vlaneseq
    %v2284 = vshrl.u32 %v2283, 7
    %v2285 = vsub.s32 2, %v2284
    %v2286 = vrot.slane %v1343, %v2285
    %v2287 = vlaneseq
    %v2288 = vshrl.u32 %v2287, 7
    %v2289 = vsub.s32 3, %v2288
    %v2290 = vrot.slane %v1343, %v2289
    %v2291 = vlaneseq
    %v2292 = vshrl.u32 %v2291, 7
    %v2293 = vsub.s32 4, %v2292
    %v2294 = vrot.slane %v1343, %v2293
    %v2295 = vlaneseq
    %v2296 = vshrl.u32 %v2295, 7
    %v2297 = vsub.s32 5, %v2296
    %v2298 = vrot.slane %v1343, %v2297
    %v2299 = vlaneseq
    %v2300 = vshrl.u32 %v2299, 7
    %v2301 = vsub.s32 6, %v2300
    %v2302 = vrot.slane %v1343, %v2301
    %v2303 = vlaneseq
    %v2304 = vshrl.u32 %v2303, 7
    %v2305 = vsub.s32 7, %v2304
    %v2306 = vrot.slane %v1343, %v2305
    %v2307 = vlaneseq
    %v2308 = vshrl.u32 %v2307, 7
    %v2309 = vsub.s32 0, %v2308
    %v2310 = vrot.slane %v1344, %v2309
    %v2311 = vlaneseq
    %v2312 = vshrl.u32 %v2311, 7
    %v2313 = vsub.s32 1, %v2312
    %v2314 = vrot.slane %v1344, %v2313
    %v2315 = vlaneseq
    %v2316 = vshrl.u32 %v2315, 7
    %v2317 = vsub.s32 2, %v2316
    %v2318 = vrot.slane %v1344, %v2317
    %v2319 = vlaneseq
    %v2320 = vshrl.u32 %v2319, 7
    %v2321 = vsub.s32 3, %v2320
    %v2322 = vrot.slane %v1344, %v2321
    %v2323 = vlaneseq
    %v2324 = vshrl.u32 %v2323, 7
    %v2325 = vsub.s32 4, %v2324
    %v2326 = vrot.slane %v1344, %v2325
    %v2327 = vlaneseq
    %v2328 = vshrl.u32 %v2327, 7
    %v2329 = vsub.s32 5, %v2328
    %v2330 = vrot.slane %v1344, %v2329
    %v2331 = vlaneseq
    %v2332 = vshrl.u32 %v2331, 7
    %v2333 = vsub.s32 6, %v2332
    %v2334 = vrot.slane %v1344, %v2333
    %v2335 = vlaneseq
    %v2336 = vshrl.u32 %v2335, 7
    %v2337 = vsub.s32 7, %v2336
    %v2338 = vrot.slane %v1344, %v2337
    %v2339 = vlaneseq
    %v2340 = vshrl.u32 %v2339, 7
    %v2341 = vsub.s32 0, %v2340
    %v2342 = vrot.slane %v1345, %v2341
    %v2343 = vlaneseq
    %v2344 = vshrl.u32 %v2343, 7
    %v2345 = vsub.s32 1, %v2344
    %v2346 = vrot.slane %v1345, %v2345
    %v2347 = vlaneseq
    %v2348 = vshrl.u32 %v2347, 7
    %v2349 = vsub.s32 2, %v2348
    %v2350 = vrot.slane %v1345, %v2349
    %v2351 = vlaneseq
    %v2352 = vshrl.u32 %v2351, 7
    %v2353 = vsub.s32 3, %v2352
    %v2354 = vrot.slane %v1345, %v2353
    %v2355 = vlaneseq
    %v2356 = vshrl.u32 %v2355, 7
    %v2357 = vsub.s32 4, %v2356
    %v2358 = vrot.slane %v1345, %v2357
    %v2359 = vlaneseq
    %v2360 = vshrl.u32 %v2359, 7
    %v2361 = vsub.s32 5, %v2360
    %v2362 = vrot.slane %v1345, %v2361
    %v2363 = vlaneseq
    %v2364 = vshrl.u32 %v2363, 7
    %v2365 = vsub.s32 6, %v2364
    %v2366 = vrot.slane %v1345, %v2365
    %v2367 = vlaneseq
    %v2368 = vshrl.u32 %v2367, 7
    %v2369 = vsub.s32 7, %v2368
    %v2370 = vrot.slane %v1345, %v2369
    %v2371 = vlaneseq
    %v2372 = vshrl.u32 %v2371, 7
    %v2373 = vsub.s32 0, %v2372
    %v2374 = vrot.slane %v1346, %v2373
    %v2375 = vlaneseq
    %v2376 = vshrl.u32 %v2375, 7
    %v2377 = vsub.s32 1, %v2376
    %v2378 = vrot.slane %v1346, %v2377
    %v2379 = vlaneseq
    %v2380 = vshrl.u32 %v2379, 7
    %v2381 = vsub.s32 2, %v2380
    %v2382 = vrot.slane %v1346, %v2381
    %v2383 = vlaneseq
    %v2384 = vshrl.u32 %v2383, 7
    %v2385 = vsub.s32 3, %v2384
    %v2386 = vrot.slane %v1346, %v2385
    %v2387 = vlaneseq
    %v2388 = vshrl.u32 %v2387, 7
    %v2389 = vsub.s32 4, %v2388
    %v2390 = vrot.slane %v1346, %v2389
    %v2391 = vlaneseq
    %v2392 = vshrl.u32 %v2391, 7
    %v2393 = vsub.s32 5, %v2392
    %v2394 = vrot.slane %v1346, %v2393
    %v2395 = vlaneseq
    %v2396 = vshrl.u32 %v2395, 7
    %v2397 = vsub.s32 6, %v2396
    %v2398 = vrot.slane %v1346, %v2397
    %v2399 = vlaneseq
    %v2400 = vshrl.u32 %v2399, 7
    %v2401 = vsub.s32 7, %v2400
    %v2402 = vrot.slane %v1346, %v2401
    %v2403 = vcombine.low %v1382, %v1386
    %v2404 = vcombine.low %v1390, %v1394
    %v2405 = vcombine.low %v1398, %v1402
    %v2406 = vcombine.low %v1406, %v1410
    %v2408 = vunpack.c.l.s4 1966171168
    %v2409 = vunpack.c.0.s8 %v2408
    %v2410 = vlaneseq
    %v2411 = vshrl.u32 %v2410, 7
    %v2412 = vsub.s32 %v2409, %v2411
    %v2413 = vrot.slane %v2403, %v2412
    %v2415 = vunpack.c.l.s4 1966171168
    %v2416 = vunpack.c.0.s8 %v2415
    %v2417 = vlaneseq
    %v2418 = vshrl.u32 %v2417, 7
    %v2419 = vsub.s32 %v2416, %v2418
    %v2420 = vrot.slane %v2404, %v2419
    %v2422 = vunpack.c.l.s4 1966171168
    %v2423 = vunpack.c.0.s8 %v2422
    %v2424 = vlaneseq
    %v2425 = vshrl.u32 %v2424, 7
    %v2426 = vsub.s32 %v2423, %v2425
    %v2427 = vrot.slane %v2405, %v2426
    %v2429 = vunpack.c.l.s4 1966171168
    %v2430 = vunpack.c.0.s8 %v2429
    %v2431 = vlaneseq
    %v2432 = vshrl.u32 %v2431, 7
    %v2433 = vsub.s32 %v2430, %v2432
    %v2434 = vrot.slane %v2406, %v2433
    %v2435 = vcombine.low %v2413, %v2420
    %v2436 = vcombine.low %v2427, %v2434
    %v2438 = vunpack.c.l.s4 1966171168
    %v2439 = vunpack.c.0.s8 %v2438
    %v2440 = vlaneseq
    %v2441 = vshrl.u32 %v2440, 7
    %v2442 = vsub.s32 %v2439, %v2441
    %v2443 = vrot.slane %v2435, %v2442
    %v2445 = vunpack.c.l.s4 1966171168
    %v2446 = vunpack.c.0.s8 %v2445
    %v2447 = vlaneseq
    %v2448 = vshrl.u32 %v2447, 7
    %v2449 = vsub.s32 %v2446, %v2448
    %v2450 = vrot.slane %v2436, %v2449
    %v2451 = vcombine.low %v2443, %v2450
    %v2452 = vcombine.low %v1414, %v1418
    %v2453 = vcombine.low %v1422, %v1426
    %v2454 = vcombine.low %v1430, %v1434
    %v2455 = vcombine.low %v1438, %v1442
    %v2457 = vunpack.c.l.s4 1966171168
    %v2458 = vunpack.c.0.s8 %v2457
    %v2459 = vlaneseq
    %v2460 = vshrl.u32 %v2459, 7
    %v2461 = vsub.s32 %v2458, %v2460
    %v2462 = vrot.slane %v2452, %v2461
    %v2464 = vunpack.c.l.s4 1966171168
    %v2465 = vunpack.c.0.s8 %v2464
    %v2466 = vlaneseq
    %v2467 = vshrl.u32 %v2466, 7
    %v2468 = vsub.s32 %v2465, %v2467
    %v2469 = vrot.slane %v2453, %v2468
    %v2471 = vunpack.c.l.s4 1966171168
    %v2472 = vunpack.c.0.s8 %v2471
    %v2473 = vlaneseq
    %v2474 = vshrl.u32 %v2473, 7
    %v2475 = vsub.s32 %v2472, %v2474
    %v2476 = vrot.slane %v2454, %v2475
    %v2478 = vunpack.c.l.s4 1966171168
    %v2479 = vunpack.c.0.s8 %v2478
    %v2480 = vlaneseq
    %v2481 = vshrl.u32 %v2480, 7
    %v2482 = vsub.s32 %v2479, %v2481
    %v2483 = vrot.slane %v2455, %v2482
    %v2484 = vcombine.low %v2462, %v2469
    %v2485 = vcombine.low %v2476, %v2483
    %v2487 = vunpack.c.l.s4 1966171168
    %v2488 = vunpack.c.0.s8 %v2487
    %v2489 = vlaneseq
    %v2490 = vshrl.u32 %v2489, 7
    %v2491 = vsub.s32 %v2488, %v2490
    %v2492 = vrot.slane %v2484, %v2491
    %v2494 = vunpack.c.l.s4 1966171168
    %v2495 = vunpack.c.0.s8 %v2494
    %v2496 = vlaneseq
    %v2497 = vshrl.u32 %v2496, 7
    %v2498 = vsub.s32 %v2495, %v2497
    %v2499 = vrot.slane %v2485, %v2498
    %v2500 = vcombine.low %v2492, %v2499
    %v2501 = vcombine.low %v1446, %v1450
    %v2502 = vcombine.low %v1454, %v1458
    %v2503 = vcombine.low %v1462, %v1466
    %v2504 = vcombine.low %v1470, %v1474
    %v2506 = vunpack.c.l.s4 1966171168
    %v2507 = vunpack.c.0.s8 %v2506
    %v2508 = vlaneseq
    %v2509 = vshrl.u32 %v2508, 7
    %v2510 = vsub.s32 %v2507, %v2509
    %v2511 = vrot.slane %v2501, %v2510
    %v2513 = vunpack.c.l.s4 1966171168
    %v2514 = vunpack.c.0.s8 %v2513
    %v2515 = vlaneseq
    %v2516 = vshrl.u32 %v2515, 7
    %v2517 = vsub.s32 %v2514, %v2516
    %v2518 = vrot.slane %v2502, %v2517
    %v2520 = vunpack.c.l.s4 1966171168
    %v2521 = vunpack.c.0.s8 %v2520
    %v2522 = vlaneseq
    %v2523 = vshrl.u32 %v2522, 7
    %v2524 = vsub.s32 %v2521, %v2523
    %v2525 = vrot.slane %v2503, %v2524
    %v2527 = vunpack.c.l.s4 1966171168
    %v2528 = vunpack.c.0.s8 %v2527
    %v2529 = vlaneseq
    %v2530 = vshrl.u32 %v2529, 7
    %v2531 = vsub.s32 %v2528, %v2530
    %v2532 = vrot.slane %v2504, %v2531
    %v2533 = vcombine.low %v2511, %v2518
    %v2534 = vcombine.low %v2525, %v2532
    %v2536 = vunpack.c.l.s4 1966171168
    %v2537 = vunpack.c.0.s8 %v2536
    %v2538 = vlaneseq
    %v2539 = vshrl.u32 %v2538, 7
    %v2540 = vsub.s32 %v2537, %v2539
    %v2541 = vrot.slane %v2533, %v2540
    %v2543 = vunpack.c.l.s4 1966171168
    %v2544 = vunpack.c.0.s8 %v2543
    %v2545 = vlaneseq
    %v2546 = vshrl.u32 %v2545, 7
    %v2547 = vsub.s32 %v2544, %v2546
    %v2548 = vrot.slane %v2534, %v2547
    %v2549 = vcombine.low %v2541, %v2548
    %v2550 = vcombine.low %v1478, %v1482
    %v2551 = vcombine.low %v1486, %v1490
    %v2552 = vcombine.low %v1494, %v1498
    %v2553 = vcombine.low %v1502, %v1506
    %v2555 = vunpack.c.l.s4 1966171168
    %v2556 = vunpack.c.0.s8 %v2555
    %v2557 = vlaneseq
    %v2558 = vshrl.u32 %v2557, 7
    %v2559 = vsub.s32 %v2556, %v2558
    %v2560 = vrot.slane %v2550, %v2559
    %v2562 = vunpack.c.l.s4 1966171168
    %v2563 = vunpack.c.0.s8 %v2562
    %v2564 = vlaneseq
    %v2565 = vshrl.u32 %v2564, 7
    %v2566 = vsub.s32 %v2563, %v2565
    %v2567 = vrot.slane %v2551, %v2566
    %v2569 = vunpack.c.l.s4 1966171168
    %v2570 = vunpack.c.0.s8 %v2569
    %v2571 = vlaneseq
    %v2572 = vshrl.u32 %v2571, 7
    %v2573 = vsub.s32 %v2570, %v2572
    %v2574 = vrot.slane %v2552, %v2573
    %v2576 = vunpack.c.l.s4 1966171168
    %v2577 = vunpack.c.0.s8 %v2576
    %v2578 = vlaneseq
    %v2579 = vshrl.u32 %v2578, 7
    %v2580 = vsub.s32 %v2577, %v2579
    %v2581 = vrot.slane %v2553, %v2580
    %v2582 = vcombine.low %v2560, %v2567
    %v2583 = vcombine.low %v2574, %v2581
    %v2585 = vunpack.c.l.s4 1966171168
    %v2586 = vunpack.c.0.s8 %v2585
    %v2587 = vlaneseq
    %v2588 = vshrl.u32 %v2587, 7
    %v2589 = vsub.s32 %v2586, %v2588
    %v2590 = vrot.slane %v2582, %v2589
    %v2592 = vunpack.c.l.s4 1966171168
    %v2593 = vunpack.c.0.s8 %v2592
    %v2594 = vlaneseq
    %v2595 = vshrl.u32 %v2594, 7
    %v2596 = vsub.s32 %v2593, %v2595
    %v2597 = vrot.slane %v2583, %v2596
    %v2598 = vcombine.low %v2590, %v2597
    %v2599 = vcombine.low %v1510, %v1514
    %v2600 = vcombine.low %v1518, %v1522
    %v2601 = vcombine.low %v1526, %v1530
    %v2602 = vcombine.low %v1534, %v1538
    %v2604 = vunpack.c.l.s4 1966171168
    %v2605 = vunpack.c.0.s8 %v2604
    %v2606 = vlaneseq
    %v2607 = vshrl.u32 %v2606, 7
    %v2608 = vsub.s32 %v2605, %v2607
    %v2609 = vrot.slane %v2599, %v2608
    %v2611 = vunpack.c.l.s4 1966171168
    %v2612 = vunpack.c.0.s8 %v2611
    %v2613 = vlaneseq
    %v2614 = vshrl.u32 %v2613, 7
    %v2615 = vsub.s32 %v2612, %v2614
    %v2616 = vrot.slane %v2600, %v2615
    %v2618 = vunpack.c.l.s4 1966171168
    %v2619 = vunpack.c.0.s8 %v2618
    %v2620 = vlaneseq
    %v2621 = vshrl.u32 %v2620, 7
    %v2622 = vsub.s32 %v2619, %v2621
    %v2623 = vrot.slane %v2601, %v2622
    %v2625 = vunpack.c.l.s4 1966171168
    %v2626 = vunpack.c.0.s8 %v2625
    %v2627 = vlaneseq
    %v2628 = vshrl.u32 %v2627, 7
    %v2629 = vsub.s32 %v2626, %v2628
    %v2630 = vrot.slane %v2602, %v2629
    %v2631 = vcombine.low %v2609, %v2616
    %v2632 = vcombine.low %v2623, %v2630
    %v2634 = vunpack.c.l.s4 1966171168
    %v2635 = vunpack.c.0.s8 %v2634
    %v2636 = vlaneseq
    %v2637 = vshrl.u32 %v2636, 7
    %v2638 = vsub.s32 %v2635, %v2637
    %v2639 = vrot.slane %v2631, %v2638
    %v2641 = vunpack.c.l.s4 1966171168
    %v2642 = vunpack.c.0.s8 %v2641
    %v2643 = vlaneseq
    %v2644 = vshrl.u32 %v2643, 7
    %v2645 = vsub.s32 %v2642, %v2644
    %v2646 = vrot.slane %v2632, %v2645
    %v2647 = vcombine.low %v2639, %v2646
    %v2648 = vcombine.low %v1542, %v1546
    %v2649 = vcombine.low %v1550, %v1554
    %v2650 = vcombine.low %v1558, %v1562
    %v2651 = vcombine.low %v1566, %v1570
    %v2653 = vunpack.c.l.s4 1966171168
    %v2654 = vunpack.c.0.s8 %v2653
    %v2655 = vlaneseq
    %v2656 = vshrl.u32 %v2655, 7
    %v2657 = vsub.s32 %v2654, %v2656
    %v2658 = vrot.slane %v2648, %v2657
    %v2660 = vunpack.c.l.s4 1966171168
    %v2661 = vunpack.c.0.s8 %v2660
    %v2662 = vlaneseq
    %v2663 = vshrl.u32 %v2662, 7
    %v2664 = vsub.s32 %v2661, %v2663
    %v2665 = vrot.slane %v2649, %v2664
    %v2667 = vunpack.c.l.s4 1966171168
    %v2668 = vunpack.c.0.s8 %v2667
    %v2669 = vlaneseq
    %v2670 = vshrl.u32 %v2669, 7
    %v2671 = vsub.s32 %v2668, %v2670
    %v2672 = vrot.slane %v2650, %v2671
    %v2674 = vunpack.c.l.s4 1966171168
    %v2675 = vunpack.c.0.s8 %v2674
    %v2676 = vlaneseq
    %v2677 = vshrl.u32 %v2676, 7
    %v2678 = vsub.s32 %v2675, %v2677
    %v2679 = vrot.slane %v2651, %v2678
    %v2680 = vcombine.low %v2658, %v2665
    %v2681 = vcombine.low %v2672, %v2679
    %v2683 = vunpack.c.l.s4 1966171168
    %v2684 = vunpack.c.0.s8 %v2683
    %v2685 = vlaneseq
    %v2686 = vshrl.u32 %v2685, 7
    %v2687 = vsub.s32 %v2684, %v2686
    %v2688 = vrot.slane %v2680, %v2687
    %v2690 = vunpack.c.l.s4 1966171168
    %v2691 = vunpack.c.0.s8 %v2690
    %v2692 = vlaneseq
    %v2693 = vshrl.u32 %v2692, 7
    %v2694 = vsub.s32 %v2691, %v2693
    %v2695 = vrot.slane %v2681, %v2694
    %v2696 = vcombine.low %v2688, %v2695
    %v2697 = vcombine.low %v1574, %v1578
    %v2698 = vcombine.low %v1582, %v1586
    %v2699 = vcombine.low %v1590, %v1594
    %v2700 = vcombine.low %v1598, %v1602
    %v2702 = vunpack.c.l.s4 1966171168
    %v2703 = vunpack.c.0.s8 %v2702
    %v2704 = vlaneseq
    %v2705 = vshrl.u32 %v2704, 7
    %v2706 = vsub.s32 %v2703, %v2705
    %v2707 = vrot.slane %v2697, %v2706
    %v2709 = vunpack.c.l.s4 1966171168
    %v2710 = vunpack.c.0.s8 %v2709
    %v2711 = vlaneseq
    %v2712 = vshrl.u32 %v2711, 7
    %v2713 = vsub.s32 %v2710, %v2712
    %v2714 = vrot.slane %v2698, %v2713
    %v2716 = vunpack.c.l.s4 1966171168
    %v2717 = vunpack.c.0.s8 %v2716
    %v2718 = vlaneseq
    %v2719 = vshrl.u32 %v2718, 7
    %v2720 = vsub.s32 %v2717, %v2719
    %v2721 = vrot.slane %v2699, %v2720
    %v2723 = vunpack.c.l.s4 1966171168
    %v2724 = vunpack.c.0.s8 %v2723
    %v2725 = vlaneseq
    %v2726 = vshrl.u32 %v2725, 7
    %v2727 = vsub.s32 %v2724, %v2726
    %v2728 = vrot.slane %v2700, %v2727
    %v2729 = vcombine.low %v2707, %v2714
    %v2730 = vcombine.low %v2721, %v2728
    %v2732 = vunpack.c.l.s4 1966171168
    %v2733 = vunpack.c.0.s8 %v2732
    %v2734 = vlaneseq
    %v2735 = vshrl.u32 %v2734, 7
    %v2736 = vsub.s32 %v2733, %v2735
    %v2737 = vrot.slane %v2729, %v2736
    %v2739 = vunpack.c.l.s4 1966171168
    %v2740 = vunpack.c.0.s8 %v2739
    %v2741 = vlaneseq
    %v2742 = vshrl.u32 %v2741, 7
    %v2743 = vsub.s32 %v2740, %v2742
    %v2744 = vrot.slane %v2730, %v2743
    %v2745 = vcombine.low %v2737, %v2744
    %v2746 = vcombine.low %v1606, %v1610
    %v2747 = vcombine.low %v1614, %v1618
    %v2748 = vcombine.low %v1622, %v1626
    %v2749 = vcombine.low %v1630, %v1634
    %v2751 = vunpack.c.l.s4 1966171168
    %v2752 = vunpack.c.0.s8 %v2751
    %v2753 = vlaneseq
    %v2754 = vshrl.u32 %v2753, 7
    %v2755 = vsub.s32 %v2752, %v2754
    %v2756 = vrot.slane %v2746, %v2755
    %v2758 = vunpack.c.l.s4 1966171168
    %v2759 = vunpack.c.0.s8 %v2758
    %v2760 = vlaneseq
    %v2761 = vshrl.u32 %v2760, 7
    %v2762 = vsub.s32 %v2759, %v2761
    %v2763 = vrot.slane %v2747, %v2762
    %v2765 = vunpack.c.l.s4 1966171168
    %v2766 = vunpack.c.0.s8 %v2765
    %v2767 = vlaneseq
    %v2768 = vshrl.u32 %v2767, 7
    %v2769 = vsub.s32 %v2766, %v2768
    %v2770 = vrot.slane %v2748, %v2769
    %v2772 = vunpack.c.l.s4 1966171168
    %v2773 = vunpack.c.0.s8 %v2772
    %v2774 = vlaneseq
    %v2775 = vshrl.u32 %v2774, 7
    %v2776 = vsub.s32 %v2773, %v2775
    %v2777 = vrot.slane %v2749, %v2776
    %v2778 = vcombine.low %v2756, %v2763
    %v2779 = vcombine.low %v2770, %v2777
    %v2781 = vunpack.c.l.s4 1966171168
    %v2782 = vunpack.c.0.s8 %v2781
    %v2783 = vlaneseq
    %v2784 = vshrl.u32 %v2783, 7
    %v2785 = vsub.s32 %v2782, %v2784
    %v2786 = vrot.slane %v2778, %v2785
    %v2788 = vunpack.c.l.s4 1966171168
    %v2789 = vunpack.c.0.s8 %v2788
    %v2790 = vlaneseq
    %v2791 = vshrl.u32 %v2790, 7
    %v2792 = vsub.s32 %v2789, %v2791
    %v2793 = vrot.slane %v2779, %v2792
    %v2794 = vcombine.low %v2786, %v2793
    %v2795 = vcombine.low %v1638, %v1642
    %v2796 = vcombine.low %v1646, %v1650
    %v2797 = vcombine.low %v1654, %v1658
    %v2798 = vcombine.low %v1662, %v1666
    %v2800 = vunpack.c.l.s4 1966171168
    %v2801 = vunpack.c.0.s8 %v2800
    %v2802 = vlaneseq
    %v2803 = vshrl.u32 %v2802, 7
    %v2804 = vsub.s32 %v2801, %v2803
    %v2805 = vrot.slane %v2795, %v2804
    %v2807 = vunpack.c.l.s4 1966171168
    %v2808 = vunpack.c.0.s8 %v2807
    %v2809 = vlaneseq
    %v2810 = vshrl.u32 %v2809, 7
    %v2811 = vsub.s32 %v2808, %v2810
    %v2812 = vrot.slane %v2796, %v2811
    %v2814 = vunpack.c.l.s4 1966171168
    %v2815 = vunpack.c.0.s8 %v2814
    %v2816 = vlaneseq
    %v2817 = vshrl.u32 %v2816, 7
    %v2818 = vsub.s32 %v2815, %v2817
    %v2819 = vrot.slane %v2797, %v2818
    %v2821 = vunpack.c.l.s4 1966171168
    %v2822 = vunpack.c.0.s8 %v2821
    %v2823 = vlaneseq
    %v2824 = vshrl.u32 %v2823, 7
    %v2825 = vsub.s32 %v2822, %v2824
    %v2826 = vrot.slane %v2798, %v2825
    %v2827 = vcombine.low %v2805, %v2812
    %v2828 = vcombine.low %v2819, %v2826
    %v2830 = vunpack.c.l.s4 1966171168
    %v2831 = vunpack.c.0.s8 %v2830
    %v2832 = vlaneseq
    %v2833 = vshrl.u32 %v2832, 7
    %v2834 = vsub.s32 %v2831, %v2833
    %v2835 = vrot.slane %v2827, %v2834
    %v2837 = vunpack.c.l.s4 1966171168
    %v2838 = vunpack.c.0.s8 %v2837
    %v2839 = vlaneseq
    %v2840 = vshrl.u32 %v2839, 7
    %v2841 = vsub.s32 %v2838, %v2840
    %v2842 = vrot.slane %v2828, %v2841
    %v2843 = vcombine.low %v2835, %v2842
    %v2844 = vcombine.low %v1670, %v1674
    %v2845 = vcombine.low %v1678, %v1682
    %v2846 = vcombine.low %v1686, %v1690
    %v2847 = vcombine.low %v1694, %v1698
    %v2849 = vunpack.c.l.s4 1966171168
    %v2850 = vunpack.c.0.s8 %v2849
    %v2851 = vlaneseq
    %v2852 = vshrl.u32 %v2851, 7
    %v2853 = vsub.s32 %v2850, %v2852
    %v2854 = vrot.slane %v2844, %v2853
    %v2856 = vunpack.c.l.s4 1966171168
    %v2857 = vunpack.c.0.s8 %v2856
    %v2858 = vlaneseq
    %v2859 = vshrl.u32 %v2858, 7
    %v2860 = vsub.s32 %v2857, %v2859
    %v2861 = vrot.slane %v2845, %v2860
    %v2863 = vunpack.c.l.s4 1966171168
    %v2864 = vunpack.c.0.s8 %v2863
    %v2865 = vlaneseq
    %v2866 = vshrl.u32 %v2865, 7
    %v2867 = vsub.s32 %v2864, %v2866
    %v2868 = vrot.slane %v2846, %v2867
    %v2870 = vunpack.c.l.s4 1966171168
    %v2871 = vunpack.c.0.s8 %v2870
    %v2872 = vlaneseq
    %v2873 = vshrl.u32 %v2872, 7
    %v2874 = vsub.s32 %v2871, %v2873
    %v2875 = vrot.slane %v2847, %v2874
    %v2876 = vcombine.low %v2854, %v2861
    %v2877 = vcombine.low %v2868, %v2875
    %v2879 = vunpack.c.l.s4 1966171168
    %v2880 = vunpack.c.0.s8 %v2879
    %v2881 = vlaneseq
    %v2882 = vshrl.u32 %v2881, 7
    %v2883 = vsub.s32 %v2880, %v2882
    %v2884 = vrot.slane %v2876, %v2883
    %v2886 = vunpack.c.l.s4 1966171168
    %v2887 = vunpack.c.0.s8 %v2886
    %v2888 = vlaneseq
    %v2889 = vshrl.u32 %v2888, 7
    %v2890 = vsub.s32 %v2887, %v2889
    %v2891 = vrot.slane %v2877, %v2890
    %v2892 = vcombine.low %v2884, %v2891
    %v2893 = vcombine.low %v1702, %v1706
    %v2894 = vcombine.low %v1710, %v1714
    %v2895 = vcombine.low %v1718, %v1722
    %v2896 = vcombine.low %v1726, %v1730
    %v2898 = vunpack.c.l.s4 1966171168
    %v2899 = vunpack.c.0.s8 %v2898
    %v2900 = vlaneseq
    %v2901 = vshrl.u32 %v2900, 7
    %v2902 = vsub.s32 %v2899, %v2901
    %v2903 = vrot.slane %v2893, %v2902
    %v2905 = vunpack.c.l.s4 1966171168
    %v2906 = vunpack.c.0.s8 %v2905
    %v2907 = vlaneseq
    %v2908 = vshrl.u32 %v2907, 7
    %v2909 = vsub.s32 %v2906, %v2908
    %v2910 = vrot.slane %v2894, %v2909
    %v2912 = vunpack.c.l.s4 1966171168
    %v2913 = vunpack.c.0.s8 %v2912
    %v2914 = vlaneseq
    %v2915 = vshrl.u32 %v2914, 7
    %v2916 = vsub.s32 %v2913, %v2915
    %v2917 = vrot.slane %v2895, %v2916
    %v2919 = vunpack.c.l.s4 1966171168
    %v2920 = vunpack.c.0.s8 %v2919
    %v2921 = vlaneseq
    %v2922 = vshrl.u32 %v2921, 7
    %v2923 = vsub.s32 %v2920, %v2922
    %v2924 = vrot.slane %v2896, %v2923
    %v2925 = vcombine.low %v2903, %v2910
    %v2926 = vcombine.low %v2917, %v2924
    %v2928 = vunpack.c.l.s4 1966171168
    %v2929 = vunpack.c.0.s8 %v2928
    %v2930 = vlaneseq
    %v2931 = vshrl.u32 %v2930, 7
    %v2932 = vsub.s32 %v2929, %v2931
    %v2933 = vrot.slane %v2925, %v2932
    %v2935 = vunpack.c.l.s4 1966171168
    %v2936 = vunpack.c.0.s8 %v2935
    %v2937 = vlaneseq
    %v2938 = vshrl.u32 %v2937, 7
    %v2939 = vsub.s32 %v2936, %v2938
    %v2940 = vrot.slane %v2926, %v2939
    %v2941 = vcombine.low %v2933, %v2940
    %v2942 = vcombine.low %v1734, %v1738
    %v2943 = vcombine.low %v1742, %v1746
    %v2944 = vcombine.low %v1750, %v1754
    %v2945 = vcombine.low %v1758, %v1762
    %v2947 = vunpack.c.l.s4 1966171168
    %v2948 = vunpack.c.0.s8 %v2947
    %v2949 = vlaneseq
    %v2950 = vshrl.u32 %v2949, 7
    %v2951 = vsub.s32 %v2948, %v2950
    %v2952 = vrot.slane %v2942, %v2951
    %v2954 = vunpack.c.l.s4 1966171168
    %v2955 = vunpack.c.0.s8 %v2954
    %v2956 = vlaneseq
    %v2957 = vshrl.u32 %v2956, 7
    %v2958 = vsub.s32 %v2955, %v2957
    %v2959 = vrot.slane %v2943, %v2958
    %v2961 = vunpack.c.l.s4 1966171168
    %v2962 = vunpack.c.0.s8 %v2961
    %v2963 = vlaneseq
    %v2964 = vshrl.u32 %v2963, 7
    %v2965 = vsub.s32 %v2962, %v2964
    %v2966 = vrot.slane %v2944, %v2965
    %v2968 = vunpack.c.l.s4 1966171168
    %v2969 = vunpack.c.0.s8 %v2968
    %v2970 = vlaneseq
    %v2971 = vshrl.u32 %v2970, 7
    %v2972 = vsub.s32 %v2969, %v2971
    %v2973 = vrot.slane %v2945, %v2972
    %v2974 = vcombine.low %v2952, %v2959
    %v2975 = vcombine.low %v2966, %v2973
    %v2977 = vunpack.c.l.s4 1966171168
    %v2978 = vunpack.c.0.s8 %v2977
    %v2979 = vlaneseq
    %v2980 = vshrl.u32 %v2979, 7
    %v2981 = vsub.s32 %v2978, %v2980
    %v2982 = vrot.slane %v2974, %v2981
    %v2984 = vunpack.c.l.s4 1966171168
    %v2985 = vunpack.c.0.s8 %v2984
    %v2986 = vlaneseq
    %v2987 = vshrl.u32 %v2986, 7
    %v2988 = vsub.s32 %v2985, %v2987
    %v2989 = vrot.slane %v2975, %v2988
    %v2990 = vcombine.low %v2982, %v2989
    %v2991 = vcombine.low %v1766, %v1770
    %v2992 = vcombine.low %v1774, %v1778
    %v2993 = vcombine.low %v1782, %v1786
    %v2994 = vcombine.low %v1790, %v1794
    %v2996 = vunpack.c.l.s4 1966171168
    %v2997 = vunpack.c.0.s8 %v2996
    %v2998 = vlaneseq
    %v2999 = vshrl.u32 %v2998, 7
    %v3000 = vsub.s32 %v2997, %v2999
    %v3001 = vrot.slane %v2991, %v3000
    %v3003 = vunpack.c.l.s4 1966171168
    %v3004 = vunpack.c.0.s8 %v3003
    %v3005 = vlaneseq
    %v3006 = vshrl.u32 %v3005, 7
    %v3007 = vsub.s32 %v3004, %v3006
    %v3008 = vrot.slane %v2992, %v3007
    %v3010 = vunpack.c.l.s4 1966171168
    %v3011 = vunpack.c.0.s8 %v3010
    %v3012 = vlaneseq
    %v3013 = vshrl.u32 %v3012, 7
    %v3014 = vsub.s32 %v3011, %v3013
    %v3015 = vrot.slane %v2993, %v3014
    %v3017 = vunpack.c.l.s4 1966171168
    %v3018 = vunpack.c.0.s8 %v3017
    %v3019 = vlaneseq
    %v3020 = vshrl.u32 %v3019, 7
    %v3021 = vsub.s32 %v3018, %v3020
    %v3022 = vrot.slane %v2994, %v3021
    %v3023 = vcombine.low %v3001, %v3008
    %v3024 = vcombine.low %v3015, %v3022
    %v3026 = vunpack.c.l.s4 1966171168
    %v3027 = vunpack.c.0.s8 %v3026
    %v3028 = vlaneseq
    %v3029 = vshrl.u32 %v3028, 7
    %v3030 = vsub.s32 %v3027, %v3029
    %v3031 = vrot.slane %v3023, %v3030
    %v3033 = vunpack.c.l.s4 1966171168
    %v3034 = vunpack.c.0.s8 %v3033
    %v3035 = vlaneseq
    %v3036 = vshrl.u32 %v3035, 7
    %v3037 = vsub.s32 %v3034, %v3036
    %v3038 = vrot.slane %v3024, %v3037
    %v3039 = vcombine.low %v3031, %v3038
    %v3040 = vcombine.low %v1798, %v1802
    %v3041 = vcombine.low %v1806, %v1810
    %v3042 = vcombine.low %v1814, %v1818
    %v3043 = vcombine.low %v1822, %v1826
    %v3045 = vunpack.c.l.s4 1966171168
    %v3046 = vunpack.c.0.s8 %v3045
    %v3047 = vlaneseq
    %v3048 = vshrl.u32 %v3047, 7
    %v3049 = vsub.s32 %v3046, %v3048
    %v3050 = vrot.slane %v3040, %v3049
    %v3052 = vunpack.c.l.s4 1966171168
    %v3053 = vunpack.c.0.s8 %v3052
    %v3054 = vlaneseq
    %v3055 = vshrl.u32 %v3054, 7
    %v3056 = vsub.s32 %v3053, %v3055
    %v3057 = vrot.slane %v3041, %v3056
    %v3059 = vunpack.c.l.s4 1966171168
    %v3060 = vunpack.c.0.s8 %v3059
    %v3061 = vlaneseq
    %v3062 = vshrl.u32 %v3061, 7
    %v3063 = vsub.s32 %v3060, %v3062
    %v3064 = vrot.slane %v3042, %v3063
    %v3066 = vunpack.c.l.s4 1966171168
    %v3067 = vunpack.c.0.s8 %v3066
    %v3068 = vlaneseq
    %v3069 = vshrl.u32 %v3068, 7
    %v3070 = vsub.s32 %v3067, %v3069
    %v3071 = vrot.slane %v3043, %v3070
    %v3072 = vcombine.low %v3050, %v3057
    %v3073 = vcombine.low %v3064, %v3071
    %v3075 = vunpack.c.l.s4 1966171168
    %v3076 = vunpack.c.0.s8 %v3075
    %v3077 = vlaneseq
    %v3078 = vshrl.u32 %v3077, 7
    %v3079 = vsub.s32 %v3076, %v3078
    %v3080 = vrot.slane %v3072, %v3079
    %v3082 = vunpack.c.l.s4 1966171168
    %v3083 = vunpack.c.0.s8 %v3082
    %v3084 = vlaneseq
    %v3085 = vshrl.u32 %v3084, 7
    %v3086 = vsub.s32 %v3083, %v3085
    %v3087 = vrot.slane %v3073, %v3086
    %v3088 = vcombine.low %v3080, %v3087
    %v3089 = vcombine.low %v1830, %v1834
    %v3090 = vcombine.low %v1838, %v1842
    %v3091 = vcombine.low %v1846, %v1850
    %v3092 = vcombine.low %v1854, %v1858
    %v3094 = vunpack.c.l.s4 1966171168
    %v3095 = vunpack.c.0.s8 %v3094
    %v3096 = vlaneseq
    %v3097 = vshrl.u32 %v3096, 7
    %v3098 = vsub.s32 %v3095, %v3097
    %v3099 = vrot.slane %v3089, %v3098
    %v3101 = vunpack.c.l.s4 1966171168
    %v3102 = vunpack.c.0.s8 %v3101
    %v3103 = vlaneseq
    %v3104 = vshrl.u32 %v3103, 7
    %v3105 = vsub.s32 %v3102, %v3104
    %v3106 = vrot.slane %v3090, %v3105
    %v3108 = vunpack.c.l.s4 1966171168
    %v3109 = vunpack.c.0.s8 %v3108
    %v3110 = vlaneseq
    %v3111 = vshrl.u32 %v3110, 7
    %v3112 = vsub.s32 %v3109, %v3111
    %v3113 = vrot.slane %v3091, %v3112
    %v3115 = vunpack.c.l.s4 1966171168
    %v3116 = vunpack.c.0.s8 %v3115
    %v3117 = vlaneseq
    %v3118 = vshrl.u32 %v3117, 7
    %v3119 = vsub.s32 %v3116, %v3118
    %v3120 = vrot.slane %v3092, %v3119
    %v3121 = vcombine.low %v3099, %v3106
    %v3122 = vcombine.low %v3113, %v3120
    %v3124 = vunpack.c.l.s4 1966171168
    %v3125 = vunpack.c.0.s8 %v3124
    %v3126 = vlaneseq
    %v3127 = vshrl.u32 %v3126, 7
    %v3128 = vsub.s32 %v3125, %v3127
    %v3129 = vrot.slane %v3121, %v3128
    %v3131 = vunpack.c.l.s4 1966171168
    %v3132 = vunpack.c.0.s8 %v3131
    %v3133 = vlaneseq
    %v3134 = vshrl.u32 %v3133, 7
    %v3135 = vsub.s32 %v3132, %v3134
    %v3136 = vrot.slane %v3122, %v3135
    %v3137 = vcombine.low %v3129, %v3136
    %v3138 = vcombine.low %v1862, %v1866
    %v3139 = vcombine.low %v1870, %v1874
    %v3140 = vcombine.low %v1878, %v1882
    %v3141 = vcombine.low %v1886, %v1890
    %v3143 = vunpack.c.l.s4 1966171168
    %v3144 = vunpack.c.0.s8 %v3143
    %v3145 = vlaneseq
    %v3146 = vshrl.u32 %v3145, 7
    %v3147 = vsub.s32 %v3144, %v3146
    %v3148 = vrot.slane %v3138, %v3147
    %v3150 = vunpack.c.l.s4 1966171168
    %v3151 = vunpack.c.0.s8 %v3150
    %v3152 = vlaneseq
    %v3153 = vshrl.u32 %v3152, 7
    %v3154 = vsub.s32 %v3151, %v3153
    %v3155 = vrot.slane %v3139, %v3154
    %v3157 = vunpack.c.l.s4 1966171168
    %v3158 = vunpack.c.0.s8 %v3157
    %v3159 = vlaneseq
    %v3160 = vshrl.u32 %v3159, 7
    %v3161 = vsub.s32 %v3158, %v3160
    %v3162 = vrot.slane %v3140, %v3161
    %v3164 = vunpack.c.l.s4 1966171168
    %v3165 = vunpack.c.0.s8 %v3164
    %v3166 = vlaneseq
    %v3167 = vshrl.u32 %v3166, 7
    %v3168 = vsub.s32 %v3165, %v3167
    %v3169 = vrot.slane %v3141, %v3168
    %v3170 = vcombine.low %v3148, %v3155
    %v3171 = vcombine.low %v3162, %v3169
    %v3173 = vunpack.c.l.s4 1966171168
    %v3174 = vunpack.c.0.s8 %v3173
    %v3175 = vlaneseq
    %v3176 = vshrl.u32 %v3175, 7
    %v3177 = vsub.s32 %v3174, %v3176
    %v3178 = vrot.slane %v3170, %v3177
    %v3180 = vunpack.c.l.s4 1966171168
    %v3181 = vunpack.c.0.s8 %v3180
    %v3182 = vlaneseq
    %v3183 = vshrl.u32 %v3182, 7
    %v3184 = vsub.s32 %v3181, %v3183
    %v3185 = vrot.slane %v3171, %v3184
    %v3186 = vcombine.low %v3178, %v3185
    %v3187 = vcombine.low %v1894, %v1898
    %v3188 = vcombine.low %v1902, %v1906
    %v3189 = vcombine.low %v1910, %v1914
    %v3190 = vcombine.low %v1918, %v1922
    %v3192 = vunpack.c.l.s4 1966171168
    %v3193 = vunpack.c.0.s8 %v3192
    %v3194 = vlaneseq
    %v3195 = vshrl.u32 %v3194, 7
    %v3196 = vsub.s32 %v3193, %v3195
    %v3197 = vrot.slane %v3187, %v3196
    %v3199 = vunpack.c.l.s4 1966171168
    %v3200 = vunpack.c.0.s8 %v3199
    %v3201 = vlaneseq
    %v3202 = vshrl.u32 %v3201, 7
    %v3203 = vsub.s32 %v3200, %v3202
    %v3204 = vrot.slane %v3188, %v3203
    %v3206 = vunpack.c.l.s4 1966171168
    %v3207 = vunpack.c.0.s8 %v3206
    %v3208 = vlaneseq
    %v3209 = vshrl.u32 %v3208, 7
    %v3210 = vsub.s32 %v3207, %v3209
    %v3211 = vrot.slane %v3189, %v3210
    %v3213 = vunpack.c.l.s4 1966171168
    %v3214 = vunpack.c.0.s8 %v3213
    %v3215 = vlaneseq
    %v3216 = vshrl.u32 %v3215, 7
    %v3217 = vsub.s32 %v3214, %v3216
    %v3218 = vrot.slane %v3190, %v3217
    %v3219 = vcombine.low %v3197, %v3204
    %v3220 = vcombine.low %v3211, %v3218
    %v3222 = vunpack.c.l.s4 1966171168
    %v3223 = vunpack.c.0.s8 %v3222
    %v3224 = vlaneseq
    %v3225 = vshrl.u32 %v3224, 7
    %v3226 = vsub.s32 %v3223, %v3225
    %v3227 = vrot.slane %v3219, %v3226
    %v3229 = vunpack.c.l.s4 1966171168
    %v3230 = vunpack.c.0.s8 %v3229
    %v3231 = vlaneseq
    %v3232 = vshrl.u32 %v3231, 7
    %v3233 = vsub.s32 %v3230, %v3232
    %v3234 = vrot.slane %v3220, %v3233
    %v3235 = vcombine.low %v3227, %v3234
    %v3236 = vcombine.low %v1926, %v1930
    %v3237 = vcombine.low %v1934, %v1938
    %v3238 = vcombine.low %v1942, %v1946
    %v3239 = vcombine.low %v1950, %v1954
    %v3241 = vunpack.c.l.s4 1966171168
    %v3242 = vunpack.c.0.s8 %v3241
    %v3243 = vlaneseq
    %v3244 = vshrl.u32 %v3243, 7
    %v3245 = vsub.s32 %v3242, %v3244
    %v3246 = vrot.slane %v3236, %v3245
    %v3248 = vunpack.c.l.s4 1966171168
    %v3249 = vunpack.c.0.s8 %v3248
    %v3250 = vlaneseq
    %v3251 = vshrl.u32 %v3250, 7
    %v3252 = vsub.s32 %v3249, %v3251
    %v3253 = vrot.slane %v3237, %v3252
    %v3255 = vunpack.c.l.s4 1966171168
    %v3256 = vunpack.c.0.s8 %v3255
    %v3257 = vlaneseq
    %v3258 = vshrl.u32 %v3257, 7
    %v3259 = vsub.s32 %v3256, %v3258
    %v3260 = vrot.slane %v3238, %v3259
    %v3262 = vunpack.c.l.s4 1966171168
    %v3263 = vunpack.c.0.s8 %v3262
    %v3264 = vlaneseq
    %v3265 = vshrl.u32 %v3264, 7
    %v3266 = vsub.s32 %v3263, %v3265
    %v3267 = vrot.slane %v3239, %v3266
    %v3268 = vcombine.low %v3246, %v3253
    %v3269 = vcombine.low %v3260, %v3267
    %v3271 = vunpack.c.l.s4 1966171168
    %v3272 = vunpack.c.0.s8 %v3271
    %v3273 = vlaneseq
    %v3274 = vshrl.u32 %v3273, 7
    %v3275 = vsub.s32 %v3272, %v3274
    %v3276 = vrot.slane %v3268, %v3275
    %v3278 = vunpack.c.l.s4 1966171168
    %v3279 = vunpack.c.0.s8 %v3278
    %v3280 = vlaneseq
    %v3281 = vshrl.u32 %v3280, 7
    %v3282 = vsub.s32 %v3279, %v3281
    %v3283 = vrot.slane %v3269, %v3282
    %v3284 = vcombine.low %v3276, %v3283
    %v3285 = vcombine.low %v1958, %v1962
    %v3286 = vcombine.low %v1966, %v1970
    %v3287 = vcombine.low %v1974, %v1978
    %v3288 = vcombine.low %v1982, %v1986
    %v3290 = vunpack.c.l.s4 1966171168
    %v3291 = vunpack.c.0.s8 %v3290
    %v3292 = vlaneseq
    %v3293 = vshrl.u32 %v3292, 7
    %v3294 = vsub.s32 %v3291, %v3293
    %v3295 = vrot.slane %v3285, %v3294
    %v3297 = vunpack.c.l.s4 1966171168
    %v3298 = vunpack.c.0.s8 %v3297
    %v3299 = vlaneseq
    %v3300 = vshrl.u32 %v3299, 7
    %v3301 = vsub.s32 %v3298, %v3300
    %v3302 = vrot.slane %v3286, %v3301
    %v3304 = vunpack.c.l.s4 1966171168
    %v3305 = vunpack.c.0.s8 %v3304
    %v3306 = vlaneseq
    %v3307 = vshrl.u32 %v3306, 7
    %v3308 = vsub.s32 %v3305, %v3307
    %v3309 = vrot.slane %v3287, %v3308
    %v3311 = vunpack.c.l.s4 1966171168
    %v3312 = vunpack.c.0.s8 %v3311
    %v3313 = vlaneseq
    %v3314 = vshrl.u32 %v3313, 7
    %v3315 = vsub.s32 %v3312, %v3314
    %v3316 = vrot.slane %v3288, %v3315
    %v3317 = vcombine.low %v3295, %v3302
    %v3318 = vcombine.low %v3309, %v3316
    %v3320 = vunpack.c.l.s4 1966171168
    %v3321 = vunpack.c.0.s8 %v3320
    %v3322 = vlaneseq
    %v3323 = vshrl.u32 %v3322, 7
    %v3324 = vsub.s32 %v3321, %v3323
    %v3325 = vrot.slane %v3317, %v3324
    %v3327 = vunpack.c.l.s4 1966171168
    %v3328 = vunpack.c.0.s8 %v3327
    %v3329 = vlaneseq
    %v3330 = vshrl.u32 %v3329, 7
    %v3331 = vsub.s32 %v3328, %v3330
    %v3332 = vrot.slane %v3318, %v3331
    %v3333 = vcombine.low %v3325, %v3332
    %v3334 = vcombine.low %v1990, %v1994
    %v3335 = vcombine.low %v1998, %v2002
    %v3336 = vcombine.low %v2006, %v2010
    %v3337 = vcombine.low %v2014, %v2018
    %v3339 = vunpack.c.l.s4 1966171168
    %v3340 = vunpack.c.0.s8 %v3339
    %v3341 = vlaneseq
    %v3342 = vshrl.u32 %v3341, 7
    %v3343 = vsub.s32 %v3340, %v3342
    %v3344 = vrot.slane %v3334, %v3343
    %v3346 = vunpack.c.l.s4 1966171168
    %v3347 = vunpack.c.0.s8 %v3346
    %v3348 = vlaneseq
    %v3349 = vshrl.u32 %v3348, 7
    %v3350 = vsub.s32 %v3347, %v3349
    %v3351 = vrot.slane %v3335, %v3350
    %v3353 = vunpack.c.l.s4 1966171168
    %v3354 = vunpack.c.0.s8 %v3353
    %v3355 = vlaneseq
    %v3356 = vshrl.u32 %v3355, 7
    %v3357 = vsub.s32 %v3354, %v3356
    %v3358 = vrot.slane %v3336, %v3357
    %v3360 = vunpack.c.l.s4 1966171168
    %v3361 = vunpack.c.0.s8 %v3360
    %v3362 = vlaneseq
    %v3363 = vshrl.u32 %v3362, 7
    %v3364 = vsub.s32 %v3361, %v3363
    %v3365 = vrot.slane %v3337, %v3364
    %v3366 = vcombine.low %v3344, %v3351
    %v3367 = vcombine.low %v3358, %v3365
    %v3369 = vunpack.c.l.s4 1966171168
    %v3370 = vunpack.c.0.s8 %v3369
    %v3371 = vlaneseq
    %v3372 = vshrl.u32 %v3371, 7
    %v3373 = vsub.s32 %v3370, %v3372
    %v3374 = vrot.slane %v3366, %v3373
    %v3376 = vunpack.c.l.s4 1966171168
    %v3377 = vunpack.c.0.s8 %v3376
    %v3378 = vlaneseq
    %v3379 = vshrl.u32 %v3378, 7
    %v3380 = vsub.s32 %v3377, %v3379
    %v3381 = vrot.slane %v3367, %v3380
    %v3382 = vcombine.low %v3374, %v3381
    %v3383 = vcombine.low %v2022, %v2026
    %v3384 = vcombine.low %v2030, %v2034
    %v3385 = vcombine.low %v2038, %v2042
    %v3386 = vcombine.low %v2046, %v2050
    %v3388 = vunpack.c.l.s4 1966171168
    %v3389 = vunpack.c.0.s8 %v3388
    %v3390 = vlaneseq
    %v3391 = vshrl.u32 %v3390, 7
    %v3392 = vsub.s32 %v3389, %v3391
    %v3393 = vrot.slane %v3383, %v3392
    %v3395 = vunpack.c.l.s4 1966171168
    %v3396 = vunpack.c.0.s8 %v3395
    %v3397 = vlaneseq
    %v3398 = vshrl.u32 %v3397, 7
    %v3399 = vsub.s32 %v3396, %v3398
    %v3400 = vrot.slane %v3384, %v3399
    %v3402 = vunpack.c.l.s4 1966171168
    %v3403 = vunpack.c.0.s8 %v3402
    %v3404 = vlaneseq
    %v3405 = vshrl.u32 %v3404, 7
    %v3406 = vsub.s32 %v3403, %v3405
    %v3407 = vrot.slane %v3385, %v3406
    %v3409 = vunpack.c.l.s4 1966171168
    %v3410 = vunpack.c.0.s8 %v3409
    %v3411 = vlaneseq
    %v3412 = vshrl.u32 %v3411, 7
    %v3413 = vsub.s32 %v3410, %v3412
    %v3414 = vrot.slane %v3386, %v3413
    %v3415 = vcombine.low %v3393, %v3400
    %v3416 = vcombine.low %v3407, %v3414
    %v3418 = vunpack.c.l.s4 1966171168
    %v3419 = vunpack.c.0.s8 %v3418
    %v3420 = vlaneseq
    %v3421 = vshrl.u32 %v3420, 7
    %v3422 = vsub.s32 %v3419, %v3421
    %v3423 = vrot.slane %v3415, %v3422
    %v3425 = vunpack.c.l.s4 1966171168
    %v3426 = vunpack.c.0.s8 %v3425
    %v3427 = vlaneseq
    %v3428 = vshrl.u32 %v3427, 7
    %v3429 = vsub.s32 %v3426, %v3428
    %v3430 = vrot.slane %v3416, %v3429
    %v3431 = vcombine.low %v3423, %v3430
    %v3432 = vcombine.low %v2054, %v2058
    %v3433 = vcombine.low %v2062, %v2066
    %v3434 = vcombine.low %v2070, %v2074
    %v3435 = vcombine.low %v2078, %v2082
    %v3437 = vunpack.c.l.s4 1966171168
    %v3438 = vunpack.c.0.s8 %v3437
    %v3439 = vlaneseq
    %v3440 = vshrl.u32 %v3439, 7
    %v3441 = vsub.s32 %v3438, %v3440
    %v3442 = vrot.slane %v3432, %v3441
    %v3444 = vunpack.c.l.s4 1966171168
    %v3445 = vunpack.c.0.s8 %v3444
    %v3446 = vlaneseq
    %v3447 = vshrl.u32 %v3446, 7
    %v3448 = vsub.s32 %v3445, %v3447
    %v3449 = vrot.slane %v3433, %v3448
    %v3451 = vunpack.c.l.s4 1966171168
    %v3452 = vunpack.c.0.s8 %v3451
    %v3453 = vlaneseq
    %v3454 = vshrl.u32 %v3453, 7
    %v3455 = vsub.s32 %v3452, %v3454
    %v3456 = vrot.slane %v3434, %v3455
    %v3458 = vunpack.c.l.s4 1966171168
    %v3459 = vunpack.c.0.s8 %v3458
    %v3460 = vlaneseq
    %v3461 = vshrl.u32 %v3460, 7
    %v3462 = vsub.s32 %v3459, %v3461
    %v3463 = vrot.slane %v3435, %v3462
    %v3464 = vcombine.low %v3442, %v3449
    %v3465 = vcombine.low %v3456, %v3463
    %v3467 = vunpack.c.l.s4 1966171168
    %v3468 = vunpack.c.0.s8 %v3467
    %v3469 = vlaneseq
    %v3470 = vshrl.u32 %v3469, 7
    %v3471 = vsub.s32 %v3468, %v3470
    %v3472 = vrot.slane %v3464, %v3471
    %v3474 = vunpack.c.l.s4 1966171168
    %v3475 = vunpack.c.0.s8 %v3474
    %v3476 = vlaneseq
    %v3477 = vshrl.u32 %v3476, 7
    %v3478 = vsub.s32 %v3475, %v3477
    %v3479 = vrot.slane %v3465, %v3478
    %v3480 = vcombine.low %v3472, %v3479
    %v3481 = vcombine.low %v2086, %v2090
    %v3482 = vcombine.low %v2094, %v2098
    %v3483 = vcombine.low %v2102, %v2106
    %v3484 = vcombine.low %v2110, %v2114
    %v3486 = vunpack.c.l.s4 1966171168
    %v3487 = vunpack.c.0.s8 %v3486
    %v3488 = vlaneseq
    %v3489 = vshrl.u32 %v3488, 7
    %v3490 = vsub.s32 %v3487, %v3489
    %v3491 = vrot.slane %v3481, %v3490
    %v3493 = vunpack.c.l.s4 1966171168
    %v3494 = vunpack.c.0.s8 %v3493
    %v3495 = vlaneseq
    %v3496 = vshrl.u32 %v3495, 7
    %v3497 = vsub.s32 %v3494, %v3496
    %v3498 = vrot.slane %v3482, %v3497
    %v3500 = vunpack.c.l.s4 1966171168
    %v3501 = vunpack.c.0.s8 %v3500
    %v3502 = vlaneseq
    %v3503 = vshrl.u32 %v3502, 7
    %v3504 = vsub.s32 %v3501, %v3503
    %v3505 = vrot.slane %v3483, %v3504
    %v3507 = vunpack.c.l.s4 1966171168
    %v3508 = vunpack.c.0.s8 %v3507
    %v3509 = vlaneseq
    %v3510 = vshrl.u32 %v3509, 7
    %v3511 = vsub.s32 %v3508, %v3510
    %v3512 = vrot.slane %v3484, %v3511
    %v3513 = vcombine.low %v3491, %v3498
    %v3514 = vcombine.low %v3505, %v3512
    %v3516 = vunpack.c.l.s4 1966171168
    %v3517 = vunpack.c.0.s8 %v3516
    %v3518 = vlaneseq
    %v3519 = vshrl.u32 %v3518, 7
    %v3520 = vsub.s32 %v3517, %v3519
    %v3521 = vrot.slane %v3513, %v3520
    %v3523 = vunpack.c.l.s4 1966171168
    %v3524 = vunpack.c.0.s8 %v3523
    %v3525 = vlaneseq
    %v3526 = vshrl.u32 %v3525, 7
    %v3527 = vsub.s32 %v3524, %v3526
    %v3528 = vrot.slane %v3514, %v3527
    %v3529 = vcombine.low %v3521, %v3528
    %v3530 = vcombine.low %v2118, %v2122
    %v3531 = vcombine.low %v2126, %v2130
    %v3532 = vcombine.low %v2134, %v2138
    %v3533 = vcombine.low %v2142, %v2146
    %v3535 = vunpack.c.l.s4 1966171168
    %v3536 = vunpack.c.0.s8 %v3535
    %v3537 = vlaneseq
    %v3538 = vshrl.u32 %v3537, 7
    %v3539 = vsub.s32 %v3536, %v3538
    %v3540 = vrot.slane %v3530, %v3539
    %v3542 = vunpack.c.l.s4 1966171168
    %v3543 = vunpack.c.0.s8 %v3542
    %v3544 = vlaneseq
    %v3545 = vshrl.u32 %v3544, 7
    %v3546 = vsub.s32 %v3543, %v3545
    %v3547 = vrot.slane %v3531, %v3546
    %v3549 = vunpack.c.l.s4 1966171168
    %v3550 = vunpack.c.0.s8 %v3549
    %v3551 = vlaneseq
    %v3552 = vshrl.u32 %v3551, 7
    %v3553 = vsub.s32 %v3550, %v3552
    %v3554 = vrot.slane %v3532, %v3553
    %v3556 = vunpack.c.l.s4 1966171168
    %v3557 = vunpack.c.0.s8 %v3556
    %v3558 = vlaneseq
    %v3559 = vshrl.u32 %v3558, 7
    %v3560 = vsub.s32 %v3557, %v3559
    %v3561 = vrot.slane %v3533, %v3560
    %v3562 = vcombine.low %v3540, %v3547
    %v3563 = vcombine.low %v3554, %v3561
    %v3565 = vunpack.c.l.s4 1966171168
    %v3566 = vunpack.c.0.s8 %v3565
    %v3567 = vlaneseq
    %v3568 = vshrl.u32 %v3567, 7
    %v3569 = vsub.s32 %v3566, %v3568
    %v3570 = vrot.slane %v3562, %v3569
    %v3572 = vunpack.c.l.s4 1966171168
    %v3573 = vunpack.c.0.s8 %v3572
    %v3574 = vlaneseq
    %v3575 = vshrl.u32 %v3574, 7
    %v3576 = vsub.s32 %v3573, %v3575
    %v3577 = vrot.slane %v3563, %v3576
    %v3578 = vcombine.low %v3570, %v3577
    %v3579 = vcombine.low %v2150, %v2154
    %v3580 = vcombine.low %v2158, %v2162
    %v3581 = vcombine.low %v2166, %v2170
    %v3582 = vcombine.low %v2174, %v2178
    %v3584 = vunpack.c.l.s4 1966171168
    %v3585 = vunpack.c.0.s8 %v3584
    %v3586 = vlaneseq
    %v3587 = vshrl.u32 %v3586, 7
    %v3588 = vsub.s32 %v3585, %v3587
    %v3589 = vrot.slane %v3579, %v3588
    %v3591 = vunpack.c.l.s4 1966171168
    %v3592 = vunpack.c.0.s8 %v3591
    %v3593 = vlaneseq
    %v3594 = vshrl.u32 %v3593, 7
    %v3595 = vsub.s32 %v3592, %v3594
    %v3596 = vrot.slane %v3580, %v3595
    %v3598 = vunpack.c.l.s4 1966171168
    %v3599 = vunpack.c.0.s8 %v3598
    %v3600 = vlaneseq
    %v3601 = vshrl.u32 %v3600, 7
    %v3602 = vsub.s32 %v3599, %v3601
    %v3603 = vrot.slane %v3581, %v3602
    %v3605 = vunpack.c.l.s4 1966171168
    %v3606 = vunpack.c.0.s8 %v3605
    %v3607 = vlaneseq
    %v3608 = vshrl.u32 %v3607, 7
    %v3609 = vsub.s32 %v3606, %v3608
    %v3610 = vrot.slane %v3582, %v3609
    %v3611 = vcombine.low %v3589, %v3596
    %v3612 = vcombine.low %v3603, %v3610
    %v3614 = vunpack.c.l.s4 1966171168
    %v3615 = vunpack.c.0.s8 %v3614
    %v3616 = vlaneseq
    %v3617 = vshrl.u32 %v3616, 7
    %v3618 = vsub.s32 %v3615, %v3617
    %v3619 = vrot.slane %v3611, %v3618
    %v3621 = vunpack.c.l.s4 1966171168
    %v3622 = vunpack.c.0.s8 %v3621
    %v3623 = vlaneseq
    %v3624 = vshrl.u32 %v3623, 7
    %v3625 = vsub.s32 %v3622, %v3624
    %v3626 = vrot.slane %v3612, %v3625
    %v3627 = vcombine.low %v3619, %v3626
    %v3628 = vcombine.low %v2182, %v2186
    %v3629 = vcombine.low %v2190, %v2194
    %v3630 = vcombine.low %v2198, %v2202
    %v3631 = vcombine.low %v2206, %v2210
    %v3633 = vunpack.c.l.s4 1966171168
    %v3634 = vunpack.c.0.s8 %v3633
    %v3635 = vlaneseq
    %v3636 = vshrl.u32 %v3635, 7
    %v3637 = vsub.s32 %v3634, %v3636
    %v3638 = vrot.slane %v3628, %v3637
    %v3640 = vunpack.c.l.s4 1966171168
    %v3641 = vunpack.c.0.s8 %v3640
    %v3642 = vlaneseq
    %v3643 = vshrl.u32 %v3642, 7
    %v3644 = vsub.s32 %v3641, %v3643
    %v3645 = vrot.slane %v3629, %v3644
    %v3647 = vunpack.c.l.s4 1966171168
    %v3648 = vunpack.c.0.s8 %v3647
    %v3649 = vlaneseq
    %v3650 = vshrl.u32 %v3649, 7
    %v3651 = vsub.s32 %v3648, %v3650
    %v3652 = vrot.slane %v3630, %v3651
    %v3654 = vunpack.c.l.s4 1966171168
    %v3655 = vunpack.c.0.s8 %v3654
    %v3656 = vlaneseq
    %v3657 = vshrl.u32 %v3656, 7
    %v3658 = vsub.s32 %v3655, %v3657
    %v3659 = vrot.slane %v3631, %v3658
    %v3660 = vcombine.low %v3638, %v3645
    %v3661 = vcombine.low %v3652, %v3659
    %v3663 = vunpack.c.l.s4 1966171168
    %v3664 = vunpack.c.0.s8 %v3663
    %v3665 = vlaneseq
    %v3666 = vshrl.u32 %v3665, 7
    %v3667 = vsub.s32 %v3664, %v3666
    %v3668 = vrot.slane %v3660, %v3667
    %v3670 = vunpack.c.l.s4 1966171168
    %v3671 = vunpack.c.0.s8 %v3670
    %v3672 = vlaneseq
    %v3673 = vshrl.u32 %v3672, 7
    %v3674 = vsub.s32 %v3671, %v3673
    %v3675 = vrot.slane %v3661, %v3674
    %v3676 = vcombine.low %v3668, %v3675
    %v3677 = vcombine.low %v2214, %v2218
    %v3678 = vcombine.low %v2222, %v2226
    %v3679 = vcombine.low %v2230, %v2234
    %v3680 = vcombine.low %v2238, %v2242
    %v3682 = vunpack.c.l.s4 1966171168
    %v3683 = vunpack.c.0.s8 %v3682
    %v3684 = vlaneseq
    %v3685 = vshrl.u32 %v3684, 7
    %v3686 = vsub.s32 %v3683, %v3685
    %v3687 = vrot.slane %v3677, %v3686
    %v3689 = vunpack.c.l.s4 1966171168
    %v3690 = vunpack.c.0.s8 %v3689
    %v3691 = vlaneseq
    %v3692 = vshrl.u32 %v3691, 7
    %v3693 = vsub.s32 %v3690, %v3692
    %v3694 = vrot.slane %v3678, %v3693
    %v3696 = vunpack.c.l.s4 1966171168
    %v3697 = vunpack.c.0.s8 %v3696
    %v3698 = vlaneseq
    %v3699 = vshrl.u32 %v3698, 7
    %v3700 = vsub.s32 %v3697, %v3699
    %v3701 = vrot.slane %v3679, %v3700
    %v3703 = vunpack.c.l.s4 1966171168
    %v3704 = vunpack.c.0.s8 %v3703
    %v3705 = vlaneseq
    %v3706 = vshrl.u32 %v3705, 7
    %v3707 = vsub.s32 %v3704, %v3706
    %v3708 = vrot.slane %v3680, %v3707
    %v3709 = vcombine.low %v3687, %v3694
    %v3710 = vcombine.low %v3701, %v3708
    %v3712 = vunpack.c.l.s4 1966171168
    %v3713 = vunpack.c.0.s8 %v3712
    %v3714 = vlaneseq
    %v3715 = vshrl.u32 %v3714, 7
    %v3716 = vsub.s32 %v3713, %v3715
    %v3717 = vrot.slane %v3709, %v3716
    %v3719 = vunpack.c.l.s4 1966171168
    %v3720 = vunpack.c.0.s8 %v3719
    %v3721 = vlaneseq
    %v3722 = vshrl.u32 %v3721, 7
    %v3723 = vsub.s32 %v3720, %v3722
    %v3724 = vrot.slane %v3710, %v3723
    %v3725 = vcombine.low %v3717, %v3724
    %v3726 = vcombine.low %v2246, %v2250
    %v3727 = vcombine.low %v2254, %v2258
    %v3728 = vcombine.low %v2262, %v2266
    %v3729 = vcombine.low %v2270, %v2274
    %v3731 = vunpack.c.l.s4 1966171168
    %v3732 = vunpack.c.0.s8 %v3731
    %v3733 = vlaneseq
    %v3734 = vshrl.u32 %v3733, 7
    %v3735 = vsub.s32 %v3732, %v3734
    %v3736 = vrot.slane %v3726, %v3735
    %v3738 = vunpack.c.l.s4 1966171168
    %v3739 = vunpack.c.0.s8 %v3738
    %v3740 = vlaneseq
    %v3741 = vshrl.u32 %v3740, 7
    %v3742 = vsub.s32 %v3739, %v3741
    %v3743 = vrot.slane %v3727, %v3742
    %v3745 = vunpack.c.l.s4 1966171168
    %v3746 = vunpack.c.0.s8 %v3745
    %v3747 = vlaneseq
    %v3748 = vshrl.u32 %v3747, 7
    %v3749 = vsub.s32 %v3746, %v3748
    %v3750 = vrot.slane %v3728, %v3749
    %v3752 = vunpack.c.l.s4 1966171168
    %v3753 = vunpack.c.0.s8 %v3752
    %v3754 = vlaneseq
    %v3755 = vshrl.u32 %v3754, 7
    %v3756 = vsub.s32 %v3753, %v3755
    %v3757 = vrot.slane %v3729, %v3756
    %v3758 = vcombine.low %v3736, %v3743
    %v3759 = vcombine.low %v3750, %v3757
    %v3761 = vunpack.c.l.s4 1966171168
    %v3762 = vunpack.c.0.s8 %v3761
    %v3763 = vlaneseq
    %v3764 = vshrl.u32 %v3763, 7
    %v3765 = vsub.s32 %v3762, %v3764
    %v3766 = vrot.slane %v3758, %v3765
    %v3768 = vunpack.c.l.s4 1966171168
    %v3769 = vunpack.c.0.s8 %v3768
    %v3770 = vlaneseq
    %v3771 = vshrl.u32 %v3770, 7
    %v3772 = vsub.s32 %v3769, %v3771
    %v3773 = vrot.slane %v3759, %v3772
    %v3774 = vcombine.low %v3766, %v3773
    %v3775 = vcombine.low %v2278, %v2282
    %v3776 = vcombine.low %v2286, %v2290
    %v3777 = vcombine.low %v2294, %v2298
    %v3778 = vcombine.low %v2302, %v2306
    %v3780 = vunpack.c.l.s4 1966171168
    %v3781 = vunpack.c.0.s8 %v3780
    %v3782 = vlaneseq
    %v3783 = vshrl.u32 %v3782, 7
    %v3784 = vsub.s32 %v3781, %v3783
    %v3785 = vrot.slane %v3775, %v3784
    %v3787 = vunpack.c.l.s4 1966171168
    %v3788 = vunpack.c.0.s8 %v3787
    %v3789 = vlaneseq
    %v3790 = vshrl.u32 %v3789, 7
    %v3791 = vsub.s32 %v3788, %v3790
    %v3792 = vrot.slane %v3776, %v3791
    %v3794 = vunpack.c.l.s4 1966171168
    %v3795 = vunpack.c.0.s8 %v3794
    %v3796 = vlaneseq
    %v3797 = vshrl.u32 %v3796, 7
    %v3798 = vsub.s32 %v3795, %v3797
    %v3799 = vrot.slane %v3777, %v3798
    %v3801 = vunpack.c.l.s4 1966171168
    %v3802 = vunpack.c.0.s8 %v3801
    %v3803 = vlaneseq
    %v3804 = vshrl.u32 %v3803, 7
    %v3805 = vsub.s32 %v3802, %v3804
    %v3806 = vrot.slane %v3778, %v3805
    %v3807 = vcombine.low %v3785, %v3792
    %v3808 = vcombine.low %v3799, %v3806
    %v3810 = vunpack.c.l.s4 1966171168
    %v3811 = vunpack.c.0.s8 %v3810
    %v3812 = vlaneseq
    %v3813 = vshrl.u32 %v3812, 7
    %v3814 = vsub.s32 %v3811, %v3813
    %v3815 = vrot.slane %v3807, %v3814
    %v3817 = vunpack.c.l.s4 1966171168
    %v3818 = vunpack.c.0.s8 %v3817
    %v3819 = vlaneseq
    %v3820 = vshrl.u32 %v3819, 7
    %v3821 = vsub.s32 %v3818, %v3820
    %v3822 = vrot.slane %v3808, %v3821
    %v3823 = vcombine.low %v3815, %v3822
    %v3824 = vcombine.low %v2310, %v2314
    %v3825 = vcombine.low %v2318, %v2322
    %v3826 = vcombine.low %v2326, %v2330
    %v3827 = vcombine.low %v2334, %v2338
    %v3829 = vunpack.c.l.s4 1966171168
    %v3830 = vunpack.c.0.s8 %v3829
    %v3831 = vlaneseq
    %v3832 = vshrl.u32 %v3831, 7
    %v3833 = vsub.s32 %v3830, %v3832
    %v3834 = vrot.slane %v3824, %v3833
    %v3836 = vunpack.c.l.s4 1966171168
    %v3837 = vunpack.c.0.s8 %v3836
    %v3838 = vlaneseq
    %v3839 = vshrl.u32 %v3838, 7
    %v3840 = vsub.s32 %v3837, %v3839
    %v3841 = vrot.slane %v3825, %v3840
    %v3843 = vunpack.c.l.s4 1966171168
    %v3844 = vunpack.c.0.s8 %v3843
    %v3845 = vlaneseq
    %v3846 = vshrl.u32 %v3845, 7
    %v3847 = vsub.s32 %v3844, %v3846
    %v3848 = vrot.slane %v3826, %v3847
    %v3850 = vunpack.c.l.s4 1966171168
    %v3851 = vunpack.c.0.s8 %v3850
    %v3852 = vlaneseq
    %v3853 = vshrl.u32 %v3852, 7
    %v3854 = vsub.s32 %v3851, %v3853
    %v3855 = vrot.slane %v3827, %v3854
    %v3856 = vcombine.low %v3834, %v3841
    %v3857 = vcombine.low %v3848, %v3855
    %v3859 = vunpack.c.l.s4 1966171168
    %v3860 = vunpack.c.0.s8 %v3859
    %v3861 = vlaneseq
    %v3862 = vshrl.u32 %v3861, 7
    %v3863 = vsub.s32 %v3860, %v3862
    %v3864 = vrot.slane %v3856, %v3863
    %v3866 = vunpack.c.l.s4 1966171168
    %v3867 = vunpack.c.0.s8 %v3866
    %v3868 = vlaneseq
    %v3869 = vshrl.u32 %v3868, 7
    %v3870 = vsub.s32 %v3867, %v3869
    %v3871 = vrot.slane %v3857, %v3870
    %v3872 = vcombine.low %v3864, %v3871
    %v3873 = vcombine.low %v2342, %v2346
    %v3874 = vcombine.low %v2350, %v2354
    %v3875 = vcombine.low %v2358, %v2362
    %v3876 = vcombine.low %v2366, %v2370
    %v3878 = vunpack.c.l.s4 1966171168
    %v3879 = vunpack.c.0.s8 %v3878
    %v3880 = vlaneseq
    %v3881 = vshrl.u32 %v3880, 7
    %v3882 = vsub.s32 %v3879, %v3881
    %v3883 = vrot.slane %v3873, %v3882
    %v3885 = vunpack.c.l.s4 1966171168
    %v3886 = vunpack.c.0.s8 %v3885
    %v3887 = vlaneseq
    %v3888 = vshrl.u32 %v3887, 7
    %v3889 = vsub.s32 %v3886, %v3888
    %v3890 = vrot.slane %v3874, %v3889
    %v3892 = vunpack.c.l.s4 1966171168
    %v3893 = vunpack.c.0.s8 %v3892
    %v3894 = vlaneseq
    %v3895 = vshrl.u32 %v3894, 7
    %v3896 = vsub.s32 %v3893, %v3895
    %v3897 = vrot.slane %v3875, %v3896
    %v3899 = vunpack.c.l.s4 1966171168
    %v3900 = vunpack.c.0.s8 %v3899
    %v3901 = vlaneseq
    %v3902 = vshrl.u32 %v3901, 7
    %v3903 = vsub.s32 %v3900, %v3902
    %v3904 = vrot.slane %v3876, %v3903
    %v3905 = vcombine.low %v3883, %v3890
    %v3906 = vcombine.low %v3897, %v3904
    %v3908 = vunpack.c.l.s4 1966171168
    %v3909 = vunpack.c.0.s8 %v3908
    %v3910 = vlaneseq
    %v3911 = vshrl.u32 %v3910, 7
    %v3912 = vsub.s32 %v3909, %v3911
    %v3913 = vrot.slane %v3905, %v3912
    %v3915 = vunpack.c.l.s4 1966171168
    %v3916 = vunpack.c.0.s8 %v3915
    %v3917 = vlaneseq
    %v3918 = vshrl.u32 %v3917, 7
    %v3919 = vsub.s32 %v3916, %v3918
    %v3920 = vrot.slane %v3906, %v3919
    %v3921 = vcombine.low %v3913, %v3920
    %v3922 = vcombine.low %v2374, %v2378
    %v3923 = vcombine.low %v2382, %v2386
    %v3924 = vcombine.low %v2390, %v2394
    %v3925 = vcombine.low %v2398, %v2402
    %v3927 = vunpack.c.l.s4 1966171168
    %v3928 = vunpack.c.0.s8 %v3927
    %v3929 = vlaneseq
    %v3930 = vshrl.u32 %v3929, 7
    %v3931 = vsub.s32 %v3928, %v3930
    %v3932 = vrot.slane %v3922, %v3931
    %v3934 = vunpack.c.l.s4 1966171168
    %v3935 = vunpack.c.0.s8 %v3934
    %v3936 = vlaneseq
    %v3937 = vshrl.u32 %v3936, 7
    %v3938 = vsub.s32 %v3935, %v3937
    %v3939 = vrot.slane %v3923, %v3938
    %v3941 = vunpack.c.l.s4 1966171168
    %v3942 = vunpack.c.0.s8 %v3941
    %v3943 = vlaneseq
    %v3944 = vshrl.u32 %v3943, 7
    %v3945 = vsub.s32 %v3942, %v3944
    %v3946 = vrot.slane %v3924, %v3945
    %v3948 = vunpack.c.l.s4 1966171168
    %v3949 = vunpack.c.0.s8 %v3948
    %v3950 = vlaneseq
    %v3951 = vshrl.u32 %v3950, 7
    %v3952 = vsub.s32 %v3949, %v3951
    %v3953 = vrot.slane %v3925, %v3952
    %v3954 = vcombine.low %v3932, %v3939
    %v3955 = vcombine.low %v3946, %v3953
    %v3957 = vunpack.c.l.s4 1966171168
    %v3958 = vunpack.c.0.s8 %v3957
    %v3959 = vlaneseq
    %v3960 = vshrl.u32 %v3959, 7
    %v3961 = vsub.s32 %v3958, %v3960
    %v3962 = vrot.slane %v3954, %v3961
    %v3964 = vunpack.c.l.s4 1966171168
    %v3965 = vunpack.c.0.s8 %v3964
    %v3966 = vlaneseq
    %v3967 = vshrl.u32 %v3966, 7
    %v3968 = vsub.s32 %v3965, %v3967
    %v3969 = vrot.slane %v3955, %v3968
    %v3970 = vcombine.low %v3962, %v3969
    %3971 = vset.pattern.permute.xlu0 0
    %3972 = vperm.xlu0 %3971, %v2451
    %v3973 = vpop.permute.xlu0 %3972
    %3974 = vset.pattern.permute.xlu0 0
    %3975 = vperm.xlu0 %3974, %v2500
    %v3976 = vpop.permute.xlu0 %3975
    %3977 = vset.pattern.permute.xlu0 0
    %3978 = vperm.xlu0 %3977, %v2549
    %v3979 = vpop.permute.xlu0 %3978
    %3980 = vset.pattern.permute.xlu0 0
    %3981 = vperm.xlu0 %3980, %v2598
    %v3982 = vpop.permute.xlu0 %3981
    %3983 = vset.pattern.permute.xlu0 0
    %3984 = vperm.xlu0 %3983, %v2647
    %v3985 = vpop.permute.xlu0 %3984
    %3986 = vset.pattern.permute.xlu0 0
    %3987 = vperm.xlu0 %3986, %v2696
    %v3988 = vpop.permute.xlu0 %3987
    %3989 = vset.pattern.permute.xlu0 0
    %3990 = vperm.xlu0 %3989, %v2745
    %v3991 = vpop.permute.xlu0 %3990
    %3992 = vset.pattern.permute.xlu0 0
    %3993 = vperm.xlu0 %3992, %v2794
    %v3994 = vpop.permute.xlu0 %3993
    %3995 = vset.pattern.permute.xlu0 0
    %3996 = vperm.xlu0 %3995, %v2843
    %v3997 = vpop.permute.xlu0 %3996
    %3998 = vset.pattern.permute.xlu0 0
    %3999 = vperm.xlu0 %3998, %v2892
    %v4000 = vpop.permute.xlu0 %3999
    %4001 = vset.pattern.permute.xlu0 0
    %4002 = vperm.xlu0 %4001, %v2941
    %v4003 = vpop.permute.xlu0 %4002
    %4004 = vset.pattern.permute.xlu0 0
    %4005 = vperm.xlu0 %4004, %v2990
    %v4006 = vpop.permute.xlu0 %4005
    %4007 = vset.pattern.permute.xlu0 0
    %4008 = vperm.xlu0 %4007, %v3039
    %v4009 = vpop.permute.xlu0 %4008
    %4010 = vset.pattern.permute.xlu0 0
    %4011 = vperm.xlu0 %4010, %v3088
    %v4012 = vpop.permute.xlu0 %4011
    %4013 = vset.pattern.permute.xlu0 0
    %4014 = vperm.xlu0 %4013, %v3137
    %v4015 = vpop.permute.xlu0 %4014
    %4016 = vset.pattern.permute.xlu0 0
    %4017 = vperm.xlu0 %4016, %v3186
    %v4018 = vpop.permute.xlu0 %4017
    %4019 = vset.pattern.permute.xlu0 0
    %4020 = vperm.xlu0 %4019, %v3235
    %v4021 = vpop.permute.xlu0 %4020
    %4022 = vset.pattern.permute.xlu0 0
    %4023 = vperm.xlu0 %4022, %v3284
    %v4024 = vpop.permute.xlu0 %4023
    %4025 = vset.pattern.permute.xlu0 0
    %4026 = vperm.xlu0 %4025, %v3333
    %v4027 = vpop.permute.xlu0 %4026
    %4028 = vset.pattern.permute.xlu0 0
    %4029 = vperm.xlu0 %4028, %v3382
    %v4030 = vpop.permute.xlu0 %4029
    %4031 = vset.pattern.permute.xlu0 0
    %4032 = vperm.xlu0 %4031, %v3431
    %v4033 = vpop.permute.xlu0 %4032
    %4034 = vset.pattern.permute.xlu0 0
    %4035 = vperm.xlu0 %4034, %v3480
    %v4036 = vpop.permute.xlu0 %4035
    %4037 = vset.pattern.permute.xlu0 0
    %4038 = vperm.xlu0 %4037, %v3529
    %v4039 = vpop.permute.xlu0 %4038
    %4040 = vset.pattern.permute.xlu0 0
    %4041 = vperm.xlu0 %4040, %v3578
    %v4042 = vpop.permute.xlu0 %4041
    %4043 = vset.pattern.permute.xlu0 0
    %4044 = vperm.xlu0 %4043, %v3627
    %v4045 = vpop.permute.xlu0 %4044
    %4046 = vset.pattern.permute.xlu0 0
    %4047 = vperm.xlu0 %4046, %v3676
    %v4048 = vpop.permute.xlu0 %4047
    %4049 = vset.pattern.permute.xlu0 0
    %4050 = vperm.xlu0 %4049, %v3725
    %v4051 = vpop.permute.xlu0 %4050
    %4052 = vset.pattern.permute.xlu0 0
    %4053 = vperm.xlu0 %4052, %v3774
    %v4054 = vpop.permute.xlu0 %4053
    %4055 = vset.pattern.permute.xlu0 0
    %4056 = vperm.xlu0 %4055, %v3823
    %v4057 = vpop.permute.xlu0 %4056
    %4058 = vset.pattern.permute.xlu0 0
    %4059 = vperm.xlu0 %4058, %v3872
    %v4060 = vpop.permute.xlu0 %4059
    %4061 = vset.pattern.permute.xlu0 0
    %4062 = vperm.xlu0 %4061, %v3921
    %v4063 = vpop.permute.xlu0 %4062
    %4064 = vset.pattern.permute.xlu0 0
    %4065 = vperm.xlu0 %4064, %v3970
    %v4066 = vpop.permute.xlu0 %4065
    %v4067 = vlaneseq
    %v4068 = vand.u32 %v4067, 127
    %v4069 = vlaneseq
    %v4070 = vshrl.u32 %v4069, 7
    %v4071 = vsub.s32 %v4068, %v4070
    %v4072 = vrot.slane %v3973, %v4071
    %v4073 = vadd.s32 %v4068, 4294967288
    %v4074 = vlaneseq
    %v4075 = vshrl.u32 %v4074, 7
    %v4076 = vsub.s32 %v4073, %v4075
    %v4077 = vrot.slane %v3976, %v4076
    %vm4078 = vcmask 130112
    %v4079 = vsel %vm4078, %v4077, %v4072
    %v4080 = vadd.s32 %v4068, 4294967280
    %v4081 = vlaneseq
    %v4082 = vshrl.u32 %v4081, 7
    %v4083 = vsub.s32 %v4080, %v4082
    %v4084 = vrot.slane %v3979, %v4083
    %vm4085 = vcmask 195712
    %v4086 = vsel %vm4085, %v4084, %v4079
    %v4087 = vadd.s32 %v4068, 4294967272
    %v4088 = vlaneseq
    %v4089 = vshrl.u32 %v4088, 7
    %v4090 = vsub.s32 %v4087, %v4089
    %v4091 = vrot.slane %v3982, %v4090
    %vm4092 = vcmask 261312
    %v4093 = vsel %vm4092, %v4091, %v4086
    %v4094 = vadd.s32 %v4068, 4294967264
    %v4095 = vlaneseq
    %v4096 = vshrl.u32 %v4095, 7
    %v4097 = vsub.s32 %v4094, %v4096
    %v4098 = vrot.slane %v3985, %v4097
    %vm4099 = vcmask 326912
    %v4100 = vsel %vm4099, %v4098, %v4093
    %v4101 = vadd.s32 %v4068, 4294967256
    %v4102 = vlaneseq
    %v4103 = vshrl.u32 %v4102, 7
    %v4104 = vsub.s32 %v4101, %v4103
    %v4105 = vrot.slane %v3988, %v4104
    %vm4106 = vcmask 392512
    %v4107 = vsel %vm4106, %v4105, %v4100
    %v4108 = vadd.s32 %v4068, 4294967248
    %v4109 = vlaneseq
    %v4110 = vshrl.u32 %v4109, 7
    %v4111 = vsub.s32 %v4108, %v4110
    %v4112 = vrot.slane %v3991, %v4111
    %vm4113 = vcmask 458112
    %v4114 = vsel %vm4113, %v4112, %v4107
    %v4115 = vadd.s32 %v4068, 4294967240
    %v4116 = vlaneseq
    %v4117 = vshrl.u32 %v4116, 7
    %v4118 = vsub.s32 %v4115, %v4117
    %v4119 = vrot.slane %v3994, %v4118
    %vm4120 = vcmask 523712
    %v4121 = vsel %vm4120, %v4119, %v4114
    %v4122 = vadd.s32 %v4068, 4294967232
    %v4123 = vlaneseq
    %v4124 = vshrl.u32 %v4123, 7
    %v4125 = vsub.s32 %v4122, %v4124
    %v4126 = vrot.slane %v3997, %v4125
    %vm4127 = vcmask 589312
    %v4128 = vsel %vm4127, %v4126, %v4121
    %v4129 = vadd.s32 %v4068, 4294967224
    %v4130 = vlaneseq
    %v4131 = vshrl.u32 %v4130, 7
    %v4132 = vsub.s32 %v4129, %v4131
    %v4133 = vrot.slane %v4000, %v4132
    %vm4134 = vcmask 654912
    %v4135 = vsel %vm4134, %v4133, %v4128
    %v4136 = vadd.s32 %v4068, 4294967216
    %v4137 = vlaneseq
    %v4138 = vshrl.u32 %v4137, 7
    %v4139 = vsub.s32 %v4136, %v4138
    %v4140 = vrot.slane %v4003, %v4139
    %vm4141 = vcmask 720512
    %v4142 = vsel %vm4141, %v4140, %v4135
    %v4143 = vadd.s32 %v4068, 4294967208
    %v4144 = vlaneseq
    %v4145 = vshrl.u32 %v4144, 7
    %v4146 = vsub.s32 %v4143, %v4145
    %v4147 = vrot.slane %v4006, %v4146
    %vm4148 = vcmask 786112
    %v4149 = vsel %vm4148, %v4147, %v4142
    %v4150 = vadd.s32 %v4068, 4294967200
    %v4151 = vlaneseq
    %v4152 = vshrl.u32 %v4151, 7
    %v4153 = vsub.s32 %v4150, %v4152
    %v4154 = vrot.slane %v4009, %v4153
    %vm4155 = vcmask 851712
    %v4156 = vsel %vm4155, %v4154, %v4149
    %v4157 = vadd.s32 %v4068, 4294967192
    %v4158 = vlaneseq
    %v4159 = vshrl.u32 %v4158, 7
    %v4160 = vsub.s32 %v4157, %v4159
    %v4161 = vrot.slane %v4012, %v4160
    %vm4162 = vcmask 917312
    %v4163 = vsel %vm4162, %v4161, %v4156
    %v4164 = vadd.s32 %v4068, 4294967184
    %v4165 = vlaneseq
    %v4166 = vshrl.u32 %v4165, 7
    %v4167 = vsub.s32 %v4164, %v4166
    %v4168 = vrot.slane %v4015, %v4167
    %vm4169 = vcmask 982912
    %v4170 = vsel %vm4169, %v4168, %v4163
    %v4171 = vadd.s32 %v4068, 4294967176
    %v4172 = vlaneseq
    %v4173 = vshrl.u32 %v4172, 7
    %v4174 = vsub.s32 %v4171, %v4173
    %v4175 = vrot.slane %v4018, %v4174
    %vm4176 = vcmask 1048512
    %v4177 = vsel %vm4176, %v4175, %v4170
    %v4178 = vlaneseq
    %v4179 = vshrl.u32 %v4178, 7
    %v4180 = vsub.s32 %v4068, %v4179
    %v4181 = vrot.slane %v4021, %v4180
    %v4182 = vlaneseq
    %v4183 = vshrl.u32 %v4182, 7
    %v4184 = vsub.s32 %v4073, %v4183
    %v4185 = vrot.slane %v4024, %v4184
    %v4186 = vsel %vm4078, %v4185, %v4181
    %v4187 = vlaneseq
    %v4188 = vshrl.u32 %v4187, 7
    %v4189 = vsub.s32 %v4080, %v4188
    %v4190 = vrot.slane %v4027, %v4189
    %v4191 = vsel %vm4085, %v4190, %v4186
    %v4192 = vlaneseq
    %v4193 = vshrl.u32 %v4192, 7
    %v4194 = vsub.s32 %v4087, %v4193
    %v4195 = vrot.slane %v4030, %v4194
    %v4196 = vsel %vm4092, %v4195, %v4191
    %v4197 = vlaneseq
    %v4198 = vshrl.u32 %v4197, 7
    %v4199 = vsub.s32 %v4094, %v4198
    %v4200 = vrot.slane %v4033, %v4199
    %v4201 = vsel %vm4099, %v4200, %v4196
    %v4202 = vlaneseq
    %v4203 = vshrl.u32 %v4202, 7
    %v4204 = vsub.s32 %v4101, %v4203
    %v4205 = vrot.slane %v4036, %v4204
    %v4206 = vsel %vm4106, %v4205, %v4201
    %v4207 = vlaneseq
    %v4208 = vshrl.u32 %v4207, 7
    %v4209 = vsub.s32 %v4108, %v4208
    %v4210 = vrot.slane %v4039, %v4209
    %v4211 = vsel %vm4113, %v4210, %v4206
    %v4212 = vlaneseq
    %v4213 = vshrl.u32 %v4212, 7
    %v4214 = vsub.s32 %v4115, %v4213
    %v4215 = vrot.slane %v4042, %v4214
    %v4216 = vsel %vm4120, %v4215, %v4211
    %v4217 = vlaneseq
    %v4218 = vshrl.u32 %v4217, 7
    %v4219 = vsub.s32 %v4122, %v4218
    %v4220 = vrot.slane %v4045, %v4219
    %v4221 = vsel %vm4127, %v4220, %v4216
    %v4222 = vlaneseq
    %v4223 = vshrl.u32 %v4222, 7
    %v4224 = vsub.s32 %v4129, %v4223
    %v4225 = vrot.slane %v4048, %v4224
    %v4226 = vsel %vm4134, %v4225, %v4221
    %v4227 = vlaneseq
    %v4228 = vshrl.u32 %v4227, 7
    %v4229 = vsub.s32 %v4136, %v4228
    %v4230 = vrot.slane %v4051, %v4229
    %v4231 = vsel %vm4141, %v4230, %v4226
    %v4232 = vlaneseq
    %v4233 = vshrl.u32 %v4232, 7
    %v4234 = vsub.s32 %v4143, %v4233
    %v4235 = vrot.slane %v4054, %v4234
    %v4236 = vsel %vm4148, %v4235, %v4231
    %v4237 = vlaneseq
    %v4238 = vshrl.u32 %v4237, 7
    %v4239 = vsub.s32 %v4150, %v4238
    %v4240 = vrot.slane %v4057, %v4239
    %v4241 = vsel %vm4155, %v4240, %v4236
    %v4242 = vlaneseq
    %v4243 = vshrl.u32 %v4242, 7
    %v4244 = vsub.s32 %v4157, %v4243
    %v4245 = vrot.slane %v4060, %v4244
    %v4246 = vsel %vm4162, %v4245, %v4241
    %v4247 = vlaneseq
    %v4248 = vshrl.u32 %v4247, 7
    %v4249 = vsub.s32 %v4164, %v4248
    %v4250 = vrot.slane %v4063, %v4249
    %v4251 = vsel %vm4169, %v4250, %v4246
    %v4252 = vlaneseq
    %v4253 = vshrl.u32 %v4252, 7
    %v4254 = vsub.s32 %v4171, %v4253
    %v4255 = vrot.slane %v4066, %v4254
    %v4256 = vsel %vm4176, %v4255, %v4251
    %v4257 = vcombine.low %v4177, %v4256
    %v4259 = vunpack.c.l.s4 1966171168
    %v4260 = vunpack.c.0.s8 %v4259
    %v4261 = vlaneseq
    %v4262 = vshrl.u32 %v4261, 7
    %v4263 = vsub.s32 %v4260, %v4262
    %v4264 = vrot.slane %v4257, %v4263
    %v4266 = vunpack.c.l.s4 1966171168
    %v4267 = vunpack.c.0.s8 %v4266
    %v4268 = vlaneseq
    %v4269 = vshrl.u32 %v4268, 7
    %v4270 = vsub.s32 %v4267, %v4269
    %v4271 = vrot.slane %v4264, %v4270
    %v4273 = vlaneseq
    %vm4274 = vcmp.ge.s32.totalorder %v4273, 0
    %vm4275 = vcmp.lt.s32.totalorder %v4273, 256
    %vm4276 = vmand %vm4274, %vm4275
    %4277 = vst.msk [vmem:[#allocation3] sm:$0x3] %vm4276, %v4271
    // Predicated region
    $region30: #{v_forward.1} parent=1 // pred_check
      _
    $region31: #{v_forward.1} parent=1 // pred_check_branch
      %4279 = sbr.rel (0) target = $region33
    $region32: #{v_forward.1} parent=1 // pred_region
      %s4281 = ssub.s32 32, 32
      %4282 = vsyncadd [#allocation4], %s4281
      %s4284 = sshll.u32 [#allocation3], 4
      %s4285 = int_to_ptr.vmem [resolvable:$true] %s4284
      %4287 = dma.vmem_to_hbm [thread:$0]  %s4285, 32, %s7, [#allocation4]
    $region33: #{v_forward.1} parent=1 // pred_fallthru
      _
    // Predicated region
    $region34: #{v_forward.1} parent=1 // pred_check
      _
    $region35: #{v_forward.1} parent=1 // pred_check_branch
      %4289 = sbr.rel (0) target = $region37
    $region36: #{v_forward.1} parent=1 // pred_region
      %4290 = dma.done [#allocation4], 32
    $region37: #{v_forward.1} parent=1 // pred_fallthru
      _
    %4291 = vsyncpa [#allocation4], 1

</llo_original>
